<compile_context>
chip_gen: v6e
topology: v6e:2x2x1
jax: 0.10.0
libtpu: 0.0.40
codegen_flags: <defaults>
</compile_context>

<pallas_src>
import functools

import jax
import jax.numpy as jnp
from jax.experimental import pallas as pl
from jax.experimental.pallas import tpu as pltpu

EPS = 1e-5  # nn.BatchNorm2d default eps


# ----------------------------------------------------------------------------
# Fused Bottleneck kernel (one grid step == one image)
# ----------------------------------------------------------------------------
def _bottleneck_kernel(x_ref, mask_ref, w1_ref, b1_ref, w2_ref, b2_ref,
                       w3_ref, b3_ref, o_ref, xpad_scr, h1_scr, out_scr,
                       *, H, W):
    Wp = W + 2                      # padded row width
    Mp = (H + 2) * Wp               # flattened padded image rows
    M2 = (H - 1) * Wp + W           # candidate conv2/conv3 output rows

    # --- in-kernel zero-padding geometry for conv2 ---------------------------
    # xpad_scr rows are the flattened (H+2, W+2) padded image; only interior
    # positions are written here.  Non-interior rows may hold stale data, but
    # conv1's output is zeroed there (mask below) and garbage candidate rows of
    # the conv3 stage are never copied to the output.
    for h in range(H):
        xpad_scr[pl.ds((h + 1) * Wp + 1, W), :] = x_ref[0, h, :, :]

    # --- conv1 (1x1) + folded BN1 + ReLU -------------------------------------
    h1 = jnp.dot(xpad_scr[...], w1_ref[...], preferred_element_type=jnp.float32)
    h1 = jnp.maximum(h1 + b1_ref[...], 0.0)
    # Zero the halo positions -> this IS conv2's zero padding.
    h1_scr[...] = jnp.where(mask_ref[...] > 0.0, h1, 0.0)

    # --- conv2 (3x3, stride=1, pad=1) + folded BN2 + ReLU --------------------
    # Candidate output row m corresponds to padded position m + Wp + 1; the
    # (kh, kw) tap is the h1 slice starting at offset kh*Wp + kw.
    acc = None
    for kh in range(3):
        for kw in range(3):
            tap = h1_scr[pl.ds(kh * Wp + kw, M2), :]
            part = jnp.dot(tap, w2_ref[kh * 3 + kw],
                           preferred_element_type=jnp.float32)
            acc = part if acc is None else acc + part
    h2 = jnp.maximum(acc + b2_ref[...], 0.0)

    # --- conv3 (1x1) + folded BN3 + identity residual + ReLU -----------------
    res = xpad_scr[pl.ds(Wp + 1, M2), :].astype(jnp.float32)
    out = jnp.dot(h2, w3_ref[...], preferred_element_type=jnp.float32)
    out = jnp.maximum(out + b3_ref[...] + res, 0.0)
    out_scr[...] = out.astype(out_scr.dtype)

    # --- strip the column halo: write the exact (H, W, C3) output block ------
    for h in range(H):
        o_ref[0, h, :, :] = out_scr[pl.ds(h * Wp, W), :]


# ----------------------------------------------------------------------------
# Parameters & BN folding
# ----------------------------------------------------------------------------
def _fold_bn(gamma, beta, mean, var):
    scale = gamma / jnp.sqrt(var + EPS)
    bias = beta - mean * scale
    return scale.reshape(1, -1), bias.reshape(1, -1)


def init_params(key, inplanes, planes, expansion=4):
    ks = jax.random.split(key, 6)

    def bn_params(k, c):
        k1, k2, k3, k4 = jax.random.split(k, 4)
        gamma = 1.0 + 0.1 * jax.random.normal(k1, (c,), jnp.float32)
        beta = 0.1 * jax.random.normal(k2, (c,), jnp.float32)
        mean = 0.1 * jax.random.normal(k3, (c,), jnp.float32)
        var = 0.5 + jnp.abs(jax.random.normal(k4, (c,), jnp.float32))
        return (gamma, beta, mean, var)

    return {
        # conv weights stored HWIO
        "w1": 0.1 * jax.random.normal(ks[0], (1, 1, inplanes, planes), jnp.float32),
        "w2": 0.1 * jax.random.normal(ks[1], (3, 3, planes, planes), jnp.float32),
        "w3": 0.1 * jax.random.normal(ks[2], (1, 1, planes, planes * expansion), jnp.float32),
        "bn1": bn_params(ks[3], planes),
        "bn2": bn_params(ks[4], planes),
        "bn3": bn_params(ks[5], planes * expansion),
    }


# ----------------------------------------------------------------------------
# Forward (wrapper: BN folding + one fused pallas_call)
# ----------------------------------------------------------------------------
def bottleneck_forward(x_nchw, params):
    x = jnp.transpose(x_nchw, (0, 2, 3, 1))  # -> NHWC (channels on the lane dim)
    N, H, W, Cin = x.shape
    dtype = x.dtype

    w1 = params["w1"].reshape(Cin, -1)
    C1 = w1.shape[1]
    w2 = params["w2"].reshape(9, C1, C1)
    w3 = params["w3"].reshape(C1, -1)
    C3 = w3.shape[1]

    # Identity residual path (stride=1, downsample=None defaults).
    assert C3 == Cin, (
        "identity residual requires inplanes == planes * expansion "
        f"(got inplanes={Cin}, planes*expansion={C3})")

    # Fold the BN scale into the conv weights; keep only the bias for the kernel.
    s1, b1 = _fold_bn(*params["bn1"])
    s2, b2 = _fold_bn(*params["bn2"])
    s3, b3 = _fold_bn(*params["bn3"])
    w1f = (w1 * s1).astype(dtype)                       # (Cin, C1) * (1, C1)
    w2f = (w2 * s2.reshape(1, 1, C1)).astype(dtype)     # scale per out-channel
    w3f = (w3 * s3).astype(dtype)                       # (C1, C3) * (1, C3)

    # Interior mask over the flattened padded grid (1 inside the image, 0 on
    # the conv2 zero-padding halo).
    Wp = W + 2
    Mp = (H + 2) * Wp
    M2 = (H - 1) * Wp + W
    idx = jnp.arange(Mp)
    row, col = idx // Wp, idx % Wp
    mask = (((row >= 1) & (row <= H) & (col >= 1) & (col <= W))
            .astype(jnp.float32).reshape(Mp, 1))

    itemsize = jnp.dtype(dtype).itemsize
    flops = 2 * N * (Mp * Cin * C1 + 9 * M2 * C1 * C1 + M2 * C1 * C3)
    bytes_accessed = (
        N * H * W * (Cin + C3) * itemsize            # input + output
        + (w1f.size + w2f.size + w3f.size) * itemsize
        + (b1.size + b2.size + b3.size + mask.size) * 4)

    kernel = functools.partial(_bottleneck_kernel, H=H, W=W)

    out = pl.pallas_call(
        kernel,
        out_shape=jax.ShapeDtypeStruct((N, H, W, C3), dtype),
        grid=(N,),
        in_specs=[
            pl.BlockSpec((1, H, W, Cin), lambda n: (n, 0, 0, 0)),   # x (per image)
            pl.BlockSpec((Mp, 1), lambda n: (0, 0)),                # interior mask
            pl.BlockSpec((Cin, C1), lambda n: (0, 0)),              # w1 (BN folded)
            pl.BlockSpec((1, C1), lambda n: (0, 0)),                # b1
            pl.BlockSpec((9, C1, C1), lambda n: (0, 0, 0)),         # w2 (BN folded)
            pl.BlockSpec((1, C1), lambda n: (0, 0)),                # b2
            pl.BlockSpec((C1, C3), lambda n: (0, 0)),               # w3 (BN folded)
            pl.BlockSpec((1, C3), lambda n: (0, 0)),                # b3
        ],
        out_specs=pl.BlockSpec((1, H, W, C3), lambda n: (n, 0, 0, 0)),
        scratch_shapes=[
            pltpu.VMEM((Mp, Cin), dtype),         # zero-pad-geometry input copy
            pltpu.VMEM((Mp, C1), jnp.float32),    # conv1 output (with zero halo)
            pltpu.VMEM((M2, C3), dtype),          # conv3 candidate rows
        ],
        compiler_params=pltpu.CompilerParams(dimension_semantics=("parallel",)),
        cost_estimate=pl.CostEstimate(flops=flops, transcendentals=0,
                                      bytes_accessed=bytes_accessed),
    )(x, mask, w1f, b1, w2f, b2, w3f, b3)

    return jnp.transpose(out, (0, 3, 1, 2))  # back to NCHW


# ----------------------------------------------------------------------------
# Pure-JAX reference (correctness check)
# ----------------------------------------------------------------------------
def bottleneck_reference(x_nchw, params):
    x = jnp.transpose(x_nchw, (0, 2, 3, 1))

    def conv(h, w, pad):
        return jax.lax.conv_general_dilated(
            h, w, (1, 1), [(pad, pad), (pad, pad)],
            dimension_numbers=("NHWC", "HWIO", "NHWC"),
            precision=jax.lax.Precision.HIGHEST)

    def bn(h, p):
        gamma, beta, mean, var = p
        return (h - mean) / jnp.sqrt(var + EPS) * gamma + beta

    h = jax.nn.relu(bn(conv(x, params["w1"], 0), params["bn1"]))
    h = jax.nn.relu(bn(conv(h, params["w2"], 1), params["bn2"]))
    h = bn(conv(h, params["w3"], 0), params["bn3"])
    out = jax.nn.relu(h + x)
    return jnp.transpose(out, (0, 3, 1, 2))


if __name__ == "__main__":
    key = jax.random.PRNGKey(0)
    kx, kp = jax.random.split(key)

    inplanes, planes = 16, 4           # expansion=4 -> out channels = 16 = inplanes
    N, H, W = 2, 16, 16
    x = jax.random.normal(kx, (N, inplanes, H, W), jnp.float32)  # NCHW like PyTorch
    params = init_params(kp, inplanes, planes)

    out = jax.block_until_ready(bottleneck_forward(x, params))
    ref = jax.block_until_ready(bottleneck_reference(x, params))

    assert out.shape == (N, planes * 4, H, W), out.shape
    if not jnp.allclose(out, ref, atol=1e-3, rtol=1e-3):
        raise AssertionError("Pallas Bottleneck output mismatch vs JAX reference")
    print("KERNEL_OK")
</pallas_src>

<mosaic_0001>
module attributes {stable_mosaic.version = 11 : i64} {
  func.func @_bottleneck_kernel(%arg0: i32, %arg1: memref<1x16x16x16xf32, #tpu.memory_space<vmem>>, %arg2: memref<324x1xf32, #tpu.memory_space<vmem>>, %arg3: memref<16x4xf32, #tpu.memory_space<vmem>>, %arg4: memref<1x4xf32, #tpu.memory_space<vmem>>, %arg5: memref<9x4x4xf32, #tpu.memory_space<vmem>>, %arg6: memref<1x4xf32, #tpu.memory_space<vmem>>, %arg7: memref<4x16xf32, #tpu.memory_space<vmem>>, %arg8: memref<1x16xf32, #tpu.memory_space<vmem>>, %arg9: memref<1x16x16x16xf32, #tpu.memory_space<vmem>>, %arg10: memref<324x16xf32, #tpu.memory_space<vmem>>, %arg11: memref<324x4xf32, #tpu.memory_space<vmem>>, %arg12: memref<286x16xf32, #tpu.memory_space<vmem>>) attributes {dimension_semantics = [#tpu.dimension_semantics<parallel>], iteration_bounds = array<i64: 2>, scalar_prefetch = 0 : i64, scratch_operands = 3 : i64, tpu.core_type = #tpu.core_type<tc>, window_params = [{transform_indices = @transform_0, window_bounds = array<i64: 1, 16, 16, 16>}, {pipeline_mode = #tpu.pipeline_mode<synchronous>, transform_indices = @transform_1, window_bounds = array<i64: 324, 1>}, {pipeline_mode = #tpu.pipeline_mode<synchronous>, transform_indices = @transform_2, window_bounds = array<i64: 16, 4>}, {pipeline_mode = #tpu.pipeline_mode<synchronous>, transform_indices = @transform_3, window_bounds = array<i64: 1, 4>}, {pipeline_mode = #tpu.pipeline_mode<synchronous>, transform_indices = @transform_4, window_bounds = array<i64: 9, 4, 4>}, {pipeline_mode = #tpu.pipeline_mode<synchronous>, transform_indices = @transform_5, window_bounds = array<i64: 1, 4>}, {pipeline_mode = #tpu.pipeline_mode<synchronous>, transform_indices = @transform_6, window_bounds = array<i64: 4, 16>}, {pipeline_mode = #tpu.pipeline_mode<synchronous>, transform_indices = @transform_7, window_bounds = array<i64: 1, 16>}, {transform_indices = @transform_8, window_bounds = array<i64: 1, 16, 16, 16>}]} {
    %c0 = arith.constant 0 : index
    %c0_0 = arith.constant 0 : index
    %c0_1 = arith.constant 0 : index
    %c0_2 = arith.constant 0 : index
    %0 = vector.load %arg1[%c0, %c0_0, %c0_1, %c0_2] : memref<1x16x16x16xf32, #tpu.memory_space<vmem>>, vector<1x1x16x16xf32>
    %1 = vector.shape_cast %0 : vector<1x1x16x16xf32> to vector<16x16xf32>
    %c19 = arith.constant 19 : index
    %c0_3 = arith.constant 0 : index
    %2 = vector.load %arg10[%c19, %c0_3] : memref<324x16xf32, #tpu.memory_space<vmem>>, vector<16x16xf32>
    tpu.vector_store %arg10[%c19, %c0_3], %1 {strides = array<i32>} : memref<324x16xf32, #tpu.memory_space<vmem>>, vector<16x16xf32>,
    %c0_4 = arith.constant 0 : index
    %c1 = arith.constant 1 : index
    %c0_5 = arith.constant 0 : index
    %c0_6 = arith.constant 0 : index
    %3 = vector.load %arg1[%c0_4, %c1, %c0_5, %c0_6] : memref<1x16x16x16xf32, #tpu.memory_space<vmem>>, vector<1x1x16x16xf32>
    %4 = vector.shape_cast %3 : vector<1x1x16x16xf32> to vector<16x16xf32>
    %c37 = arith.constant 37 : index
    %c0_7 = arith.constant 0 : index
    %5 = vector.load %arg10[%c37, %c0_7] : memref<324x16xf32, #tpu.memory_space<vmem>>, vector<16x16xf32>
    tpu.vector_store %arg10[%c37, %c0_7], %4 {strides = array<i32>} : memref<324x16xf32, #tpu.memory_space<vmem>>, vector<16x16xf32>,
    %c0_8 = arith.constant 0 : index
    %c2 = arith.constant 2 : index
    %c0_9 = arith.constant 0 : index
    %c0_10 = arith.constant 0 : index
    %6 = vector.load %arg1[%c0_8, %c2, %c0_9, %c0_10] : memref<1x16x16x16xf32, #tpu.memory_space<vmem>>, vector<1x1x16x16xf32>
    %7 = vector.shape_cast %6 : vector<1x1x16x16xf32> to vector<16x16xf32>
    %c55 = arith.constant 55 : index
    %c0_11 = arith.constant 0 : index
    %8 = vector.load %arg10[%c55, %c0_11] : memref<324x16xf32, #tpu.memory_space<vmem>>, vector<16x16xf32>
    tpu.vector_store %arg10[%c55, %c0_11], %7 {strides = array<i32>} : memref<324x16xf32, #tpu.memory_space<vmem>>, vector<16x16xf32>,
    %c0_12 = arith.constant 0 : index
    %c3 = arith.constant 3 : index
    %c0_13 = arith.constant 0 : index
    %c0_14 = arith.constant 0 : index
    %9 = vector.load %arg1[%c0_12, %c3, %c0_13, %c0_14] : memref<1x16x16x16xf32, #tpu.memory_space<vmem>>, vector<1x1x16x16xf32>
    %10 = vector.shape_cast %9 : vector<1x1x16x16xf32> to vector<16x16xf32>
    %c73 = arith.constant 73 : index
    %c0_15 = arith.constant 0 : index
    %11 = vector.load %arg10[%c73, %c0_15] : memref<324x16xf32, #tpu.memory_space<vmem>>, vector<16x16xf32>
    tpu.vector_store %arg10[%c73, %c0_15], %10 {strides = array<i32>} : memref<324x16xf32, #tpu.memory_space<vmem>>, vector<16x16xf32>,
    %c0_16 = arith.constant 0 : index
    %c4 = arith.constant 4 : index
    %c0_17 = arith.constant 0 : index
    %c0_18 = arith.constant 0 : index
    %12 = vector.load %arg1[%c0_16, %c4, %c0_17, %c0_18] : memref<1x16x16x16xf32, #tpu.memory_space<vmem>>, vector<1x1x16x16xf32>
    %13 = vector.shape_cast %12 : vector<1x1x16x16xf32> to vector<16x16xf32>
    %c91 = arith.constant 91 : index
    %c0_19 = arith.constant 0 : index
    %14 = vector.load %arg10[%c91, %c0_19] : memref<324x16xf32, #tpu.memory_space<vmem>>, vector<16x16xf32>
    tpu.vector_store %arg10[%c91, %c0_19], %13 {strides = array<i32>} : memref<324x16xf32, #tpu.memory_space<vmem>>, vector<16x16xf32>,
    %c0_20 = arith.constant 0 : index
    %c5 = arith.constant 5 : index
    %c0_21 = arith.constant 0 : index
    %c0_22 = arith.constant 0 : index
    %15 = vector.load %arg1[%c0_20, %c5, %c0_21, %c0_22] : memref<1x16x16x16xf32, #tpu.memory_space<vmem>>, vector<1x1x16x16xf32>
    %16 = vector.shape_cast %15 : vector<1x1x16x16xf32> to vector<16x16xf32>
    %c109 = arith.constant 109 : index
    %c0_23 = arith.constant 0 : index
    %17 = vector.load %arg10[%c109, %c0_23] : memref<324x16xf32, #tpu.memory_space<vmem>>, vector<16x16xf32>
    tpu.vector_store %arg10[%c109, %c0_23], %16 {strides = array<i32>} : memref<324x16xf32, #tpu.memory_space<vmem>>, vector<16x16xf32>,
    %c0_24 = arith.constant 0 : index
    %c6 = arith.constant 6 : index
    %c0_25 = arith.constant 0 : index
    %c0_26 = arith.constant 0 : index
    %18 = vector.load %arg1[%c0_24, %c6, %c0_25, %c0_26] : memref<1x16x16x16xf32, #tpu.memory_space<vmem>>, vector<1x1x16x16xf32>
    %19 = vector.shape_cast %18 : vector<1x1x16x16xf32> to vector<16x16xf32>
    %c127 = arith.constant 127 : index
    %c0_27 = arith.constant 0 : index
    %20 = vector.load %arg10[%c127, %c0_27] : memref<324x16xf32, #tpu.memory_space<vmem>>, vector<16x16xf32>
    tpu.vector_store %arg10[%c127, %c0_27], %19 {strides = array<i32>} : memref<324x16xf32, #tpu.memory_space<vmem>>, vector<16x16xf32>,
    %c0_28 = arith.constant 0 : index
    %c7 = arith.constant 7 : index
    %c0_29 = arith.constant 0 : index
    %c0_30 = arith.constant 0 : index
    %21 = vector.load %arg1[%c0_28, %c7, %c0_29, %c0_30] : memref<1x16x16x16xf32, #tpu.memory_space<vmem>>, vector<1x1x16x16xf32>
    %22 = vector.shape_cast %21 : vector<1x1x16x16xf32> to vector<16x16xf32>
    %c145 = arith.constant 145 : index
    %c0_31 = arith.constant 0 : index
    %23 = vector.load %arg10[%c145, %c0_31] : memref<324x16xf32, #tpu.memory_space<vmem>>, vector<16x16xf32>
    tpu.vector_store %arg10[%c145, %c0_31], %22 {strides = array<i32>} : memref<324x16xf32, #tpu.memory_space<vmem>>, vector<16x16xf32>,
    %c0_32 = arith.constant 0 : index
    %c8 = arith.constant 8 : index
    %c0_33 = arith.constant 0 : index
    %c0_34 = arith.constant 0 : index
    %24 = vector.load %arg1[%c0_32, %c8, %c0_33, %c0_34] : memref<1x16x16x16xf32, #tpu.memory_space<vmem>>, vector<1x1x16x16xf32>
    %25 = vector.shape_cast %24 : vector<1x1x16x16xf32> to vector<16x16xf32>
    %c163 = arith.constant 163 : index
    %c0_35 = arith.constant 0 : index
    %26 = vector.load %arg10[%c163, %c0_35] : memref<324x16xf32, #tpu.memory_space<vmem>>, vector<16x16xf32>
    tpu.vector_store %arg10[%c163, %c0_35], %25 {strides = array<i32>} : memref<324x16xf32, #tpu.memory_space<vmem>>, vector<16x16xf32>,
    %c0_36 = arith.constant 0 : index
    %c9 = arith.constant 9 : index
    %c0_37 = arith.constant 0 : index
    %c0_38 = arith.constant 0 : index
    %27 = vector.load %arg1[%c0_36, %c9, %c0_37, %c0_38] : memref<1x16x16x16xf32, #tpu.memory_space<vmem>>, vector<1x1x16x16xf32>
    %28 = vector.shape_cast %27 : vector<1x1x16x16xf32> to vector<16x16xf32>
    %c181 = arith.constant 181 : index
    %c0_39 = arith.constant 0 : index
    %29 = vector.load %arg10[%c181, %c0_39] : memref<324x16xf32, #tpu.memory_space<vmem>>, vector<16x16xf32>
    tpu.vector_store %arg10[%c181, %c0_39], %28 {strides = array<i32>} : memref<324x16xf32, #tpu.memory_space<vmem>>, vector<16x16xf32>,
    %c0_40 = arith.constant 0 : index
    %c10 = arith.constant 10 : index
    %c0_41 = arith.constant 0 : index
    %c0_42 = arith.constant 0 : index
    %30 = vector.load %arg1[%c0_40, %c10, %c0_41, %c0_42] : memref<1x16x16x16xf32, #tpu.memory_space<vmem>>, vector<1x1x16x16xf32>
    %31 = vector.shape_cast %30 : vector<1x1x16x16xf32> to vector<16x16xf32>
    %c199 = arith.constant 199 : index
    %c0_43 = arith.constant 0 : index
    %32 = vector.load %arg10[%c199, %c0_43] : memref<324x16xf32, #tpu.memory_space<vmem>>, vector<16x16xf32>
    tpu.vector_store %arg10[%c199, %c0_43], %31 {strides = array<i32>} : memref<324x16xf32, #tpu.memory_space<vmem>>, vector<16x16xf32>,
    %c0_44 = arith.constant 0 : index
    %c11 = arith.constant 11 : index
    %c0_45 = arith.constant 0 : index
    %c0_46 = arith.constant 0 : index
    %33 = vector.load %arg1[%c0_44, %c11, %c0_45, %c0_46] : memref<1x16x16x16xf32, #tpu.memory_space<vmem>>, vector<1x1x16x16xf32>
    %34 = vector.shape_cast %33 : vector<1x1x16x16xf32> to vector<16x16xf32>
    %c217 = arith.constant 217 : index
    %c0_47 = arith.constant 0 : index
    %35 = vector.load %arg10[%c217, %c0_47] : memref<324x16xf32, #tpu.memory_space<vmem>>, vector<16x16xf32>
    tpu.vector_store %arg10[%c217, %c0_47], %34 {strides = array<i32>} : memref<324x16xf32, #tpu.memory_space<vmem>>, vector<16x16xf32>,
    %c0_48 = arith.constant 0 : index
    %c12 = arith.constant 12 : index
    %c0_49 = arith.constant 0 : index
    %c0_50 = arith.constant 0 : index
    %36 = vector.load %arg1[%c0_48, %c12, %c0_49, %c0_50] : memref<1x16x16x16xf32, #tpu.memory_space<vmem>>, vector<1x1x16x16xf32>
    %37 = vector.shape_cast %36 : vector<1x1x16x16xf32> to vector<16x16xf32>
    %c235 = arith.constant 235 : index
    %c0_51 = arith.constant 0 : index
    %38 = vector.load %arg10[%c235, %c0_51] : memref<324x16xf32, #tpu.memory_space<vmem>>, vector<16x16xf32>
    tpu.vector_store %arg10[%c235, %c0_51], %37 {strides = array<i32>} : memref<324x16xf32, #tpu.memory_space<vmem>>, vector<16x16xf32>,
    %c0_52 = arith.constant 0 : index
    %c13 = arith.constant 13 : index
    %c0_53 = arith.constant 0 : index
    %c0_54 = arith.constant 0 : index
    %39 = vector.load %arg1[%c0_52, %c13, %c0_53, %c0_54] : memref<1x16x16x16xf32, #tpu.memory_space<vmem>>, vector<1x1x16x16xf32>
    %40 = vector.shape_cast %39 : vector<1x1x16x16xf32> to vector<16x16xf32>
    %c253 = arith.constant 253 : index
    %c0_55 = arith.constant 0 : index
    %41 = vector.load %arg10[%c253, %c0_55] : memref<324x16xf32, #tpu.memory_space<vmem>>, vector<16x16xf32>
    tpu.vector_store %arg10[%c253, %c0_55], %40 {strides = array<i32>} : memref<324x16xf32, #tpu.memory_space<vmem>>, vector<16x16xf32>,
    %c0_56 = arith.constant 0 : index
    %c14 = arith.constant 14 : index
    %c0_57 = arith.constant 0 : index
    %c0_58 = arith.constant 0 : index
    %42 = vector.load %arg1[%c0_56, %c14, %c0_57, %c0_58] : memref<1x16x16x16xf32, #tpu.memory_space<vmem>>, vector<1x1x16x16xf32>
    %43 = vector.shape_cast %42 : vector<1x1x16x16xf32> to vector<16x16xf32>
    %c271 = arith.constant 271 : index
    %c0_59 = arith.constant 0 : index
    %44 = vector.load %arg10[%c271, %c0_59] : memref<324x16xf32, #tpu.memory_space<vmem>>, vector<16x16xf32>
    tpu.vector_store %arg10[%c271, %c0_59], %43 {strides = array<i32>} : memref<324x16xf32, #tpu.memory_space<vmem>>, vector<16x16xf32>,
    %c0_60 = arith.constant 0 : index
    %c15 = arith.constant 15 : index
    %c0_61 = arith.constant 0 : index
    %c0_62 = arith.constant 0 : index
    %45 = vector.load %arg1[%c0_60, %c15, %c0_61, %c0_62] : memref<1x16x16x16xf32, #tpu.memory_space<vmem>>, vector<1x1x16x16xf32>
    %46 = vector.shape_cast %45 : vector<1x1x16x16xf32> to vector<16x16xf32>
    %c289 = arith.constant 289 : index
    %c0_63 = arith.constant 0 : index
    %47 = vector.load %arg10[%c289, %c0_63] : memref<324x16xf32, #tpu.memory_space<vmem>>, vector<16x16xf32>
    tpu.vector_store %arg10[%c289, %c0_63], %46 {strides = array<i32>} : memref<324x16xf32, #tpu.memory_space<vmem>>, vector<16x16xf32>,
    %c0_64 = arith.constant 0 : index
    %c0_65 = arith.constant 0 : index
    %48 = vector.load %arg10[%c0_64, %c0_65] : memref<324x16xf32, #tpu.memory_space<vmem>>, vector<324x16xf32>
    %c0_66 = arith.constant 0 : index
    %c0_67 = arith.constant 0 : index
    %49 = vector.load %arg3[%c0_66, %c0_67] : memref<16x4xf32, #tpu.memory_space<vmem>>, vector<16x4xf32>
    %cst = arith.constant dense<0.000000e+00> : vector<324x4xf32>
    %50 = tpu.matmul %48, %49, %cst {dimension_numbers = #tpu.dot_dimension_numbers<[1], [0], [0], [1], [0, 0, 1, 1], [], []>} : vector<324x16xf32>, vector<16x4xf32>, vector<324x4xf32> -> vector<324x4xf32>
    %c0_68 = arith.constant 0 : index
    %c0_69 = arith.constant 0 : index
    %51 = vector.load %arg4[%c0_68, %c0_69] : memref<1x4xf32, #tpu.memory_space<vmem>>, vector<1x4xf32>
    %52 = vector.broadcast %51 : vector<1x4xf32> to vector<324x4xf32>
    %53 = arith.addf %50, %52 : vector<324x4xf32>
    %cst_70 = arith.constant 0.000000e+00 : f32
    %54 = vector.broadcast %cst_70 : f32 to vector<324x4xf32>
    %55 = arith.maximumf %53, %54 : vector<324x4xf32>
    %c0_71 = arith.constant 0 : index
    %c0_72 = arith.constant 0 : index
    %56 = vector.load %arg2[%c0_71, %c0_72] : memref<324x1xf32, #tpu.memory_space<vmem>>, vector<324x1xf32>
    %cst_73 = arith.constant 0.000000e+00 : f32
    %57 = vector.broadcast %cst_73 : f32 to vector<324x1xf32>
    %58 = arith.cmpf ogt, %56, %57 : vector<324x1xf32>
    %cst_74 = arith.constant 0.000000e+00 : f32
    %59 = vector.shape_cast %58 : vector<324x1xi1> to vector<324x1xi1>
    %60 = vector.broadcast %59 : vector<324x1xi1> to vector<324x4xi1>
    %61 = vector.broadcast %cst_74 : f32 to vector<324x4xf32>
    %62 = arith.select %60, %55, %61 : vector<324x4xi1>, vector<324x4xf32>
    %c0_75 = arith.constant 0 : index
    %c0_76 = arith.constant 0 : index
    %63 = vector.load %arg11[%c0_75, %c0_76] : memref<324x4xf32, #tpu.memory_space<vmem>>, vector<324x4xf32>
    tpu.vector_store %arg11[%c0_75, %c0_76], %62 {strides = array<i32>} : memref<324x4xf32, #tpu.memory_space<vmem>>, vector<324x4xf32>,
    %c0_77 = arith.constant 0 : index
    %c0_78 = arith.constant 0 : index
    %64 = vector.load %arg11[%c0_77, %c0_78] : memref<324x4xf32, #tpu.memory_space<vmem>>, vector<286x4xf32>
    %c0_79 = arith.constant 0 : index
    %c0_80 = arith.constant 0 : index
    %c0_81 = arith.constant 0 : index
    %65 = vector.load %arg5[%c0_79, %c0_80, %c0_81] : memref<9x4x4xf32, #tpu.memory_space<vmem>>, vector<1x4x4xf32>
    %66 = vector.shape_cast %65 : vector<1x4x4xf32> to vector<4x4xf32>
    %cst_82 = arith.constant dense<0.000000e+00> : vector<286x4xf32>
    %67 = tpu.matmul %64, %66, %cst_82 {dimension_numbers = #tpu.dot_dimension_numbers<[1], [0], [0], [1], [0, 0, 1, 1], [], []>} : vector<286x4xf32>, vector<4x4xf32>, vector<286x4xf32> -> vector<286x4xf32>
    %c1_83 = arith.constant 1 : index
    %c0_84 = arith.constant 0 : index
    %68 = vector.load %arg11[%c1_83, %c0_84] : memref<324x4xf32, #tpu.memory_space<vmem>>, vector<286x4xf32>
    %c1_85 = arith.constant 1 : index
    %c0_86 = arith.constant 0 : index
    %c0_87 = arith.constant 0 : index
    %69 = vector.load %arg5[%c1_85, %c0_86, %c0_87] : memref<9x4x4xf32, #tpu.memory_space<vmem>>, vector<1x4x4xf32>
    %70 = vector.shape_cast %69 : vector<1x4x4xf32> to vector<4x4xf32>
    %cst_88 = arith.constant dense<0.000000e+00> : vector<286x4xf32>
    %71 = tpu.matmul %68, %70, %cst_88 {dimension_numbers = #tpu.dot_dimension_numbers<[1], [0], [0], [1], [0, 0, 1, 1], [], []>} : vector<286x4xf32>, vector<4x4xf32>, vector<286x4xf32> -> vector<286x4xf32>
    %72 = arith.addf %67, %71 : vector<286x4xf32>
    %c2_89 = arith.constant 2 : index
    %c0_90 = arith.constant 0 : index
    %73 = vector.load %arg11[%c2_89, %c0_90] : memref<324x4xf32, #tpu.memory_space<vmem>>, vector<286x4xf32>
    %c2_91 = arith.constant 2 : index
    %c0_92 = arith.constant 0 : index
    %c0_93 = arith.constant 0 : index
    %74 = vector.load %arg5[%c2_91, %c0_92, %c0_93] : memref<9x4x4xf32, #tpu.memory_space<vmem>>, vector<1x4x4xf32>
    %75 = vector.shape_cast %74 : vector<1x4x4xf32> to vector<4x4xf32>
    %cst_94 = arith.constant dense<0.000000e+00> : vector<286x4xf32>
    %76 = tpu.matmul %73, %75, %cst_94 {dimension_numbers = #tpu.dot_dimension_numbers<[1], [0], [0], [1], [0, 0, 1, 1], [], []>} : vector<286x4xf32>, vector<4x4xf32>, vector<286x4xf32> -> vector<286x4xf32>
    %77 = arith.addf %72, %76 : vector<286x4xf32>
    %c18 = arith.constant 18 : index
    %c0_95 = arith.constant 0 : index
    %78 = vector.load %arg11[%c18, %c0_95] : memref<324x4xf32, #tpu.memory_space<vmem>>, vector<286x4xf32>
    %c3_96 = arith.constant 3 : index
    %c0_97 = arith.constant 0 : index
    %c0_98 = arith.constant 0 : index
    %79 = vector.load %arg5[%c3_96, %c0_97, %c0_98] : memref<9x4x4xf32, #tpu.memory_space<vmem>>, vector<1x4x4xf32>
    %80 = vector.shape_cast %79 : vector<1x4x4xf32> to vector<4x4xf32>
    %cst_99 = arith.constant dense<0.000000e+00> : vector<286x4xf32>
    %81 = tpu.matmul %78, %80, %cst_99 {dimension_numbers = #tpu.dot_dimension_numbers<[1], [0], [0], [1], [0, 0, 1, 1], [], []>} : vector<286x4xf32>, vector<4x4xf32>, vector<286x4xf32> -> vector<286x4xf32>
    %82 = arith.addf %77, %81 : vector<286x4xf32>
    %c19_100 = arith.constant 19 : index
    %c0_101 = arith.constant 0 : index
    %83 = vector.load %arg11[%c19_100, %c0_101] : memref<324x4xf32, #tpu.memory_space<vmem>>, vector<286x4xf32>
    %c4_102 = arith.constant 4 : index
    %c0_103 = arith.constant 0 : index
    %c0_104 = arith.constant 0 : index
    %84 = vector.load %arg5[%c4_102, %c0_103, %c0_104] : memref<9x4x4xf32, #tpu.memory_space<vmem>>, vector<1x4x4xf32>
    %85 = vector.shape_cast %84 : vector<1x4x4xf32> to vector<4x4xf32>
    %cst_105 = arith.constant dense<0.000000e+00> : vector<286x4xf32>
    %86 = tpu.matmul %83, %85, %cst_105 {dimension_numbers = #tpu.dot_dimension_numbers<[1], [0], [0], [1], [0, 0, 1, 1], [], []>} : vector<286x4xf32>, vector<4x4xf32>, vector<286x4xf32> -> vector<286x4xf32>
    %87 = arith.addf %82, %86 : vector<286x4xf32>
    %c20 = arith.constant 20 : index
    %c0_106 = arith.constant 0 : index
    %88 = vector.load %arg11[%c20, %c0_106] : memref<324x4xf32, #tpu.memory_space<vmem>>, vector<286x4xf32>
    %c5_107 = arith.constant 5 : index
    %c0_108 = arith.constant 0 : index
    %c0_109 = arith.constant 0 : index
    %89 = vector.load %arg5[%c5_107, %c0_108, %c0_109] : memref<9x4x4xf32, #tpu.memory_space<vmem>>, vector<1x4x4xf32>
    %90 = vector.shape_cast %89 : vector<1x4x4xf32> to vector<4x4xf32>
    %cst_110 = arith.constant dense<0.000000e+00> : vector<286x4xf32>
    %91 = tpu.matmul %88, %90, %cst_110 {dimension_numbers = #tpu.dot_dimension_numbers<[1], [0], [0], [1], [0, 0, 1, 1], [], []>} : vector<286x4xf32>, vector<4x4xf32>, vector<286x4xf32> -> vector<286x4xf32>
    %92 = arith.addf %87, %91 : vector<286x4xf32>
    %c36 = arith.constant 36 : index
    %c0_111 = arith.constant 0 : index
    %93 = vector.load %arg11[%c36, %c0_111] : memref<324x4xf32, #tpu.memory_space<vmem>>, vector<286x4xf32>
    %c6_112 = arith.constant 6 : index
    %c0_113 = arith.constant 0 : index
    %c0_114 = arith.constant 0 : index
    %94 = vector.load %arg5[%c6_112, %c0_113, %c0_114] : memref<9x4x4xf32, #tpu.memory_space<vmem>>, vector<1x4x4xf32>
    %95 = vector.shape_cast %94 : vector<1x4x4xf32> to vector<4x4xf32>
    %cst_115 = arith.constant dense<0.000000e+00> : vector<286x4xf32>
    %96 = tpu.matmul %93, %95, %cst_115 {dimension_numbers = #tpu.dot_dimension_numbers<[1], [0], [0], [1], [0, 0, 1, 1], [], []>} : vector<286x4xf32>, vector<4x4xf32>, vector<286x4xf32> -> vector<286x4xf32>
    %97 = arith.addf %92, %96 : vector<286x4xf32>
    %c37_116 = arith.constant 37 : index
    %c0_117 = arith.constant 0 : index
    %98 = vector.load %arg11[%c37_116, %c0_117] : memref<324x4xf32, #tpu.memory_space<vmem>>, vector<286x4xf32>
    %c7_118 = arith.constant 7 : index
    %c0_119 = arith.constant 0 : index
    %c0_120 = arith.constant 0 : index
    %99 = vector.load %arg5[%c7_118, %c0_119, %c0_120] : memref<9x4x4xf32, #tpu.memory_space<vmem>>, vector<1x4x4xf32>
    %100 = vector.shape_cast %99 : vector<1x4x4xf32> to vector<4x4xf32>
    %cst_121 = arith.constant dense<0.000000e+00> : vector<286x4xf32>
    %101 = tpu.matmul %98, %100, %cst_121 {dimension_numbers = #tpu.dot_dimension_numbers<[1], [0], [0], [1], [0, 0, 1, 1], [], []>} : vector<286x4xf32>, vector<4x4xf32>, vector<286x4xf32> -> vector<286x4xf32>
    %102 = arith.addf %97, %101 : vector<286x4xf32>
    %c38 = arith.constant 38 : index
    %c0_122 = arith.constant 0 : index
    %103 = vector.load %arg11[%c38, %c0_122] : memref<324x4xf32, #tpu.memory_space<vmem>>, vector<286x4xf32>
    %c8_123 = arith.constant 8 : index
    %c0_124 = arith.constant 0 : index
    %c0_125 = arith.constant 0 : index
    %104 = vector.load %arg5[%c8_123, %c0_124, %c0_125] : memref<9x4x4xf32, #tpu.memory_space<vmem>>, vector<1x4x4xf32>
    %105 = vector.shape_cast %104 : vector<1x4x4xf32> to vector<4x4xf32>
    %cst_126 = arith.constant dense<0.000000e+00> : vector<286x4xf32>
    %106 = tpu.matmul %103, %105, %cst_126 {dimension_numbers = #tpu.dot_dimension_numbers<[1], [0], [0], [1], [0, 0, 1, 1], [], []>} : vector<286x4xf32>, vector<4x4xf32>, vector<286x4xf32> -> vector<286x4xf32>
    %107 = arith.addf %102, %106 : vector<286x4xf32>
    %c0_127 = arith.constant 0 : index
    %c0_128 = arith.constant 0 : index
    %108 = vector.load %arg6[%c0_127, %c0_128] : memref<1x4xf32, #tpu.memory_space<vmem>>, vector<1x4xf32>
    %109 = vector.broadcast %108 : vector<1x4xf32> to vector<286x4xf32>
    %110 = arith.addf %107, %109 : vector<286x4xf32>
    %cst_129 = arith.constant 0.000000e+00 : f32
    %111 = vector.broadcast %cst_129 : f32 to vector<286x4xf32>
    %112 = arith.maximumf %110, %111 : vector<286x4xf32>
    %c19_130 = arith.constant 19 : index
    %c0_131 = arith.constant 0 : index
    %113 = vector.load %arg10[%c19_130, %c0_131] : memref<324x16xf32, #tpu.memory_space<vmem>>, vector<286x16xf32>
    %c0_132 = arith.constant 0 : index
    %c0_133 = arith.constant 0 : index
    %114 = vector.load %arg7[%c0_132, %c0_133] : memref<4x16xf32, #tpu.memory_space<vmem>>, vector<4x16xf32>
    %cst_134 = arith.constant dense<0.000000e+00> : vector<286x16xf32>
    %115 = tpu.matmul %112, %114, %cst_134 {dimension_numbers = #tpu.dot_dimension_numbers<[1], [0], [0], [1], [0, 0, 1, 1], [], []>} : vector<286x4xf32>, vector<4x16xf32>, vector<286x16xf32> -> vector<286x16xf32>
    %c0_135 = arith.constant 0 : index
    %c0_136 = arith.constant 0 : index
    %116 = vector.load %arg8[%c0_135, %c0_136] : memref<1x16xf32, #tpu.memory_space<vmem>>, vector<1x16xf32>
    %117 = vector.broadcast %116 : vector<1x16xf32> to vector<286x16xf32>
    %118 = arith.addf %115, %117 : vector<286x16xf32>
    %119 = arith.addf %118, %113 : vector<286x16xf32>
    %cst_137 = arith.constant 0.000000e+00 : f32
    %120 = vector.broadcast %cst_137 : f32 to vector<286x16xf32>
    %121 = arith.maximumf %119, %120 : vector<286x16xf32>
    %c0_138 = arith.constant 0 : index
    %c0_139 = arith.constant 0 : index
    %122 = vector.load %arg12[%c0_138, %c0_139] : memref<286x16xf32, #tpu.memory_space<vmem>>, vector<286x16xf32>
    tpu.vector_store %arg12[%c0_138, %c0_139], %121 {strides = array<i32>} : memref<286x16xf32, #tpu.memory_space<vmem>>, vector<286x16xf32>,
    %c0_140 = arith.constant 0 : index
    %c0_141 = arith.constant 0 : index
    %123 = vector.load %arg12[%c0_140, %c0_141] : memref<286x16xf32, #tpu.memory_space<vmem>>, vector<16x16xf32>
    %c0_142 = arith.constant 0 : index
    %c0_143 = arith.constant 0 : index
    %c0_144 = arith.constant 0 : index
    %c0_145 = arith.constant 0 : index
    %124 = vector.load %arg9[%c0_142, %c0_143, %c0_144, %c0_145] : memref<1x16x16x16xf32, #tpu.memory_space<vmem>>, vector<1x1x16x16xf32>
    %125 = vector.shape_cast %124 : vector<1x1x16x16xf32> to vector<16x16xf32>
    %126 = vector.shape_cast %123 : vector<16x16xf32> to vector<1x1x16x16xf32>
    tpu.vector_store %arg9[%c0_142, %c0_143, %c0_144, %c0_145], %126 {strides = array<i32>} : memref<1x16x16x16xf32, #tpu.memory_space<vmem>>, vector<1x1x16x16xf32>,
    %c18_146 = arith.constant 18 : index
    %c0_147 = arith.constant 0 : index
    %127 = vector.load %arg12[%c18_146, %c0_147] : memref<286x16xf32, #tpu.memory_space<vmem>>, vector<16x16xf32>
    %c0_148 = arith.constant 0 : index
    %c1_149 = arith.constant 1 : index
    %c0_150 = arith.constant 0 : index
    %c0_151 = arith.constant 0 : index
    %128 = vector.load %arg9[%c0_148, %c1_149, %c0_150, %c0_151] : memref<1x16x16x16xf32, #tpu.memory_space<vmem>>, vector<1x1x16x16xf32>
    %129 = vector.shape_cast %128 : vector<1x1x16x16xf32> to vector<16x16xf32>
    %130 = vector.shape_cast %127 : vector<16x16xf32> to vector<1x1x16x16xf32>
    tpu.vector_store %arg9[%c0_148, %c1_149, %c0_150, %c0_151], %130 {strides = array<i32>} : memref<1x16x16x16xf32, #tpu.memory_space<vmem>>, vector<1x1x16x16xf32>,
    %c36_152 = arith.constant 36 : index
    %c0_153 = arith.constant 0 : index
    %131 = vector.load %arg12[%c36_152, %c0_153] : memref<286x16xf32, #tpu.memory_space<vmem>>, vector<16x16xf32>
    %c0_154 = arith.constant 0 : index
    %c2_155 = arith.constant 2 : index
    %c0_156 = arith.constant 0 : index
    %c0_157 = arith.constant 0 : index
    %132 = vector.load %arg9[%c0_154, %c2_155, %c0_156, %c0_157] : memref<1x16x16x16xf32, #tpu.memory_space<vmem>>, vector<1x1x16x16xf32>
    %133 = vector.shape_cast %132 : vector<1x1x16x16xf32> to vector<16x16xf32>
    %134 = vector.shape_cast %131 : vector<16x16xf32> to vector<1x1x16x16xf32>
    tpu.vector_store %arg9[%c0_154, %c2_155, %c0_156, %c0_157], %134 {strides = array<i32>} : memref<1x16x16x16xf32, #tpu.memory_space<vmem>>, vector<1x1x16x16xf32>,
    %c54 = arith.constant 54 : index
    %c0_158 = arith.constant 0 : index
    %135 = vector.load %arg12[%c54, %c0_158] : memref<286x16xf32, #tpu.memory_space<vmem>>, vector<16x16xf32>
    %c0_159 = arith.constant 0 : index
    %c3_160 = arith.constant 3 : index
    %c0_161 = arith.constant 0 : index
    %c0_162 = arith.constant 0 : index
    %136 = vector.load %arg9[%c0_159, %c3_160, %c0_161, %c0_162] : memref<1x16x16x16xf32, #tpu.memory_space<vmem>>, vector<1x1x16x16xf32>
    %137 = vector.shape_cast %136 : vector<1x1x16x16xf32> to vector<16x16xf32>
    %138 = vector.shape_cast %135 : vector<16x16xf32> to vector<1x1x16x16xf32>
    tpu.vector_store %arg9[%c0_159, %c3_160, %c0_161, %c0_162], %138 {strides = array<i32>} : memref<1x16x16x16xf32, #tpu.memory_space<vmem>>, vector<1x1x16x16xf32>,
    %c72 = arith.constant 72 : index
    %c0_163 = arith.constant 0 : index
    %139 = vector.load %arg12[%c72, %c0_163] : memref<286x16xf32, #tpu.memory_space<vmem>>, vector<16x16xf32>
    %c0_164 = arith.constant 0 : index
    %c4_165 = arith.constant 4 : index
    %c0_166 = arith.constant 0 : index
    %c0_167 = arith.constant 0 : index
    %140 = vector.load %arg9[%c0_164, %c4_165, %c0_166, %c0_167] : memref<1x16x16x16xf32, #tpu.memory_space<vmem>>, vector<1x1x16x16xf32>
    %141 = vector.shape_cast %140 : vector<1x1x16x16xf32> to vector<16x16xf32>
    %142 = vector.shape_cast %139 : vector<16x16xf32> to vector<1x1x16x16xf32>
    tpu.vector_store %arg9[%c0_164, %c4_165, %c0_166, %c0_167], %142 {strides = array<i32>} : memref<1x16x16x16xf32, #tpu.memory_space<vmem>>, vector<1x1x16x16xf32>,
    %c90 = arith.constant 90 : index
    %c0_168 = arith.constant 0 : index
    %143 = vector.load %arg12[%c90, %c0_168] : memref<286x16xf32, #tpu.memory_space<vmem>>, vector<16x16xf32>
    %c0_169 = arith.constant 0 : index
    %c5_170 = arith.constant 5 : index
    %c0_171 = arith.constant 0 : index
    %c0_172 = arith.constant 0 : index
    %144 = vector.load %arg9[%c0_169, %c5_170, %c0_171, %c0_172] : memref<1x16x16x16xf32, #tpu.memory_space<vmem>>, vector<1x1x16x16xf32>
    %145 = vector.shape_cast %144 : vector<1x1x16x16xf32> to vector<16x16xf32>
    %146 = vector.shape_cast %143 : vector<16x16xf32> to vector<1x1x16x16xf32>
    tpu.vector_store %arg9[%c0_169, %c5_170, %c0_171, %c0_172], %146 {strides = array<i32>} : memref<1x16x16x16xf32, #tpu.memory_space<vmem>>, vector<1x1x16x16xf32>,
    %c108 = arith.constant 108 : index
    %c0_173 = arith.constant 0 : index
    %147 = vector.load %arg12[%c108, %c0_173] : memref<286x16xf32, #tpu.memory_space<vmem>>, vector<16x16xf32>
    %c0_174 = arith.constant 0 : index
    %c6_175 = arith.constant 6 : index
    %c0_176 = arith.constant 0 : index
    %c0_177 = arith.constant 0 : index
    %148 = vector.load %arg9[%c0_174, %c6_175, %c0_176, %c0_177] : memref<1x16x16x16xf32, #tpu.memory_space<vmem>>, vector<1x1x16x16xf32>
    %149 = vector.shape_cast %148 : vector<1x1x16x16xf32> to vector<16x16xf32>
    %150 = vector.shape_cast %147 : vector<16x16xf32> to vector<1x1x16x16xf32>
    tpu.vector_store %arg9[%c0_174, %c6_175, %c0_176, %c0_177], %150 {strides = array<i32>} : memref<1x16x16x16xf32, #tpu.memory_space<vmem>>, vector<1x1x16x16xf32>,
    %c126 = arith.constant 126 : index
    %c0_178 = arith.constant 0 : index
    %151 = vector.load %arg12[%c126, %c0_178] : memref<286x16xf32, #tpu.memory_space<vmem>>, vector<16x16xf32>
    %c0_179 = arith.constant 0 : index
    %c7_180 = arith.constant 7 : index
    %c0_181 = arith.constant 0 : index
    %c0_182 = arith.constant 0 : index
    %152 = vector.load %arg9[%c0_179, %c7_180, %c0_181, %c0_182] : memref<1x16x16x16xf32, #tpu.memory_space<vmem>>, vector<1x1x16x16xf32>
    %153 = vector.shape_cast %152 : vector<1x1x16x16xf32> to vector<16x16xf32>
    %154 = vector.shape_cast %151 : vector<16x16xf32> to vector<1x1x16x16xf32>
    tpu.vector_store %arg9[%c0_179, %c7_180, %c0_181, %c0_182], %154 {strides = array<i32>} : memref<1x16x16x16xf32, #tpu.memory_space<vmem>>, vector<1x1x16x16xf32>,
    %c144 = arith.constant 144 : index
    %c0_183 = arith.constant 0 : index
    %155 = vector.load %arg12[%c144, %c0_183] : memref<286x16xf32, #tpu.memory_space<vmem>>, vector<16x16xf32>
    %c0_184 = arith.constant 0 : index
    %c8_185 = arith.constant 8 : index
    %c0_186 = arith.constant 0 : index
    %c0_187 = arith.constant 0 : index
    %156 = vector.load %arg9[%c0_184, %c8_185, %c0_186, %c0_187] : memref<1x16x16x16xf32, #tpu.memory_space<vmem>>, vector<1x1x16x16xf32>
    %157 = vector.shape_cast %156 : vector<1x1x16x16xf32> to vector<16x16xf32>
    %158 = vector.shape_cast %155 : vector<16x16xf32> to vector<1x1x16x16xf32>
    tpu.vector_store %arg9[%c0_184, %c8_185, %c0_186, %c0_187], %158 {strides = array<i32>} : memref<1x16x16x16xf32, #tpu.memory_space<vmem>>, vector<1x1x16x16xf32>,
    %c162 = arith.constant 162 : index
    %c0_188 = arith.constant 0 : index
    %159 = vector.load %arg12[%c162, %c0_188] : memref<286x16xf32, #tpu.memory_space<vmem>>, vector<16x16xf32>
    %c0_189 = arith.constant 0 : index
    %c9_190 = arith.constant 9 : index
    %c0_191 = arith.constant 0 : index
    %c0_192 = arith.constant 0 : index
    %160 = vector.load %arg9[%c0_189, %c9_190, %c0_191, %c0_192] : memref<1x16x16x16xf32, #tpu.memory_space<vmem>>, vector<1x1x16x16xf32>
    %161 = vector.shape_cast %160 : vector<1x1x16x16xf32> to vector<16x16xf32>
    %162 = vector.shape_cast %159 : vector<16x16xf32> to vector<1x1x16x16xf32>
    tpu.vector_store %arg9[%c0_189, %c9_190, %c0_191, %c0_192], %162 {strides = array<i32>} : memref<1x16x16x16xf32, #tpu.memory_space<vmem>>, vector<1x1x16x16xf32>,
    %c180 = arith.constant 180 : index
    %c0_193 = arith.constant 0 : index
    %163 = vector.load %arg12[%c180, %c0_193] : memref<286x16xf32, #tpu.memory_space<vmem>>, vector<16x16xf32>
    %c0_194 = arith.constant 0 : index
    %c10_195 = arith.constant 10 : index
    %c0_196 = arith.constant 0 : index
    %c0_197 = arith.constant 0 : index
    %164 = vector.load %arg9[%c0_194, %c10_195, %c0_196, %c0_197] : memref<1x16x16x16xf32, #tpu.memory_space<vmem>>, vector<1x1x16x16xf32>
    %165 = vector.shape_cast %164 : vector<1x1x16x16xf32> to vector<16x16xf32>
    %166 = vector.shape_cast %163 : vector<16x16xf32> to vector<1x1x16x16xf32>
    tpu.vector_store %arg9[%c0_194, %c10_195, %c0_196, %c0_197], %166 {strides = array<i32>} : memref<1x16x16x16xf32, #tpu.memory_space<vmem>>, vector<1x1x16x16xf32>,
    %c198 = arith.constant 198 : index
    %c0_198 = arith.constant 0 : index
    %167 = vector.load %arg12[%c198, %c0_198] : memref<286x16xf32, #tpu.memory_space<vmem>>, vector<16x16xf32>
    %c0_199 = arith.constant 0 : index
    %c11_200 = arith.constant 11 : index
    %c0_201 = arith.constant 0 : index
    %c0_202 = arith.constant 0 : index
    %168 = vector.load %arg9[%c0_199, %c11_200, %c0_201, %c0_202] : memref<1x16x16x16xf32, #tpu.memory_space<vmem>>, vector<1x1x16x16xf32>
    %169 = vector.shape_cast %168 : vector<1x1x16x16xf32> to vector<16x16xf32>
    %170 = vector.shape_cast %167 : vector<16x16xf32> to vector<1x1x16x16xf32>
    tpu.vector_store %arg9[%c0_199, %c11_200, %c0_201, %c0_202], %170 {strides = array<i32>} : memref<1x16x16x16xf32, #tpu.memory_space<vmem>>, vector<1x1x16x16xf32>,
    %c216 = arith.constant 216 : index
    %c0_203 = arith.constant 0 : index
    %171 = vector.load %arg12[%c216, %c0_203] : memref<286x16xf32, #tpu.memory_space<vmem>>, vector<16x16xf32>
    %c0_204 = arith.constant 0 : index
    %c12_205 = arith.constant 12 : index
    %c0_206 = arith.constant 0 : index
    %c0_207 = arith.constant 0 : index
    %172 = vector.load %arg9[%c0_204, %c12_205, %c0_206, %c0_207] : memref<1x16x16x16xf32, #tpu.memory_space<vmem>>, vector<1x1x16x16xf32>
    %173 = vector.shape_cast %172 : vector<1x1x16x16xf32> to vector<16x16xf32>
    %174 = vector.shape_cast %171 : vector<16x16xf32> to vector<1x1x16x16xf32>
    tpu.vector_store %arg9[%c0_204, %c12_205, %c0_206, %c0_207], %174 {strides = array<i32>} : memref<1x16x16x16xf32, #tpu.memory_space<vmem>>, vector<1x1x16x16xf32>,
    %c234 = arith.constant 234 : index
    %c0_208 = arith.constant 0 : index
    %175 = vector.load %arg12[%c234, %c0_208] : memref<286x16xf32, #tpu.memory_space<vmem>>, vector<16x16xf32>
    %c0_209 = arith.constant 0 : index
    %c13_210 = arith.constant 13 : index
    %c0_211 = arith.constant 0 : index
    %c0_212 = arith.constant 0 : index
    %176 = vector.load %arg9[%c0_209, %c13_210, %c0_211, %c0_212] : memref<1x16x16x16xf32, #tpu.memory_space<vmem>>, vector<1x1x16x16xf32>
    %177 = vector.shape_cast %176 : vector<1x1x16x16xf32> to vector<16x16xf32>
    %178 = vector.shape_cast %175 : vector<16x16xf32> to vector<1x1x16x16xf32>
    tpu.vector_store %arg9[%c0_209, %c13_210, %c0_211, %c0_212], %178 {strides = array<i32>} : memref<1x16x16x16xf32, #tpu.memory_space<vmem>>, vector<1x1x16x16xf32>,
    %c252 = arith.constant 252 : index
    %c0_213 = arith.constant 0 : index
    %179 = vector.load %arg12[%c252, %c0_213] : memref<286x16xf32, #tpu.memory_space<vmem>>, vector<16x16xf32>
    %c0_214 = arith.constant 0 : index
    %c14_215 = arith.constant 14 : index
    %c0_216 = arith.constant 0 : index
    %c0_217 = arith.constant 0 : index
    %180 = vector.load %arg9[%c0_214, %c14_215, %c0_216, %c0_217] : memref<1x16x16x16xf32, #tpu.memory_space<vmem>>, vector<1x1x16x16xf32>
    %181 = vector.shape_cast %180 : vector<1x1x16x16xf32> to vector<16x16xf32>
    %182 = vector.shape_cast %179 : vector<16x16xf32> to vector<1x1x16x16xf32>
    tpu.vector_store %arg9[%c0_214, %c14_215, %c0_216, %c0_217], %182 {strides = array<i32>} : memref<1x16x16x16xf32, #tpu.memory_space<vmem>>, vector<1x1x16x16xf32>,
    %c270 = arith.constant 270 : index
    %c0_218 = arith.constant 0 : index
    %183 = vector.load %arg12[%c270, %c0_218] : memref<286x16xf32, #tpu.memory_space<vmem>>, vector<16x16xf32>
    %c0_219 = arith.constant 0 : index
    %c15_220 = arith.constant 15 : index
    %c0_221 = arith.constant 0 : index
    %c0_222 = arith.constant 0 : index
    %184 = vector.load %arg9[%c0_219, %c15_220, %c0_221, %c0_222] : memref<1x16x16x16xf32, #tpu.memory_space<vmem>>, vector<1x1x16x16xf32>
    %185 = vector.shape_cast %184 : vector<1x1x16x16xf32> to vector<16x16xf32>
    %186 = vector.shape_cast %183 : vector<16x16xf32> to vector<1x1x16x16xf32>
    tpu.vector_store %arg9[%c0_219, %c15_220, %c0_221, %c0_222], %186 {strides = array<i32>} : memref<1x16x16x16xf32, #tpu.memory_space<vmem>>, vector<1x1x16x16xf32>,
    return
  }
  func.func @transform_0(%arg0: i32) -> (i32, i32, i32, i32) {
    %c0_i32 = arith.constant 0 : i32
    %c0_i32_0 = arith.constant 0 : i32
    %c0_i32_1 = arith.constant 0 : i32
    %c0_i32_2 = arith.constant 0 : i32
    return %arg0, %c0_i32, %c0_i32_0, %c0_i32_1 : i32, i32, i32, i32
  }
  func.func @transform_1(%arg0: i32) -> (i32, i32) {
    %c0_i32 = arith.constant 0 : i32
    %c0_i32_0 = arith.constant 0 : i32
    %c0_i32_1 = arith.constant 0 : i32
    return %c0_i32, %c0_i32_0 : i32, i32
  }
  func.func @transform_2(%arg0: i32) -> (i32, i32) {
    %c0_i32 = arith.constant 0 : i32
    %c0_i32_0 = arith.constant 0 : i32
    %c0_i32_1 = arith.constant 0 : i32
    return %c0_i32, %c0_i32_0 : i32, i32
  }
  func.func @transform_3(%arg0: i32) -> (i32, i32) {
    %c0_i32 = arith.constant 0 : i32
    %c0_i32_0 = arith.constant 0 : i32
    %c0_i32_1 = arith.constant 0 : i32
    return %c0_i32, %c0_i32_0 : i32, i32
  }
  func.func @transform_4(%arg0: i32) -> (i32, i32, i32) {
    %c0_i32 = arith.constant 0 : i32
    %c0_i32_0 = arith.constant 0 : i32
    %c0_i32_1 = arith.constant 0 : i32
    %c0_i32_2 = arith.constant 0 : i32
    return %c0_i32, %c0_i32_0, %c0_i32_1 : i32, i32, i32
  }
  func.func @transform_5(%arg0: i32) -> (i32, i32) {
    %c0_i32 = arith.constant 0 : i32
    %c0_i32_0 = arith.constant 0 : i32
    %c0_i32_1 = arith.constant 0 : i32
    return %c0_i32, %c0_i32_0 : i32, i32
  }
  func.func @transform_6(%arg0: i32) -> (i32, i32) {
    %c0_i32 = arith.constant 0 : i32
    %c0_i32_0 = arith.constant 0 : i32
    %c0_i32_1 = arith.constant 0 : i32
    return %c0_i32, %c0_i32_0 : i32, i32
  }
  func.func @transform_7(%arg0: i32) -> (i32, i32) {
    %c0_i32 = arith.constant 0 : i32
    %c0_i32_0 = arith.constant 0 : i32
    %c0_i32_1 = arith.constant 0 : i32
    return %c0_i32, %c0_i32_0 : i32, i32
  }
  func.func @transform_8(%arg0: i32) -> (i32, i32, i32, i32) {
    %c0_i32 = arith.constant 0 : i32
    %c0_i32_0 = arith.constant 0 : i32
    %c0_i32_1 = arith.constant 0 : i32
    %c0_i32_2 = arith.constant 0 : i32
    return %arg0, %c0_i32, %c0_i32_0, %c0_i32_1 : i32, i32, i32, i32
  }
}

</mosaic_0001>

<llo_original>
// kernel: tpu_custom_call.1
$region0: #{tpu_custom_call.1}
  #allocation0 [shape = 'u32[]', space=smem, size = 0x4, offset = 0x4, fixed_abs, tag = 'smem constant byte address 0x4 - core index']
  #allocation1 [shape = 'u32[144,128]{1,0:T(1,128)}', space=vmem, size = 0x12000, scoped, tag = 'internal scratch']
  #allocation2 [shape = 'f32[324,16]{1,0:T(8,128)}', space=vmem, size = 0x29000, scoped, tag = 'scratch operand']
  #allocation3 [shape = 'f32[324,4]{1,0:T(8,128)}', space=vmem, size = 0x29000, scoped, tag = 'scratch operand']
  #allocation4 [shape = 'f32[286,16]{1,0:T(8,128)}', space=vmem, size = 0x24000, scoped, tag = 'scratch operand']
  %s0 = inlined_call_operand.hbm [shape: f32[2,16,16,16], index: 0, kind: input, shape index: {}]
  %s1 = inlined_call_operand.vmem [shape: f32[324,1], index: 1, kind: input, shape index: {}]
  %s2 = inlined_call_operand.vmem [shape: f32[16,4], index: 2, kind: input, shape index: {}]
  %s3 = inlined_call_operand.vmem [shape: f32[1,4], index: 3, kind: input, shape index: {}]
  %s4 = inlined_call_operand.vmem [shape: f32[9,4,4], index: 4, kind: input, shape index: {}]
  %s5 = inlined_call_operand.vmem [shape: f32[1,4], index: 5, kind: input, shape index: {}]
  %s6 = inlined_call_operand.vmem [shape: f32[4,16], index: 6, kind: input, shape index: {}]
  %s7 = inlined_call_operand.vmem [shape: f32[1,16], index: 7, kind: input, shape index: {}]
  %s8 = inlined_call_operand.hbm [shape: f32[2,16,16,16], index: 8, kind: output, shape index: {}]
  %s9 = sld [smem:[#allocation0]]
  $region69: #{tpu_custom_call.1} parent=0
    _
  %s11 = ssub.s32 1, %s9
  %s12 = scalar_select 0, %s11, %s9
  $region1: #{tpu_custom_call.1} parent=0
    #allocation5 [shape = 'u8[262144]{0}', space=vmem, size = 0x40000, scoped, tag = 'input window, operand 0']
    #allocation6 [shape = 's32[2]{0}', space=sflag, size = 0x8, scoped, tag = 'scoped memory for tpu_custom_call.1']
    #allocation7 [shape = 's32[2]{0}', space=sflag, size = 0x8, scoped, tag = 'scoped memory for tpu_custom_call.1']
    #allocation8 [shape = 'u8[262144]{0}', space=vmem, size = 0x40000, scoped, tag = 'output window, operand 0']
    %13 = vsyncpa [#allocation6], 0
    %s14 = scalar_lea.sflag [#allocation6], 1
    %15 = vsyncpa %s14, 0
    %16 = vsyncpa [#allocation7], 0
    %s17 = scalar_lea.sflag [#allocation7], 1
    %18 = vsyncpa %s17, 0
    loop: start=0, step=1, limit=4
    $region2: #{tpu_custom_call.1} parent=1 // loop_pre_header
      _
    $region3: #{tpu_custom_call.1} parent=1 // loop_header
      %s20 = sphi 0, %s24
      %p21 = scmp.ge.s32.totalorder %s20, 4
      %s30 = sphi 0, %s32
      %s33 = sphi 0, %s30
      %s34 = sphi 0, %s33
      %s50 = sphi 0, %s34
      %s54 = sphi 0, %s54
      %s56 = sphi 0, %s54
      %s57 = sphi 0, %s56
      %s71 = sphi 0, %s57
      %s75 = sphi 0, %s75
      %s77 = sphi 0, %s75
      %s78 = sphi 0, %s77
      %s92 = sphi 0, %s78
      %s96 = sphi 0, %s96
      %s98 = sphi 0, %s96
      %s99 = sphi 0, %s98
      %s113 = sphi 0, %s99
      %s117 = sphi 0, %s117
      %s119 = sphi 0, %s117
      %s120 = sphi 0, %s119
      %s134 = sphi 0, %s120
      %s138 = sphi 0, %s138
      %s140 = sphi 0, %s138
      %s141 = sphi 0, %s140
      %s155 = sphi 0, %s141
      %s159 = sphi 0, %s159
      %s161 = sphi 0, %s159
      %s162 = sphi 0, %s161
      %s176 = sphi 0, %s162
      %s180 = sphi 0, %s180
      %s182 = sphi 0, %s180
      %s183 = sphi 0, %s182
      %s197 = sphi 0, %s183
      %s203 = sphi 0, %s205
      %s206 = sphi 0, %s203
      %s207 = sphi 0, %s206
      %s223 = sphi 0, %s207
    $region4: #{tpu_custom_call.1} parent=1 // loop_header_branch
      %23 = sbr.rel (%p21) target = $region8
    $region5: #{tpu_custom_call.1} parent=1 // loop_body
      %s25 = ssub.s32 %s20, 1
      %s26 = ssub.s32 %s20, 2
      %s27 = sadd.s32 %s20, 1
      %s28 = ssub.s32 %s20, %s27
      %p29 = scmp.eq.s32.totalorder %s28, 0
      %s31 = sadd.s32 %s30, 1
      %s32 = scalar_select %p29, %s30, %s31
      %p35 = pneg %p29
      %p36 = scmp.eq.s32.totalorder %s20, 1
      %p37 = por %p35, %p36
      %p38 = scmp.ne.s32.totalorder %s30, %s33
      %p39 = scmp.eq.s32.totalorder %s20, 0
      %p40 = por %p38, %p39
      %p41 = scmp.ne.s32.totalorder %s30, %s33
      %p42 = scmp.eq.s32.totalorder %s25, 1
      %p43 = por %p41, %p42
      %p44 = scmp.ne.s32.totalorder %s33, %s34
      %p45 = scmp.eq.s32.totalorder %s25, 0
      %p46 = por %p44, %p45
      %p47 = scmp.ne.s32.totalorder %s33, %s34
      %p48 = scmp.eq.s32.totalorder %s26, 1
      %p49 = por %p47, %p48
      %p51 = scmp.ne.s32.totalorder %s34, %s50
      %p52 = scmp.eq.s32.totalorder %s26, 0
      %p53 = por %p51, %p52
      %s55 = sadd.s32 %s54, 1
      %p58 = scmp.eq.s32.totalorder %s20, 1
      %p59 = scmp.ne.s32.totalorder %s54, %s56
      %p60 = scmp.eq.s32.totalorder %s20, 0
      %p61 = por %p59, %p60
      %p62 = scmp.ne.s32.totalorder %s54, %s56
      %p63 = scmp.eq.s32.totalorder %s25, 1
      %p64 = por %p62, %p63
      %p65 = scmp.ne.s32.totalorder %s56, %s57
      %p66 = scmp.eq.s32.totalorder %s25, 0
      %p67 = por %p65, %p66
      %p68 = scmp.ne.s32.totalorder %s56, %s57
      %p69 = scmp.eq.s32.totalorder %s26, 1
      %p70 = por %p68, %p69
      %p72 = scmp.ne.s32.totalorder %s57, %s71
      %p73 = scmp.eq.s32.totalorder %s26, 0
      %p74 = por %p72, %p73
      %s76 = sadd.s32 %s75, 1
      %p79 = scmp.eq.s32.totalorder %s20, 1
      %p80 = scmp.ne.s32.totalorder %s75, %s77
      %p81 = scmp.eq.s32.totalorder %s20, 0
      %p82 = por %p80, %p81
      %p83 = scmp.ne.s32.totalorder %s75, %s77
      %p84 = scmp.eq.s32.totalorder %s25, 1
      %p85 = por %p83, %p84
      %p86 = scmp.ne.s32.totalorder %s77, %s78
      %p87 = scmp.eq.s32.totalorder %s25, 0
      %p88 = por %p86, %p87
      %p89 = scmp.ne.s32.totalorder %s77, %s78
      %p90 = scmp.eq.s32.totalorder %s26, 1
      %p91 = por %p89, %p90
      %p93 = scmp.ne.s32.totalorder %s78, %s92
      %p94 = scmp.eq.s32.totalorder %s26, 0
      %p95 = por %p93, %p94
      %s97 = sadd.s32 %s96, 1
      %p100 = scmp.eq.s32.totalorder %s20, 1
      %p101 = scmp.ne.s32.totalorder %s96, %s98
      %p102 = scmp.eq.s32.totalorder %s20, 0
      %p103 = por %p101, %p102
      %p104 = scmp.ne.s32.totalorder %s96, %s98
      %p105 = scmp.eq.s32.totalorder %s25, 1
      %p106 = por %p104, %p105
      %p107 = scmp.ne.s32.totalorder %s98, %s99
      %p108 = scmp.eq.s32.totalorder %s25, 0
      %p109 = por %p107, %p108
      %p110 = scmp.ne.s32.totalorder %s98, %s99
      %p111 = scmp.eq.s32.totalorder %s26, 1
      %p112 = por %p110, %p111
      %p114 = scmp.ne.s32.totalorder %s99, %s113
      %p115 = scmp.eq.s32.totalorder %s26, 0
      %p116 = por %p114, %p115
      %s118 = sadd.s32 %s117, 1
      %p121 = scmp.eq.s32.totalorder %s20, 1
      %p122 = scmp.ne.s32.totalorder %s117, %s119
      %p123 = scmp.eq.s32.totalorder %s20, 0
      %p124 = por %p122, %p123
      %p125 = scmp.ne.s32.totalorder %s117, %s119
      %p126 = scmp.eq.s32.totalorder %s25, 1
      %p127 = por %p125, %p126
      %p128 = scmp.ne.s32.totalorder %s119, %s120
      %p129 = scmp.eq.s32.totalorder %s25, 0
      %p130 = por %p128, %p129
      %p131 = scmp.ne.s32.totalorder %s119, %s120
      %p132 = scmp.eq.s32.totalorder %s26, 1
      %p133 = por %p131, %p132
      %p135 = scmp.ne.s32.totalorder %s120, %s134
      %p136 = scmp.eq.s32.totalorder %s26, 0
      %p137 = por %p135, %p136
      %s139 = sadd.s32 %s138, 1
      %p142 = scmp.eq.s32.totalorder %s20, 1
      %p143 = scmp.ne.s32.totalorder %s138, %s140
      %p144 = scmp.eq.s32.totalorder %s20, 0
      %p145 = por %p143, %p144
      %p146 = scmp.ne.s32.totalorder %s138, %s140
      %p147 = scmp.eq.s32.totalorder %s25, 1
      %p148 = por %p146, %p147
      %p149 = scmp.ne.s32.totalorder %s140, %s141
      %p150 = scmp.eq.s32.totalorder %s25, 0
      %p151 = por %p149, %p150
      %p152 = scmp.ne.s32.totalorder %s140, %s141
      %p153 = scmp.eq.s32.totalorder %s26, 1
      %p154 = por %p152, %p153
      %p156 = scmp.ne.s32.totalorder %s141, %s155
      %p157 = scmp.eq.s32.totalorder %s26, 0
      %p158 = por %p156, %p157
      %s160 = sadd.s32 %s159, 1
      %p163 = scmp.eq.s32.totalorder %s20, 1
      %p164 = scmp.ne.s32.totalorder %s159, %s161
      %p165 = scmp.eq.s32.totalorder %s20, 0
      %p166 = por %p164, %p165
      %p167 = scmp.ne.s32.totalorder %s159, %s161
      %p168 = scmp.eq.s32.totalorder %s25, 1
      %p169 = por %p167, %p168
      %p170 = scmp.ne.s32.totalorder %s161, %s162
      %p171 = scmp.eq.s32.totalorder %s25, 0
      %p172 = por %p170, %p171
      %p173 = scmp.ne.s32.totalorder %s161, %s162
      %p174 = scmp.eq.s32.totalorder %s26, 1
      %p175 = por %p173, %p174
      %p177 = scmp.ne.s32.totalorder %s162, %s176
      %p178 = scmp.eq.s32.totalorder %s26, 0
      %p179 = por %p177, %p178
      %s181 = sadd.s32 %s180, 1
      %p184 = scmp.eq.s32.totalorder %s20, 1
      %p185 = scmp.ne.s32.totalorder %s180, %s182
      %p186 = scmp.eq.s32.totalorder %s20, 0
      %p187 = por %p185, %p186
      %p188 = scmp.ne.s32.totalorder %s180, %s182
      %p189 = scmp.eq.s32.totalorder %s25, 1
      %p190 = por %p188, %p189
      %p191 = scmp.ne.s32.totalorder %s182, %s183
      %p192 = scmp.eq.s32.totalorder %s25, 0
      %p193 = por %p191, %p192
      %p194 = scmp.ne.s32.totalorder %s182, %s183
      %p195 = scmp.eq.s32.totalorder %s26, 1
      %p196 = por %p194, %p195
      %p198 = scmp.ne.s32.totalorder %s183, %s197
      %p199 = scmp.eq.s32.totalorder %s26, 0
      %p200 = por %p198, %p199
      %s201 = ssub.s32 %s20, %s27
      %p202 = scmp.eq.s32.totalorder %s201, 0
      %s204 = sadd.s32 %s203, 1
      %s205 = scalar_select %p202, %s203, %s204
      %p208 = pneg %p202
      %p209 = scmp.eq.s32.totalorder %s20, 1
      %p210 = por %p208, %p209
      %p211 = scmp.ne.s32.totalorder %s203, %s206
      %p212 = scmp.eq.s32.totalorder %s20, 0
      %p213 = por %p211, %p212
      %p214 = scmp.ne.s32.totalorder %s203, %s206
      %p215 = scmp.eq.s32.totalorder %s25, 1
      %p216 = por %p214, %p215
      %p217 = scmp.ne.s32.totalorder %s206, %s207
      %p218 = scmp.eq.s32.totalorder %s25, 0
      %p219 = por %p217, %p218
      %p220 = scmp.ne.s32.totalorder %s206, %s207
      %p221 = scmp.eq.s32.totalorder %s26, 1
      %p222 = por %p220, %p221
      %p224 = scmp.ne.s32.totalorder %s207, %s223
      %p225 = scmp.eq.s32.totalorder %s26, 0
      %p226 = por %p224, %p225
      %p227 = scmp.le.s32.totalorder 1, %s20
      %p228 = scmp.lt.s32.totalorder %s20, 3
      %p229 = pnand %p227, %p228
      %p230 = pneg %p229
      // Predicated region
      $region9: #{tpu_custom_call.1} parent=5 // pred_check
        _
      $region10: #{tpu_custom_call.1} parent=5 // pred_check_branch
        %232 = sbr.rel (%p229) target = $region12
      $region11: #{tpu_custom_call.1} parent=5 // pred_region
        %s233 = ssub.s32 %s20, 1
        // Predicated region
        $region13: #{tpu_custom_call.1} parent=11 // pred_check
          %p234 = pneg %p67
        $region14: #{tpu_custom_call.1} parent=11 // pred_check_branch
          %236 = sbr.rel (%p234) target = $region16
        $region15: #{tpu_custom_call.1} parent=11 // pred_region
          _
        $region16: #{tpu_custom_call.1} parent=11 // pred_fallthru
          _
        // Predicated region
        $region17: #{tpu_custom_call.1} parent=11 // pred_check
          %p237 = pneg %p88
        $region18: #{tpu_custom_call.1} parent=11 // pred_check_branch
          %239 = sbr.rel (%p237) target = $region20
        $region19: #{tpu_custom_call.1} parent=11 // pred_region
          _
        $region20: #{tpu_custom_call.1} parent=11 // pred_fallthru
          _
        // Predicated region
        $region21: #{tpu_custom_call.1} parent=11 // pred_check
          %p240 = pneg %p109
        $region22: #{tpu_custom_call.1} parent=11 // pred_check_branch
          %242 = sbr.rel (%p240) target = $region24
        $region23: #{tpu_custom_call.1} parent=11 // pred_region
          _
        $region24: #{tpu_custom_call.1} parent=11 // pred_fallthru
          _
        // Predicated region
        $region25: #{tpu_custom_call.1} parent=11 // pred_check
          %p243 = pneg %p130
        $region26: #{tpu_custom_call.1} parent=11 // pred_check_branch
          %245 = sbr.rel (%p243) target = $region28
        $region27: #{tpu_custom_call.1} parent=11 // pred_region
          _
        $region28: #{tpu_custom_call.1} parent=11 // pred_fallthru
          _
        // Predicated region
        $region29: #{tpu_custom_call.1} parent=11 // pred_check
          %p246 = pneg %p151
        $region30: #{tpu_custom_call.1} parent=11 // pred_check_branch
          %248 = sbr.rel (%p246) target = $region32
        $region31: #{tpu_custom_call.1} parent=11 // pred_region
          _
        $region32: #{tpu_custom_call.1} parent=11 // pred_fallthru
          _
        // Predicated region
        $region33: #{tpu_custom_call.1} parent=11 // pred_check
          %p249 = pneg %p172
        $region34: #{tpu_custom_call.1} parent=11 // pred_check_branch
          %251 = sbr.rel (%p249) target = $region36
        $region35: #{tpu_custom_call.1} parent=11 // pred_region
          _
        $region36: #{tpu_custom_call.1} parent=11 // pred_fallthru
          _
        // Predicated region
        $region37: #{tpu_custom_call.1} parent=11 // pred_check
          %p252 = pneg %p193
        $region38: #{tpu_custom_call.1} parent=11 // pred_check_branch
          %254 = sbr.rel (%p252) target = $region40
        $region39: #{tpu_custom_call.1} parent=11 // pred_region
          _
        $region40: #{tpu_custom_call.1} parent=11 // pred_fallthru
          _
      $region12: #{tpu_custom_call.1} parent=5 // pred_fallthru
        _
      %p255 = scmp.lt.s32.totalorder %s20, 2
      // Predicated region
      $region41: #{tpu_custom_call.1} parent=5 // pred_check
        %p256 = pneg %p255
      $region42: #{tpu_custom_call.1} parent=5 // pred_check_branch
        %258 = sbr.rel (%p256) target = $region44
      $region43: #{tpu_custom_call.1} parent=5 // pred_region
        // Predicated region
        $region45: #{tpu_custom_call.1} parent=43 // pred_check
          %p259 = pneg %p40
        $region46: #{tpu_custom_call.1} parent=43 // pred_check_branch
          %261 = sbr.rel (%p259) target = $region48
        $region47: #{tpu_custom_call.1} parent=43 // pred_region
          %s262 = sand.u32 %s30, 1
          %s263 = scalar_lea.sflag [#allocation6], %s262
          %s264 = sand.u32 %s30, 1
          %s265 = smul.addr %s264, 256
          %s266 = scalar_lea.vmem [#allocation5], %s265
          %s268 = ssub.s32 4096, 4096
          %269 = vsyncadd %s263, %s268
          %s270 = smul.addr %s20, 32
          %s271 = smul.addr %s270, 128
          %s272 = scalar_lea.hbm %s0, %s271
          %s273 = sshll.u32 %s266, 4
          %s274 = int_to_ptr.vmem [resolvable:$true] %s273
          %279 = dma.hbm_to_vmem [thread:$0]  %s272, 4096, %s274, %s263, 128, 128, 8
        $region48: #{tpu_custom_call.1} parent=43 // pred_fallthru
          _
      $region44: #{tpu_custom_call.1} parent=5 // pred_fallthru
        _
      %p280 = scmp.le.s32.totalorder 1, %s20
      %p281 = scmp.lt.s32.totalorder %s20, 3
      %p282 = pnand %p280, %p281
      %p283 = pneg %p282
      // Predicated region
      $region49: #{tpu_custom_call.1} parent=5 // pred_check
        _
      $region50: #{tpu_custom_call.1} parent=5 // pred_check_branch
        %285 = sbr.rel (%p282) target = $region52
      $region51: #{tpu_custom_call.1} parent=5 // pred_region
        %s286 = ssub.s32 %s20, 1
        %s287 = sand.u32 %s33, 1
        %s288 = scalar_lea.sflag [#allocation6], %s287
        %s289 = sand.u32 %s33, 1
        %s290 = smul.addr %s289, 256
        %s291 = scalar_lea.vmem [#allocation5], %s290
        // Predicated region
        $region53: #{tpu_custom_call.1} parent=51 // pred_check
          %p292 = pneg %p46
        $region54: #{tpu_custom_call.1} parent=51 // pred_check_branch
          %294 = sbr.rel (%p292) target = $region56
        $region55: #{tpu_custom_call.1} parent=51 // pred_region
          %295 = dma.done %s288, 4096
        $region56: #{tpu_custom_call.1} parent=51 // pred_fallthru
          _
        %s296 = sand.u32 %s33, 1
        %s297 = scalar_lea.sflag [#allocation6], %s296
        %s298 = sand.u32 %s33, 1
        %s299 = smul.addr %s298, 256
        %s300 = scalar_lea.vmem [#allocation5], %s299
        %p301 = pneg %p46
        %p302 = pneg %p43
        %p303 = pneg %p67
        %p304 = pneg %p64
        %p305 = pneg %p88
        %p306 = pneg %p85
        %p307 = pneg %p109
        %p308 = pneg %p106
        %p309 = pneg %p130
        %p310 = pneg %p127
        %p311 = pneg %p151
        %p312 = pneg %p148
        %p313 = pneg %p172
        %p314 = pneg %p169
        %p315 = pneg %p193
        %p316 = pneg %p190
        %p317 = pneg %p219
        %p318 = pneg %p216
        %s319 = sand.u32 %s206, 1
        %s320 = scalar_lea.sflag [#allocation7], %s319
        %s321 = sand.u32 %s206, 1
        %s322 = smul.addr %s321, 256
        %s323 = scalar_lea.vmem [#allocation8], %s322
        %v324 = vld [vmem:[%s291] sm:$0xff]
        %v325 = vld [vmem:[%s291 + $0x8] sm:$0xff]
        %vm326 = vcmask 130048
        %327 = vst.msk [vmem:[#allocation2 + $0x13] sm:$0xff] %vm326, %v324
        %328 = vst.msk [vmem:[#allocation2 + $0x1b] sm:$0xff] %vm326, %v325
        %s329 = scalar_lea.vmem %s291, 16 [#allocation5]
        %v330 = vld [vmem:[%s329] sm:$0xff]
        %v331 = vld [vmem:[%s329 + $0x8] sm:$0xff]
        %332 = vst.msk [vmem:[#allocation2 + $0x25] sm:$0xff] %vm326, %v330
        %333 = vst.msk [vmem:[#allocation2 + $0x2d] sm:$0xff] %vm326, %v331
        %s334 = scalar_lea.vmem %s291, 32 [#allocation5]
        %v335 = vld [vmem:[%s334] sm:$0xff]
        %v336 = vld [vmem:[%s334 + $0x8] sm:$0xff]
        %337 = vst.msk [vmem:[#allocation2 + $0x37] sm:$0xff] %vm326, %v335
        %338 = vst.msk [vmem:[#allocation2 + $0x3f] sm:$0xff] %vm326, %v336
        %s339 = scalar_lea.vmem %s291, 48 [#allocation5]
        %v340 = vld [vmem:[%s339] sm:$0xff]
        %v341 = vld [vmem:[%s339 + $0x8] sm:$0xff]
        %342 = vst.msk [vmem:[#allocation2 + $0x49] sm:$0xff] %vm326, %v340
        %343 = vst.msk [vmem:[#allocation2 + $0x51] sm:$0xff] %vm326, %v341
        %s344 = scalar_lea.vmem %s291, 64 [#allocation5]
        %v345 = vld [vmem:[%s344] sm:$0xff]
        %v346 = vld [vmem:[%s344 + $0x8] sm:$0xff]
        %347 = vst.msk [vmem:[#allocation2 + $0x5b] sm:$0xff] %vm326, %v345
        %348 = vst.msk [vmem:[#allocation2 + $0x63] sm:$0xff] %vm326, %v346
        %s349 = scalar_lea.vmem %s291, 80 [#allocation5]
        %v350 = vld [vmem:[%s349] sm:$0xff]
        %v351 = vld [vmem:[%s349 + $0x8] sm:$0xff]
        %352 = vst.msk [vmem:[#allocation2 + $0x6d] sm:$0xff] %vm326, %v350
        %353 = vst.msk [vmem:[#allocation2 + $0x75] sm:$0xff] %vm326, %v351
        %s354 = scalar_lea.vmem %s291, 96 [#allocation5]
        %v355 = vld [vmem:[%s354] sm:$0xff]
        %v356 = vld [vmem:[%s354 + $0x8] sm:$0xff]
        %357 = vst.msk [vmem:[#allocation2 + $0x7f] sm:$0xff] %vm326, %v355
        %358 = vst.msk [vmem:[#allocation2 + $0x87] sm:$0xff] %vm326, %v356
        %s359 = scalar_lea.vmem %s291, 112 [#allocation5]
        %v360 = vld [vmem:[%s359] sm:$0xff]
        %v361 = vld [vmem:[%s359 + $0x8] sm:$0xff]
        %362 = vst.msk [vmem:[#allocation2 + $0x91] sm:$0xff] %vm326, %v360
        %363 = vst.msk [vmem:[#allocation2 + $0x99] sm:$0xff] %vm326, %v361
        %s364 = scalar_lea.vmem %s291, 128 [#allocation5]
        %v365 = vld [vmem:[%s364] sm:$0xff]
        %v366 = vld [vmem:[%s364 + $0x8] sm:$0xff]
        %367 = vst.msk [vmem:[#allocation2 + $0xa3] sm:$0xff] %vm326, %v365
        %368 = vst.msk [vmem:[#allocation2 + $0xab] sm:$0xff] %vm326, %v366
        %s369 = scalar_lea.vmem %s291, 144 [#allocation5]
        %v370 = vld [vmem:[%s369] sm:$0xff]
        %v371 = vld [vmem:[%s369 + $0x8] sm:$0xff]
        %372 = vst.msk [vmem:[#allocation2 + $0xb5] sm:$0xff] %vm326, %v370
        %373 = vst.msk [vmem:[#allocation2 + $0xbd] sm:$0xff] %vm326, %v371
        %s374 = scalar_lea.vmem %s291, 160 [#allocation5]
        %v375 = vld [vmem:[%s374] sm:$0xff]
        %v376 = vld [vmem:[%s374 + $0x8] sm:$0xff]
        %377 = vst.msk [vmem:[#allocation2 + $0xc7] sm:$0xff] %vm326, %v375
        %378 = vst.msk [vmem:[#allocation2 + $0xcf] sm:$0xff] %vm326, %v376
        %s379 = scalar_lea.vmem %s291, 176 [#allocation5]
        %v380 = vld [vmem:[%s379] sm:$0xff]
        %v381 = vld [vmem:[%s379 + $0x8] sm:$0xff]
        %382 = vst.msk [vmem:[#allocation2 + $0xd9] sm:$0xff] %vm326, %v380
        %383 = vst.msk [vmem:[#allocation2 + $0xe1] sm:$0xff] %vm326, %v381
        %s384 = scalar_lea.vmem %s291, 192 [#allocation5]
        %v385 = vld [vmem:[%s384] sm:$0xff]
        %v386 = vld [vmem:[%s384 + $0x8] sm:$0xff]
        %387 = vst.msk [vmem:[#allocation2 + $0xeb] sm:$0xff] %vm326, %v385
        %388 = vst.msk [vmem:[#allocation2 + $0xf3] sm:$0xff] %vm326, %v386
        %s389 = scalar_lea.vmem %s291, 208 [#allocation5]
        %v390 = vld [vmem:[%s389] sm:$0xff]
        %v391 = vld [vmem:[%s389 + $0x8] sm:$0xff]
        %392 = vst.msk [vmem:[#allocation2 + $0xfd] sm:$0xff] %vm326, %v390
        %393 = vst.msk [vmem:[#allocation2 + $0x105] sm:$0xff] %vm326, %v391
        %s394 = scalar_lea.vmem %s291, 224 [#allocation5]
        %v395 = vld [vmem:[%s394] sm:$0xff]
        %v396 = vld [vmem:[%s394 + $0x8] sm:$0xff]
        %397 = vst.msk [vmem:[#allocation2 + $0x10f] sm:$0xff] %vm326, %v395
        %398 = vst.msk [vmem:[#allocation2 + $0x117] sm:$0xff] %vm326, %v396
        %s399 = scalar_lea.vmem %s291, 240 [#allocation5]
        %v400 = vld [vmem:[%s399] sm:$0xff]
        %v401 = vld [vmem:[%s399 + $0x8] sm:$0xff]
        %402 = vst.msk [vmem:[#allocation2 + $0x121] sm:$0xff] %vm326, %v400
        %403 = vst.msk [vmem:[#allocation2 + $0x129] sm:$0xff] %vm326, %v401
        %v404 = vld [vmem:[#allocation2] sm:$0xff]
        %v405 = vld [vmem:[#allocation2 + $0x8] sm:$0xff]
        %v406 = vld [vmem:[#allocation2 + $0x10] sm:$0xff]
        %v407 = vld [vmem:[#allocation2 + $0x18] sm:$0xff]
        %v408 = vld [vmem:[#allocation2 + $0x20] sm:$0xff]
        %v409 = vld [vmem:[#allocation2 + $0x28] sm:$0xff]
        %v410 = vld [vmem:[#allocation2 + $0x30] sm:$0xff]
        %v411 = vld [vmem:[#allocation2 + $0x38] sm:$0xff]
        %v412 = vld [vmem:[#allocation2 + $0x40] sm:$0xff]
        %v413 = vld [vmem:[#allocation2 + $0x48] sm:$0xff]
        %v414 = vld [vmem:[#allocation2 + $0x50] sm:$0xff]
        %v415 = vld [vmem:[#allocation2 + $0x58] sm:$0xff]
        %v416 = vld [vmem:[#allocation2 + $0x60] sm:$0xff]
        %v417 = vld [vmem:[#allocation2 + $0x68] sm:$0xff]
        %v418 = vld [vmem:[#allocation2 + $0x70] sm:$0xff]
        %v419 = vld [vmem:[#allocation2 + $0x78] sm:$0xff]
        %v420 = vld [vmem:[#allocation2 + $0x80] sm:$0xff]
        %v421 = vld [vmem:[#allocation2 + $0x88] sm:$0xff]
        %v422 = vld [vmem:[#allocation2 + $0x90] sm:$0xff]
        %v423 = vld [vmem:[#allocation2 + $0x98] sm:$0xff]
        %v424 = vld [vmem:[#allocation2 + $0xa0] sm:$0xff]
        %v425 = vld [vmem:[#allocation2 + $0xa8] sm:$0xff]
        %v426 = vld [vmem:[#allocation2 + $0xb0] sm:$0xff]
        %v427 = vld [vmem:[#allocation2 + $0xb8] sm:$0xff]
        %v428 = vld [vmem:[#allocation2 + $0xc0] sm:$0xff]
        %v429 = vld [vmem:[#allocation2 + $0xc8] sm:$0xff]
        %v430 = vld [vmem:[#allocation2 + $0xd0] sm:$0xff]
        %v431 = vld [vmem:[#allocation2 + $0xd8] sm:$0xff]
        %v432 = vld [vmem:[#allocation2 + $0xe0] sm:$0xff]
        %v433 = vld [vmem:[#allocation2 + $0xe8] sm:$0xff]
        %v434 = vld [vmem:[#allocation2 + $0xf0] sm:$0xff]
        %v435 = vld [vmem:[#allocation2 + $0xf8] sm:$0xff]
        %v436 = vld [vmem:[#allocation2 + $0x100] sm:$0xff]
        %v437 = vld [vmem:[#allocation2 + $0x108] sm:$0xff]
        %v438 = vld [vmem:[#allocation2 + $0x110] sm:$0xff]
        %v439 = vld [vmem:[#allocation2 + $0x118] sm:$0xff]
        %v440 = vld [vmem:[#allocation2 + $0x120] sm:$0xff]
        %v441 = vld [vmem:[#allocation2 + $0x128] sm:$0xff]
        %v442 = vld [vmem:[#allocation2 + $0x130] sm:$0xff]
        %v443 = vld [vmem:[#allocation2 + $0x138] sm:$0xff]
        %v444 = vld [vmem:[#allocation2 + $0x140] sm:$0xf]
        %v445 = vld [vmem:[%s2] sm:$0xff]
        %v446 = vld [vmem:[%s2 + $0x8] sm:$0xff]
        %v447 = vld [vmem:[%s3] sm:$0x1]
        %v449 = vlaneseq
        %v450 = vshrl.u32 %v449, 7
        %v451 = vsub.s32 0, %v450
        %v452 = vrot.slane %v447, %v451
        %v455 = vsel %vm326, %v404, 0
        %v458 = vsel %vm326, %v405, 0
        %v461 = vsel %vm326, %v406, 0
        %v464 = vsel %vm326, %v407, 0
        %v467 = vsel %vm326, %v408, 0
        %v470 = vsel %vm326, %v409, 0
        %v473 = vsel %vm326, %v410, 0
        %v476 = vsel %vm326, %v411, 0
        %v479 = vsel %vm326, %v412, 0
        %v482 = vsel %vm326, %v413, 0
        %v485 = vsel %vm326, %v414, 0
        %v488 = vsel %vm326, %v415, 0
        %v491 = vsel %vm326, %v416, 0
        %v494 = vsel %vm326, %v417, 0
        %v497 = vsel %vm326, %v418, 0
        %v500 = vsel %vm326, %v419, 0
        %v503 = vsel %vm326, %v420, 0
        %v506 = vsel %vm326, %v421, 0
        %v509 = vsel %vm326, %v422, 0
        %v512 = vsel %vm326, %v423, 0
        %v515 = vsel %vm326, %v424, 0
        %v518 = vsel %vm326, %v425, 0
        %v521 = vsel %vm326, %v426, 0
        %v524 = vsel %vm326, %v427, 0
        %v527 = vsel %vm326, %v428, 0
        %v530 = vsel %vm326, %v429, 0
        %v533 = vsel %vm326, %v430, 0
        %v536 = vsel %vm326, %v431, 0
        %v539 = vsel %vm326, %v432, 0
        %v542 = vsel %vm326, %v433, 0
        %v545 = vsel %vm326, %v434, 0
        %v548 = vsel %vm326, %v435, 0
        %v551 = vsel %vm326, %v436, 0
        %v554 = vsel %vm326, %v437, 0
        %v557 = vsel %vm326, %v438, 0
        %v560 = vsel %vm326, %v439, 0
        %v563 = vsel %vm326, %v440, 0
        %v566 = vsel %vm326, %v441, 0
        %v569 = vsel %vm326, %v442, 0
        %v572 = vsel %vm326, %v443, 0
        %v575 = vsel %vm326, %v444, 0
        %577 = vmatprep.subr.mxu0 0.0
        %578 = vmatpush1.msra.mxu0 0.0
        %579 = vmatprep.subr.mxu0 0.0
        %580 = vmatpush1.msra.mxu0 0.0
        %581 = vmatprep.subr.mxu0 0.0
        %582 = vmatpush1.msra.mxu0 0.0
        %583 = vmatprep.subr.mxu0 0.0
        %584 = vmatpush1.msra.mxu0 0.0
        %585 = vmatprep.subr.mxu0 0.0
        %586 = vmatpush1.msra.mxu0 0.0
        %587 = vmatprep.subr.mxu0 0.0
        %588 = vmatpush1.msra.mxu0 0.0
        %589 = vmatprep.subr.mxu0 0.0
        %590 = vmatpush1.msra.mxu0 0.0
        %591 = vmatprep.subr.mxu0 0.0
        %592 = vmatpush1.msra.mxu0 0.0
        %593 = vmatprep.subr.mxu0 0.0
        %594 = vmatpush1.msra.mxu0 0.0
        %595 = vmatprep.subr.mxu0 0.0
        %596 = vmatpush1.msra.mxu0 0.0
        %597 = vmatprep.subr.mxu0 0.0
        %598 = vmatpush1.msra.mxu0 0.0
        %599 = vmatprep.subr.mxu0 0.0
        %600 = vmatpush1.msra.mxu0 0.0
        %601 = vmatprep.subr.mxu0 0.0
        %602 = vmatpush1.msra.mxu0 0.0
        %603 = vmatprep.subr.mxu0 0.0
        %604 = vmatpush1.msra.mxu0 0.0
        %605 = vmatprep.subr.mxu0 0.0
        %606 = vmatpush1.msra.mxu0 %v446
        %607 = vmatprep.subr.mxu0 0.0
        %608 = vmatpush1.msra.mxu0 %v445
        %609 = vmatprep.subr.mxu0 0.0
        %610 = vmatpush2.msra.mxu0 0.0
        %611 = vmatprep.subr.mxu0 0.0
        %612 = vmatpush2.msra.mxu0 0.0
        %613 = vmatprep.subr.mxu0 0.0
        %614 = vmatpush2.msra.mxu0 0.0
        %615 = vmatprep.subr.mxu0 0.0
        %616 = vmatpush2.msra.mxu0 0.0
        %617 = vmatprep.subr.mxu0 0.0
        %618 = vmatpush2.msra.mxu0 0.0
        %619 = vmatprep.subr.mxu0 0.0
        %620 = vmatpush2.msra.mxu0 0.0
        %621 = vmatprep.subr.mxu0 0.0
        %622 = vmatpush2.msra.mxu0 0.0
        %623 = vmatprep.subr.mxu0 0.0
        %624 = vmatpush2.msra.mxu0 0.0
        %625 = vmatprep.subr.mxu0 0.0
        %626 = vmatpush2.msra.mxu0 0.0
        %627 = vmatprep.subr.mxu0 0.0
        %628 = vmatpush2.msra.mxu0 0.0
        %629 = vmatprep.subr.mxu0 0.0
        %630 = vmatpush2.msra.mxu0 0.0
        %631 = vmatprep.subr.mxu0 0.0
        %632 = vmatpush2.msra.mxu0 0.0
        %633 = vmatprep.subr.mxu0 0.0
        %634 = vmatpush2.msra.mxu0 0.0
        %635 = vmatprep.subr.mxu0 0.0
        %636 = vmatpush2.msra.mxu0 0.0
        %637 = vmatprep.subr.mxu0 0.0
        %638 = vmatpush2.msra.mxu0 0.0
        %639 = vmatprep.subr.mxu0 0.0
        %640 = vmatpush2.msra.mxu0 0.0
        %641 = vmatprep.mubr.f32.mxu0 0.0
        %642 = vmatmul.mubr.f32.gmra.mxu0 %v455
        %v643 = vpop.f32.mrf.mxu0
        %v644 = vadd.f32 %v452, %v643
        %v645 = vpop.f32.mrf.mxu0
        %646 = vmatprep.mubr.f32.mxu0 0.0
        %647 = vmatmul.mubr.f32.gmra.mxu0 %v458
        %v648 = vpop.f32.mrf.mxu0
        %v649 = vadd.f32 %v452, %v648
        %v650 = vpop.f32.mrf.mxu0
        %651 = vmatprep.mubr.f32.mxu0 0.0
        %652 = vmatmul.mubr.f32.gmra.mxu0 %v461
        %v653 = vpop.f32.mrf.mxu0
        %v654 = vadd.f32 %v452, %v653
        %v655 = vpop.f32.mrf.mxu0
        %656 = vmatprep.mubr.f32.mxu0 0.0
        %657 = vmatmul.mubr.f32.gmra.mxu0 %v464
        %v658 = vpop.f32.mrf.mxu0
        %v659 = vadd.f32 %v452, %v658
        %v660 = vpop.f32.mrf.mxu0
        %661 = vmatprep.mubr.f32.mxu0 0.0
        %662 = vmatmul.mubr.f32.gmra.mxu0 %v467
        %v663 = vpop.f32.mrf.mxu0
        %v664 = vadd.f32 %v452, %v663
        %v665 = vpop.f32.mrf.mxu0
        %666 = vmatprep.mubr.f32.mxu0 0.0
        %667 = vmatmul.mubr.f32.gmra.mxu0 %v470
        %v668 = vpop.f32.mrf.mxu0
        %v669 = vadd.f32 %v452, %v668
        %v670 = vpop.f32.mrf.mxu0
        %671 = vmatprep.mubr.f32.mxu0 0.0
        %672 = vmatmul.mubr.f32.gmra.mxu0 %v473
        %v673 = vpop.f32.mrf.mxu0
        %v674 = vadd.f32 %v452, %v673
        %v675 = vpop.f32.mrf.mxu0
        %676 = vmatprep.mubr.f32.mxu0 0.0
        %677 = vmatmul.mubr.f32.gmra.mxu0 %v476
        %v678 = vpop.f32.mrf.mxu0
        %v679 = vadd.f32 %v452, %v678
        %v680 = vpop.f32.mrf.mxu0
        %681 = vmatprep.mubr.f32.mxu0 0.0
        %682 = vmatmul.mubr.f32.gmra.mxu0 %v479
        %v683 = vpop.f32.mrf.mxu0
        %v684 = vadd.f32 %v452, %v683
        %v685 = vpop.f32.mrf.mxu0
        %686 = vmatprep.mubr.f32.mxu0 0.0
        %687 = vmatmul.mubr.f32.gmra.mxu0 %v482
        %v688 = vpop.f32.mrf.mxu0
        %v689 = vadd.f32 %v452, %v688
        %v690 = vpop.f32.mrf.mxu0
        %691 = vmatprep.mubr.f32.mxu0 0.0
        %692 = vmatmul.mubr.f32.gmra.mxu0 %v485
        %v693 = vpop.f32.mrf.mxu0
        %v694 = vadd.f32 %v452, %v693
        %v695 = vpop.f32.mrf.mxu0
        %696 = vmatprep.mubr.f32.mxu0 0.0
        %697 = vmatmul.mubr.f32.gmra.mxu0 %v488
        %v698 = vpop.f32.mrf.mxu0
        %v699 = vadd.f32 %v452, %v698
        %v700 = vpop.f32.mrf.mxu0
        %701 = vmatprep.mubr.f32.mxu0 0.0
        %702 = vmatmul.mubr.f32.gmra.mxu0 %v491
        %v703 = vpop.f32.mrf.mxu0
        %v704 = vadd.f32 %v452, %v703
        %v705 = vpop.f32.mrf.mxu0
        %706 = vmatprep.mubr.f32.mxu0 0.0
        %707 = vmatmul.mubr.f32.gmra.mxu0 %v494
        %v708 = vpop.f32.mrf.mxu0
        %v709 = vadd.f32 %v452, %v708
        %v710 = vpop.f32.mrf.mxu0
        %711 = vmatprep.mubr.f32.mxu0 0.0
        %712 = vmatmul.mubr.f32.gmra.mxu0 %v497
        %v713 = vpop.f32.mrf.mxu0
        %v714 = vadd.f32 %v452, %v713
        %v715 = vpop.f32.mrf.mxu0
        %716 = vmatprep.mubr.f32.mxu0 0.0
        %717 = vmatmul.mubr.f32.gmra.mxu0 %v500
        %v718 = vpop.f32.mrf.mxu0
        %v719 = vadd.f32 %v452, %v718
        %v720 = vpop.f32.mrf.mxu0
        %721 = vmatprep.mubr.f32.mxu0 0.0
        %722 = vmatmul.mubr.f32.gmra.mxu0 %v503
        %v723 = vpop.f32.mrf.mxu0
        %v724 = vadd.f32 %v452, %v723
        %v725 = vpop.f32.mrf.mxu0
        %726 = vmatprep.mubr.f32.mxu0 0.0
        %727 = vmatmul.mubr.f32.gmra.mxu0 %v506
        %v728 = vpop.f32.mrf.mxu0
        %v729 = vadd.f32 %v452, %v728
        %v730 = vpop.f32.mrf.mxu0
        %731 = vmatprep.mubr.f32.mxu0 0.0
        %732 = vmatmul.mubr.f32.gmra.mxu0 %v509
        %v733 = vpop.f32.mrf.mxu0
        %v734 = vadd.f32 %v452, %v733
        %v735 = vpop.f32.mrf.mxu0
        %736 = vmatprep.mubr.f32.mxu0 0.0
        %737 = vmatmul.mubr.f32.gmra.mxu0 %v512
        %v738 = vpop.f32.mrf.mxu0
        %v739 = vadd.f32 %v452, %v738
        %v740 = vpop.f32.mrf.mxu0
        %741 = vmatprep.mubr.f32.mxu0 0.0
        %742 = vmatmul.mubr.f32.gmra.mxu0 %v515
        %v743 = vpop.f32.mrf.mxu0
        %v744 = vadd.f32 %v452, %v743
        %v745 = vpop.f32.mrf.mxu0
        %746 = vmatprep.mubr.f32.mxu0 0.0
        %747 = vmatmul.mubr.f32.gmra.mxu0 %v518
        %v748 = vpop.f32.mrf.mxu0
        %v749 = vadd.f32 %v452, %v748
        %v750 = vpop.f32.mrf.mxu0
        %751 = vmatprep.mubr.f32.mxu0 0.0
        %752 = vmatmul.mubr.f32.gmra.mxu0 %v521
        %v753 = vpop.f32.mrf.mxu0
        %v754 = vadd.f32 %v452, %v753
        %v755 = vpop.f32.mrf.mxu0
        %756 = vmatprep.mubr.f32.mxu0 0.0
        %757 = vmatmul.mubr.f32.gmra.mxu0 %v524
        %v758 = vpop.f32.mrf.mxu0
        %v759 = vadd.f32 %v452, %v758
        %v760 = vpop.f32.mrf.mxu0
        %761 = vmatprep.mubr.f32.mxu0 0.0
        %762 = vmatmul.mubr.f32.gmra.mxu0 %v527
        %v763 = vpop.f32.mrf.mxu0
        %v764 = vadd.f32 %v452, %v763
        %v765 = vpop.f32.mrf.mxu0
        %766 = vmatprep.mubr.f32.mxu0 0.0
        %767 = vmatmul.mubr.f32.gmra.mxu0 %v530
        %v768 = vpop.f32.mrf.mxu0
        %v769 = vadd.f32 %v452, %v768
        %v770 = vpop.f32.mrf.mxu0
        %771 = vmatprep.mubr.f32.mxu0 0.0
        %772 = vmatmul.mubr.f32.gmra.mxu0 %v533
        %v773 = vpop.f32.mrf.mxu0
        %v774 = vadd.f32 %v452, %v773
        %v775 = vpop.f32.mrf.mxu0
        %776 = vmatprep.mubr.f32.mxu0 0.0
        %777 = vmatmul.mubr.f32.gmra.mxu0 %v536
        %v778 = vpop.f32.mrf.mxu0
        %v779 = vadd.f32 %v452, %v778
        %v780 = vpop.f32.mrf.mxu0
        %781 = vmatprep.mubr.f32.mxu0 0.0
        %782 = vmatmul.mubr.f32.gmra.mxu0 %v539
        %v783 = vpop.f32.mrf.mxu0
        %v784 = vadd.f32 %v452, %v783
        %v785 = vpop.f32.mrf.mxu0
        %786 = vmatprep.mubr.f32.mxu0 0.0
        %787 = vmatmul.mubr.f32.gmra.mxu0 %v542
        %v788 = vpop.f32.mrf.mxu0
        %v789 = vadd.f32 %v452, %v788
        %v790 = vpop.f32.mrf.mxu0
        %791 = vmatprep.mubr.f32.mxu0 0.0
        %792 = vmatmul.mubr.f32.gmra.mxu0 %v545
        %v793 = vpop.f32.mrf.mxu0
        %v794 = vadd.f32 %v452, %v793
        %v795 = vpop.f32.mrf.mxu0
        %796 = vmatprep.mubr.f32.mxu0 0.0
        %797 = vmatmul.mubr.f32.gmra.mxu0 %v548
        %v798 = vpop.f32.mrf.mxu0
        %v799 = vadd.f32 %v452, %v798
        %v800 = vpop.f32.mrf.mxu0
        %801 = vmatprep.mubr.f32.mxu0 0.0
        %802 = vmatmul.mubr.f32.gmra.mxu0 %v551
        %v803 = vpop.f32.mrf.mxu0
        %v804 = vadd.f32 %v452, %v803
        %v805 = vpop.f32.mrf.mxu0
        %806 = vmatprep.mubr.f32.mxu0 0.0
        %807 = vmatmul.mubr.f32.gmra.mxu0 %v554
        %v808 = vpop.f32.mrf.mxu0
        %v809 = vadd.f32 %v452, %v808
        %v810 = vpop.f32.mrf.mxu0
        %811 = vmatprep.mubr.f32.mxu0 0.0
        %812 = vmatmul.mubr.f32.gmra.mxu0 %v557
        %v813 = vpop.f32.mrf.mxu0
        %v814 = vadd.f32 %v452, %v813
        %v815 = vpop.f32.mrf.mxu0
        %816 = vmatprep.mubr.f32.mxu0 0.0
        %817 = vmatmul.mubr.f32.gmra.mxu0 %v560
        %v818 = vpop.f32.mrf.mxu0
        %v819 = vadd.f32 %v452, %v818
        %v820 = vpop.f32.mrf.mxu0
        %821 = vmatprep.mubr.f32.mxu0 0.0
        %822 = vmatmul.mubr.f32.gmra.mxu0 %v563
        %v823 = vpop.f32.mrf.mxu0
        %v824 = vadd.f32 %v452, %v823
        %v825 = vpop.f32.mrf.mxu0
        %826 = vmatprep.mubr.f32.mxu0 0.0
        %827 = vmatmul.mubr.f32.gmra.mxu0 %v566
        %v828 = vpop.f32.mrf.mxu0
        %v829 = vadd.f32 %v452, %v828
        %v830 = vpop.f32.mrf.mxu0
        %831 = vmatprep.mubr.f32.mxu0 0.0
        %832 = vmatmul.mubr.f32.gmra.mxu0 %v569
        %v833 = vpop.f32.mrf.mxu0
        %v834 = vadd.f32 %v452, %v833
        %v835 = vpop.f32.mrf.mxu0
        %836 = vmatprep.mubr.f32.mxu0 0.0
        %837 = vmatmul.mubr.f32.gmra.mxu0 %v572
        %v838 = vpop.f32.mrf.mxu0
        %v839 = vadd.f32 %v452, %v838
        %v840 = vpop.f32.mrf.mxu0
        %841 = vmatprep.mubr.f32.mxu0 0.0
        %842 = vmatmul.mubr.f32.gmra.mxu0 %v575
        %v843 = vpop.f32.mrf.mxu0
        %v844 = vadd.f32 %v452, %v843
        %v845 = vpop.f32.mrf.mxu0
        %846 = vdwg.mxu0
        %v847 = vmax.f32 %v644, 0.0
        %v848 = vmax.f32 %v649, 0.0
        %v849 = vmax.f32 %v654, 0.0
        %v850 = vmax.f32 %v659, 0.0
        %v851 = vmax.f32 %v664, 0.0
        %v852 = vmax.f32 %v669, 0.0
        %v853 = vmax.f32 %v674, 0.0
        %v854 = vmax.f32 %v679, 0.0
        %v855 = vmax.f32 %v684, 0.0
        %v856 = vmax.f32 %v689, 0.0
        %v857 = vmax.f32 %v694, 0.0
        %v858 = vmax.f32 %v699, 0.0
        %v859 = vmax.f32 %v704, 0.0
        %v860 = vmax.f32 %v709, 0.0
        %v861 = vmax.f32 %v714, 0.0
        %v862 = vmax.f32 %v719, 0.0
        %v863 = vmax.f32 %v724, 0.0
        %v864 = vmax.f32 %v729, 0.0
        %v865 = vmax.f32 %v734, 0.0
        %v866 = vmax.f32 %v739, 0.0
        %v867 = vmax.f32 %v744, 0.0
        %v868 = vmax.f32 %v749, 0.0
        %v869 = vmax.f32 %v754, 0.0
        %v870 = vmax.f32 %v759, 0.0
        %v871 = vmax.f32 %v764, 0.0
        %v872 = vmax.f32 %v769, 0.0
        %v873 = vmax.f32 %v774, 0.0
        %v874 = vmax.f32 %v779, 0.0
        %v875 = vmax.f32 %v784, 0.0
        %v876 = vmax.f32 %v789, 0.0
        %v877 = vmax.f32 %v794, 0.0
        %v878 = vmax.f32 %v799, 0.0
        %v879 = vmax.f32 %v804, 0.0
        %v880 = vmax.f32 %v809, 0.0
        %v881 = vmax.f32 %v814, 0.0
        %v882 = vmax.f32 %v819, 0.0
        %v883 = vmax.f32 %v824, 0.0
        %v884 = vmax.f32 %v829, 0.0
        %v885 = vmax.f32 %v834, 0.0
        %v886 = vmax.f32 %v839, 0.0
        %v887 = vmax.f32 %v844, 0.0
        %v888 = vld [vmem:[%s1] sm:$0xff]
        %v889 = vld [vmem:[%s1 + $0x8] sm:$0xff]
        %v890 = vld [vmem:[%s1 + $0x10] sm:$0xff]
        %v891 = vld [vmem:[%s1 + $0x18] sm:$0xff]
        %v892 = vld [vmem:[%s1 + $0x20] sm:$0xff]
        %v893 = vld [vmem:[%s1 + $0x28] sm:$0xff]
        %v894 = vld [vmem:[%s1 + $0x30] sm:$0xff]
        %v895 = vld [vmem:[%s1 + $0x38] sm:$0xff]
        %v896 = vld [vmem:[%s1 + $0x40] sm:$0xff]
        %v897 = vld [vmem:[%s1 + $0x48] sm:$0xff]
        %v898 = vld [vmem:[%s1 + $0x50] sm:$0xff]
        %v899 = vld [vmem:[%s1 + $0x58] sm:$0xff]
        %v900 = vld [vmem:[%s1 + $0x60] sm:$0xff]
        %v901 = vld [vmem:[%s1 + $0x68] sm:$0xff]
        %v902 = vld [vmem:[%s1 + $0x70] sm:$0xff]
        %v903 = vld [vmem:[%s1 + $0x78] sm:$0xff]
        %v904 = vld [vmem:[%s1 + $0x80] sm:$0xff]
        %v905 = vld [vmem:[%s1 + $0x88] sm:$0xff]
        %v906 = vld [vmem:[%s1 + $0x90] sm:$0xff]
        %v907 = vld [vmem:[%s1 + $0x98] sm:$0xff]
        %v908 = vld [vmem:[%s1 + $0xa0] sm:$0xff]
        %v909 = vld [vmem:[%s1 + $0xa8] sm:$0xff]
        %v910 = vld [vmem:[%s1 + $0xb0] sm:$0xff]
        %v911 = vld [vmem:[%s1 + $0xb8] sm:$0xff]
        %v912 = vld [vmem:[%s1 + $0xc0] sm:$0xff]
        %v913 = vld [vmem:[%s1 + $0xc8] sm:$0xff]
        %v914 = vld [vmem:[%s1 + $0xd0] sm:$0xff]
        %v915 = vld [vmem:[%s1 + $0xd8] sm:$0xff]
        %v916 = vld [vmem:[%s1 + $0xe0] sm:$0xff]
        %v917 = vld [vmem:[%s1 + $0xe8] sm:$0xff]
        %v918 = vld [vmem:[%s1 + $0xf0] sm:$0xff]
        %v919 = vld [vmem:[%s1 + $0xf8] sm:$0xff]
        %v920 = vld [vmem:[%s1 + $0x100] sm:$0xff]
        %v921 = vld [vmem:[%s1 + $0x108] sm:$0xff]
        %v922 = vld [vmem:[%s1 + $0x110] sm:$0xff]
        %v923 = vld [vmem:[%s1 + $0x118] sm:$0xff]
        %v924 = vld [vmem:[%s1 + $0x120] sm:$0xff]
        %v925 = vld [vmem:[%s1 + $0x128] sm:$0xff]
        %v926 = vld [vmem:[%s1 + $0x130] sm:$0xff]
        %v927 = vld [vmem:[%s1 + $0x138] sm:$0xff]
        %v928 = vld [vmem:[%s1 + $0x140] sm:$0xf]
        %vm929 = vcmp.gt.f32.partialorder %v888, 0.0
        %vm930 = vcmp.gt.f32.partialorder %v889, 0.0
        %vm931 = vcmp.gt.f32.partialorder %v890, 0.0
        %vm932 = vcmp.gt.f32.partialorder %v891, 0.0
        %vm933 = vcmp.gt.f32.partialorder %v892, 0.0
        %vm934 = vcmp.gt.f32.partialorder %v893, 0.0
        %vm935 = vcmp.gt.f32.partialorder %v894, 0.0
        %vm936 = vcmp.gt.f32.partialorder %v895, 0.0
        %vm937 = vcmp.gt.f32.partialorder %v896, 0.0
        %vm938 = vcmp.gt.f32.partialorder %v897, 0.0
        %vm939 = vcmp.gt.f32.partialorder %v898, 0.0
        %vm940 = vcmp.gt.f32.partialorder %v899, 0.0
        %vm941 = vcmp.gt.f32.partialorder %v900, 0.0
        %vm942 = vcmp.gt.f32.partialorder %v901, 0.0
        %vm943 = vcmp.gt.f32.partialorder %v902, 0.0
        %vm944 = vcmp.gt.f32.partialorder %v903, 0.0
        %vm945 = vcmp.gt.f32.partialorder %v904, 0.0
        %vm946 = vcmp.gt.f32.partialorder %v905, 0.0
        %vm947 = vcmp.gt.f32.partialorder %v906, 0.0
        %vm948 = vcmp.gt.f32.partialorder %v907, 0.0
        %vm949 = vcmp.gt.f32.partialorder %v908, 0.0
        %vm950 = vcmp.gt.f32.partialorder %v909, 0.0
        %vm951 = vcmp.gt.f32.partialorder %v910, 0.0
        %vm952 = vcmp.gt.f32.partialorder %v911, 0.0
        %vm953 = vcmp.gt.f32.partialorder %v912, 0.0
        %vm954 = vcmp.gt.f32.partialorder %v913, 0.0
        %vm955 = vcmp.gt.f32.partialorder %v914, 0.0
        %vm956 = vcmp.gt.f32.partialorder %v915, 0.0
        %vm957 = vcmp.gt.f32.partialorder %v916, 0.0
        %vm958 = vcmp.gt.f32.partialorder %v917, 0.0
        %vm959 = vcmp.gt.f32.partialorder %v918, 0.0
        %vm960 = vcmp.gt.f32.partialorder %v919, 0.0
        %vm961 = vcmp.gt.f32.partialorder %v920, 0.0
        %vm962 = vcmp.gt.f32.partialorder %v921, 0.0
        %vm963 = vcmp.gt.f32.partialorder %v922, 0.0
        %vm964 = vcmp.gt.f32.partialorder %v923, 0.0
        %vm965 = vcmp.gt.f32.partialorder %v924, 0.0
        %vm966 = vcmp.gt.f32.partialorder %v925, 0.0
        %vm967 = vcmp.gt.f32.partialorder %v926, 0.0
        %vm968 = vcmp.gt.f32.partialorder %v927, 0.0
        %vm969 = vcmp.gt.f32.partialorder %v928, 0.0
        %v970 = vsel %vm929, 1, 0
        %v971 = vsel %vm930, 1, 0
        %v972 = vsel %vm931, 1, 0
        %v973 = vsel %vm932, 1, 0
        %v974 = vsel %vm933, 1, 0
        %v975 = vsel %vm934, 1, 0
        %v976 = vsel %vm935, 1, 0
        %v977 = vsel %vm936, 1, 0
        %v978 = vsel %vm937, 1, 0
        %v979 = vsel %vm938, 1, 0
        %v980 = vsel %vm939, 1, 0
        %v981 = vsel %vm940, 1, 0
        %v982 = vsel %vm941, 1, 0
        %v983 = vsel %vm942, 1, 0
        %v984 = vsel %vm943, 1, 0
        %v985 = vsel %vm944, 1, 0
        %v986 = vsel %vm945, 1, 0
        %v987 = vsel %vm946, 1, 0
        %v988 = vsel %vm947, 1, 0
        %v989 = vsel %vm948, 1, 0
        %v990 = vsel %vm949, 1, 0
        %v991 = vsel %vm950, 1, 0
        %v992 = vsel %vm951, 1, 0
        %v993 = vsel %vm952, 1, 0
        %v994 = vsel %vm953, 1, 0
        %v995 = vsel %vm954, 1, 0
        %v996 = vsel %vm955, 1, 0
        %v997 = vsel %vm956, 1, 0
        %v998 = vsel %vm957, 1, 0
        %v999 = vsel %vm958, 1, 0
        %v1000 = vsel %vm959, 1, 0
        %v1001 = vsel %vm960, 1, 0
        %v1002 = vsel %vm961, 1, 0
        %v1003 = vsel %vm962, 1, 0
        %v1004 = vsel %vm963, 1, 0
        %v1005 = vsel %vm964, 1, 0
        %v1006 = vsel %vm965, 1, 0
        %v1007 = vsel %vm966, 1, 0
        %v1008 = vsel %vm967, 1, 0
        %v1009 = vsel %vm968, 1, 0
        %v1010 = vsel %vm969, 1, 0
        %1011 = vset.pattern.permute.xlu0 0
        %1012 = vperm.xlu0 %1011, %v970
        %v1013 = vpop.permute.xlu0 %1012
        %1014 = vset.pattern.permute.xlu0 0
        %1015 = vperm.xlu0 %1014, %v971
        %v1016 = vpop.permute.xlu0 %1015
        %1017 = vset.pattern.permute.xlu0 0
        %1018 = vperm.xlu0 %1017, %v972
        %v1019 = vpop.permute.xlu0 %1018
        %1020 = vset.pattern.permute.xlu0 0
        %1021 = vperm.xlu0 %1020, %v973
        %v1022 = vpop.permute.xlu0 %1021
        %1023 = vset.pattern.permute.xlu0 0
        %1024 = vperm.xlu0 %1023, %v974
        %v1025 = vpop.permute.xlu0 %1024
        %1026 = vset.pattern.permute.xlu0 0
        %1027 = vperm.xlu0 %1026, %v975
        %v1028 = vpop.permute.xlu0 %1027
        %1029 = vset.pattern.permute.xlu0 0
        %1030 = vperm.xlu0 %1029, %v976
        %v1031 = vpop.permute.xlu0 %1030
        %1032 = vset.pattern.permute.xlu0 0
        %1033 = vperm.xlu0 %1032, %v977
        %v1034 = vpop.permute.xlu0 %1033
        %1035 = vset.pattern.permute.xlu0 0
        %1036 = vperm.xlu0 %1035, %v978
        %v1037 = vpop.permute.xlu0 %1036
        %1038 = vset.pattern.permute.xlu0 0
        %1039 = vperm.xlu0 %1038, %v979
        %v1040 = vpop.permute.xlu0 %1039
        %1041 = vset.pattern.permute.xlu0 0
        %1042 = vperm.xlu0 %1041, %v980
        %v1043 = vpop.permute.xlu0 %1042
        %1044 = vset.pattern.permute.xlu0 0
        %1045 = vperm.xlu0 %1044, %v981
        %v1046 = vpop.permute.xlu0 %1045
        %1047 = vset.pattern.permute.xlu0 0
        %1048 = vperm.xlu0 %1047, %v982
        %v1049 = vpop.permute.xlu0 %1048
        %1050 = vset.pattern.permute.xlu0 0
        %1051 = vperm.xlu0 %1050, %v983
        %v1052 = vpop.permute.xlu0 %1051
        %1053 = vset.pattern.permute.xlu0 0
        %1054 = vperm.xlu0 %1053, %v984
        %v1055 = vpop.permute.xlu0 %1054
        %1056 = vset.pattern.permute.xlu0 0
        %1057 = vperm.xlu0 %1056, %v985
        %v1058 = vpop.permute.xlu0 %1057
        %1059 = vset.pattern.permute.xlu0 0
        %1060 = vperm.xlu0 %1059, %v986
        %v1061 = vpop.permute.xlu0 %1060
        %1062 = vset.pattern.permute.xlu0 0
        %1063 = vperm.xlu0 %1062, %v987
        %v1064 = vpop.permute.xlu0 %1063
        %1065 = vset.pattern.permute.xlu0 0
        %1066 = vperm.xlu0 %1065, %v988
        %v1067 = vpop.permute.xlu0 %1066
        %1068 = vset.pattern.permute.xlu0 0
        %1069 = vperm.xlu0 %1068, %v989
        %v1070 = vpop.permute.xlu0 %1069
        %1071 = vset.pattern.permute.xlu0 0
        %1072 = vperm.xlu0 %1071, %v990
        %v1073 = vpop.permute.xlu0 %1072
        %1074 = vset.pattern.permute.xlu0 0
        %1075 = vperm.xlu0 %1074, %v991
        %v1076 = vpop.permute.xlu0 %1075
        %1077 = vset.pattern.permute.xlu0 0
        %1078 = vperm.xlu0 %1077, %v992
        %v1079 = vpop.permute.xlu0 %1078
        %1080 = vset.pattern.permute.xlu0 0
        %1081 = vperm.xlu0 %1080, %v993
        %v1082 = vpop.permute.xlu0 %1081
        %1083 = vset.pattern.permute.xlu0 0
        %1084 = vperm.xlu0 %1083, %v994
        %v1085 = vpop.permute.xlu0 %1084
        %1086 = vset.pattern.permute.xlu0 0
        %1087 = vperm.xlu0 %1086, %v995
        %v1088 = vpop.permute.xlu0 %1087
        %1089 = vset.pattern.permute.xlu0 0
        %1090 = vperm.xlu0 %1089, %v996
        %v1091 = vpop.permute.xlu0 %1090
        %1092 = vset.pattern.permute.xlu0 0
        %1093 = vperm.xlu0 %1092, %v997
        %v1094 = vpop.permute.xlu0 %1093
        %1095 = vset.pattern.permute.xlu0 0
        %1096 = vperm.xlu0 %1095, %v998
        %v1097 = vpop.permute.xlu0 %1096
        %1098 = vset.pattern.permute.xlu0 0
        %1099 = vperm.xlu0 %1098, %v999
        %v1100 = vpop.permute.xlu0 %1099
        %1101 = vset.pattern.permute.xlu0 0
        %1102 = vperm.xlu0 %1101, %v1000
        %v1103 = vpop.permute.xlu0 %1102
        %1104 = vset.pattern.permute.xlu0 0
        %1105 = vperm.xlu0 %1104, %v1001
        %v1106 = vpop.permute.xlu0 %1105
        %1107 = vset.pattern.permute.xlu0 0
        %1108 = vperm.xlu0 %1107, %v1002
        %v1109 = vpop.permute.xlu0 %1108
        %1110 = vset.pattern.permute.xlu0 0
        %1111 = vperm.xlu0 %1110, %v1003
        %v1112 = vpop.permute.xlu0 %1111
        %1113 = vset.pattern.permute.xlu0 0
        %1114 = vperm.xlu0 %1113, %v1004
        %v1115 = vpop.permute.xlu0 %1114
        %1116 = vset.pattern.permute.xlu0 0
        %1117 = vperm.xlu0 %1116, %v1005
        %v1118 = vpop.permute.xlu0 %1117
        %1119 = vset.pattern.permute.xlu0 0
        %1120 = vperm.xlu0 %1119, %v1006
        %v1121 = vpop.permute.xlu0 %1120
        %1122 = vset.pattern.permute.xlu0 0
        %1123 = vperm.xlu0 %1122, %v1007
        %v1124 = vpop.permute.xlu0 %1123
        %1125 = vset.pattern.permute.xlu0 0
        %1126 = vperm.xlu0 %1125, %v1008
        %v1127 = vpop.permute.xlu0 %1126
        %1128 = vset.pattern.permute.xlu0 0
        %1129 = vperm.xlu0 %1128, %v1009
        %v1130 = vpop.permute.xlu0 %1129
        %1131 = vset.pattern.permute.xlu0 0
        %1132 = vperm.xlu0 %1131, %v1010
        %v1133 = vpop.permute.xlu0 %1132
        %vm1134 = vcmp.eq.s32.totalorder %v1013, 1
        %vm1135 = vcmp.eq.s32.totalorder %v1016, 1
        %vm1136 = vcmp.eq.s32.totalorder %v1019, 1
        %vm1137 = vcmp.eq.s32.totalorder %v1022, 1
        %vm1138 = vcmp.eq.s32.totalorder %v1025, 1
        %vm1139 = vcmp.eq.s32.totalorder %v1028, 1
        %vm1140 = vcmp.eq.s32.totalorder %v1031, 1
        %vm1141 = vcmp.eq.s32.totalorder %v1034, 1
        %vm1142 = vcmp.eq.s32.totalorder %v1037, 1
        %vm1143 = vcmp.eq.s32.totalorder %v1040, 1
        %vm1144 = vcmp.eq.s32.totalorder %v1043, 1
        %vm1145 = vcmp.eq.s32.totalorder %v1046, 1
        %vm1146 = vcmp.eq.s32.totalorder %v1049, 1
        %vm1147 = vcmp.eq.s32.totalorder %v1052, 1
        %vm1148 = vcmp.eq.s32.totalorder %v1055, 1
        %vm1149 = vcmp.eq.s32.totalorder %v1058, 1
        %vm1150 = vcmp.eq.s32.totalorder %v1061, 1
        %vm1151 = vcmp.eq.s32.totalorder %v1064, 1
        %vm1152 = vcmp.eq.s32.totalorder %v1067, 1
        %vm1153 = vcmp.eq.s32.totalorder %v1070, 1
        %vm1154 = vcmp.eq.s32.totalorder %v1073, 1
        %vm1155 = vcmp.eq.s32.totalorder %v1076, 1
        %vm1156 = vcmp.eq.s32.totalorder %v1079, 1
        %vm1157 = vcmp.eq.s32.totalorder %v1082, 1
        %vm1158 = vcmp.eq.s32.totalorder %v1085, 1
        %vm1159 = vcmp.eq.s32.totalorder %v1088, 1
        %vm1160 = vcmp.eq.s32.totalorder %v1091, 1
        %vm1161 = vcmp.eq.s32.totalorder %v1094, 1
        %vm1162 = vcmp.eq.s32.totalorder %v1097, 1
        %vm1163 = vcmp.eq.s32.totalorder %v1100, 1
        %vm1164 = vcmp.eq.s32.totalorder %v1103, 1
        %vm1165 = vcmp.eq.s32.totalorder %v1106, 1
        %vm1166 = vcmp.eq.s32.totalorder %v1109, 1
        %vm1167 = vcmp.eq.s32.totalorder %v1112, 1
        %vm1168 = vcmp.eq.s32.totalorder %v1115, 1
        %vm1169 = vcmp.eq.s32.totalorder %v1118, 1
        %vm1170 = vcmp.eq.s32.totalorder %v1121, 1
        %vm1171 = vcmp.eq.s32.totalorder %v1124, 1
        %vm1172 = vcmp.eq.s32.totalorder %v1127, 1
        %vm1173 = vcmp.eq.s32.totalorder %v1130, 1
        %vm1174 = vcmp.eq.s32.totalorder %v1133, 1
        %v1175 = vsel %vm1134, %v847, 0.0
        %v1176 = vsel %vm1135, %v848, 0.0
        %v1177 = vsel %vm1136, %v849, 0.0
        %v1178 = vsel %vm1137, %v850, 0.0
        %v1179 = vsel %vm1138, %v851, 0.0
        %v1180 = vsel %vm1139, %v852, 0.0
        %v1181 = vsel %vm1140, %v853, 0.0
        %v1182 = vsel %vm1141, %v854, 0.0
        %v1183 = vsel %vm1142, %v855, 0.0
        %v1184 = vsel %vm1143, %v856, 0.0
        %v1185 = vsel %vm1144, %v857, 0.0
        %v1186 = vsel %vm1145, %v858, 0.0
        %v1187 = vsel %vm1146, %v859, 0.0
        %v1188 = vsel %vm1147, %v860, 0.0
        %v1189 = vsel %vm1148, %v861, 0.0
        %v1190 = vsel %vm1149, %v862, 0.0
        %v1191 = vsel %vm1150, %v863, 0.0
        %v1192 = vsel %vm1151, %v864, 0.0
        %v1193 = vsel %vm1152, %v865, 0.0
        %v1194 = vsel %vm1153, %v866, 0.0
        %v1195 = vsel %vm1154, %v867, 0.0
        %v1196 = vsel %vm1155, %v868, 0.0
        %v1197 = vsel %vm1156, %v869, 0.0
        %v1198 = vsel %vm1157, %v870, 0.0
        %v1199 = vsel %vm1158, %v871, 0.0
        %v1200 = vsel %vm1159, %v872, 0.0
        %v1201 = vsel %vm1160, %v873, 0.0
        %v1202 = vsel %vm1161, %v874, 0.0
        %v1203 = vsel %vm1162, %v875, 0.0
        %v1204 = vsel %vm1163, %v876, 0.0
        %v1205 = vsel %vm1164, %v877, 0.0
        %v1206 = vsel %vm1165, %v878, 0.0
        %v1207 = vsel %vm1166, %v879, 0.0
        %v1208 = vsel %vm1167, %v880, 0.0
        %v1209 = vsel %vm1168, %v881, 0.0
        %v1210 = vsel %vm1169, %v882, 0.0
        %v1211 = vsel %vm1170, %v883, 0.0
        %v1212 = vsel %vm1171, %v884, 0.0
        %v1213 = vsel %vm1172, %v885, 0.0
        %v1214 = vsel %vm1173, %v886, 0.0
        %v1215 = vsel %vm1174, %v887, 0.0
        %vm1216 = vcmask 31744
        %1217 = vst.msk [vmem:[#allocation3] sm:$0xff] %vm1216, %v1175
        %1218 = vst.msk [vmem:[#allocation3 + $0x8] sm:$0xff] %vm1216, %v1176
        %1219 = vst.msk [vmem:[#allocation3 + $0x10] sm:$0xff] %vm1216, %v1177
        %1220 = vst.msk [vmem:[#allocation3 + $0x18] sm:$0xff] %vm1216, %v1178
        %1221 = vst.msk [vmem:[#allocation3 + $0x20] sm:$0xff] %vm1216, %v1179
        %1222 = vst.msk [vmem:[#allocation3 + $0x28] sm:$0xff] %vm1216, %v1180
        %1223 = vst.msk [vmem:[#allocation3 + $0x30] sm:$0xff] %vm1216, %v1181
        %1224 = vst.msk [vmem:[#allocation3 + $0x38] sm:$0xff] %vm1216, %v1182
        %1225 = vst.msk [vmem:[#allocation3 + $0x40] sm:$0xff] %vm1216, %v1183
        %1226 = vst.msk [vmem:[#allocation3 + $0x48] sm:$0xff] %vm1216, %v1184
        %1227 = vst.msk [vmem:[#allocation3 + $0x50] sm:$0xff] %vm1216, %v1185
        %1228 = vst.msk [vmem:[#allocation3 + $0x58] sm:$0xff] %vm1216, %v1186
        %1229 = vst.msk [vmem:[#allocation3 + $0x60] sm:$0xff] %vm1216, %v1187
        %1230 = vst.msk [vmem:[#allocation3 + $0x68] sm:$0xff] %vm1216, %v1188
        %1231 = vst.msk [vmem:[#allocation3 + $0x70] sm:$0xff] %vm1216, %v1189
        %1232 = vst.msk [vmem:[#allocation3 + $0x78] sm:$0xff] %vm1216, %v1190
        %1233 = vst.msk [vmem:[#allocation3 + $0x80] sm:$0xff] %vm1216, %v1191
        %1234 = vst.msk [vmem:[#allocation3 + $0x88] sm:$0xff] %vm1216, %v1192
        %1235 = vst.msk [vmem:[#allocation3 + $0x90] sm:$0xff] %vm1216, %v1193
        %1236 = vst.msk [vmem:[#allocation3 + $0x98] sm:$0xff] %vm1216, %v1194
        %1237 = vst.msk [vmem:[#allocation3 + $0xa0] sm:$0xff] %vm1216, %v1195
        %1238 = vst.msk [vmem:[#allocation3 + $0xa8] sm:$0xff] %vm1216, %v1196
        %1239 = vst.msk [vmem:[#allocation3 + $0xb0] sm:$0xff] %vm1216, %v1197
        %1240 = vst.msk [vmem:[#allocation3 + $0xb8] sm:$0xff] %vm1216, %v1198
        %1241 = vst.msk [vmem:[#allocation3 + $0xc0] sm:$0xff] %vm1216, %v1199
        %1242 = vst.msk [vmem:[#allocation3 + $0xc8] sm:$0xff] %vm1216, %v1200
        %1243 = vst.msk [vmem:[#allocation3 + $0xd0] sm:$0xff] %vm1216, %v1201
        %1244 = vst.msk [vmem:[#allocation3 + $0xd8] sm:$0xff] %vm1216, %v1202
        %1245 = vst.msk [vmem:[#allocation3 + $0xe0] sm:$0xff] %vm1216, %v1203
        %1246 = vst.msk [vmem:[#allocation3 + $0xe8] sm:$0xff] %vm1216, %v1204
        %1247 = vst.msk [vmem:[#allocation3 + $0xf0] sm:$0xff] %vm1216, %v1205
        %1248 = vst.msk [vmem:[#allocation3 + $0xf8] sm:$0xff] %vm1216, %v1206
        %1249 = vst.msk [vmem:[#allocation3 + $0x100] sm:$0xff] %vm1216, %v1207
        %1250 = vst.msk [vmem:[#allocation3 + $0x108] sm:$0xff] %vm1216, %v1208
        %1251 = vst.msk [vmem:[#allocation3 + $0x110] sm:$0xff] %vm1216, %v1209
        %1252 = vst.msk [vmem:[#allocation3 + $0x118] sm:$0xff] %vm1216, %v1210
        %1253 = vst.msk [vmem:[#allocation3 + $0x120] sm:$0xff] %vm1216, %v1211
        %1254 = vst.msk [vmem:[#allocation3 + $0x128] sm:$0xff] %vm1216, %v1212
        %1255 = vst.msk [vmem:[#allocation3 + $0x130] sm:$0xff] %vm1216, %v1213
        %1256 = vst.msk [vmem:[#allocation3 + $0x138] sm:$0xff] %vm1216, %v1214
        %vm1257 = vcmask 27648
        %1258 = vst.msk [vmem:[#allocation3 + $0x140] sm:$0xf] %vm1257, %v1215
        %v1259 = vld [vmem:[#allocation3] sm:$0xff]
        %v1260 = vld [vmem:[#allocation3 + $0x8] sm:$0xff]
        %v1261 = vld [vmem:[#allocation3 + $0x10] sm:$0xff]
        %v1262 = vld [vmem:[#allocation3 + $0x18] sm:$0xff]
        %v1263 = vld [vmem:[#allocation3 + $0x20] sm:$0xff]
        %v1264 = vld [vmem:[#allocation3 + $0x28] sm:$0xff]
        %v1265 = vld [vmem:[#allocation3 + $0x30] sm:$0xff]
        %v1266 = vld [vmem:[#allocation3 + $0x38] sm:$0xff]
        %v1267 = vld [vmem:[#allocation3 + $0x40] sm:$0xff]
        %v1268 = vld [vmem:[#allocation3 + $0x48] sm:$0xff]
        %v1269 = vld [vmem:[#allocation3 + $0x50] sm:$0xff]
        %v1270 = vld [vmem:[#allocation3 + $0x58] sm:$0xff]
        %v1271 = vld [vmem:[#allocation3 + $0x60] sm:$0xff]
        %v1272 = vld [vmem:[#allocation3 + $0x68] sm:$0xff]
        %v1273 = vld [vmem:[#allocation3 + $0x70] sm:$0xff]
        %v1274 = vld [vmem:[#allocation3 + $0x78] sm:$0xff]
        %v1275 = vld [vmem:[#allocation3 + $0x80] sm:$0xff]
        %v1276 = vld [vmem:[#allocation3 + $0x88] sm:$0xff]
        %v1277 = vld [vmem:[#allocation3 + $0x90] sm:$0xff]
        %v1278 = vld [vmem:[#allocation3 + $0x98] sm:$0xff]
        %v1279 = vld [vmem:[#allocation3 + $0xa0] sm:$0xff]
        %v1280 = vld [vmem:[#allocation3 + $0xa8] sm:$0xff]
        %v1281 = vld [vmem:[#allocation3 + $0xb0] sm:$0xff]
        %v1282 = vld [vmem:[#allocation3 + $0xb8] sm:$0xff]
        %v1283 = vld [vmem:[#allocation3 + $0xc0] sm:$0xff]
        %v1284 = vld [vmem:[#allocation3 + $0xc8] sm:$0xff]
        %v1285 = vld [vmem:[#allocation3 + $0xd0] sm:$0xff]
        %v1286 = vld [vmem:[#allocation3 + $0xd8] sm:$0xff]
        %v1287 = vld [vmem:[#allocation3 + $0xe0] sm:$0xff]
        %v1288 = vld [vmem:[#allocation3 + $0xe8] sm:$0xff]
        %v1289 = vld [vmem:[#allocation3 + $0xf0] sm:$0xff]
        %v1290 = vld [vmem:[#allocation3 + $0xf8] sm:$0xff]
        %v1291 = vld [vmem:[#allocation3 + $0x100] sm:$0xff]
        %v1292 = vld [vmem:[#allocation3 + $0x108] sm:$0xff]
        %v1293 = vld [vmem:[#allocation3 + $0x110] sm:$0xff]
        %v1294 = vld [vmem:[#allocation3 + $0x118] sm:$0x3f]
        %v1295 = vld [vmem:[%s4] sm:$0xf]
        %v1296 = vld [vmem:[#allocation3 + $0x1] sm:$0xff]
        %v1297 = vld [vmem:[#allocation3 + $0x9] sm:$0xff]
        %v1298 = vld [vmem:[#allocation3 + $0x11] sm:$0xff]
        %v1299 = vld [vmem:[#allocation3 + $0x19] sm:$0xff]
        %v1300 = vld [vmem:[#allocation3 + $0x21] sm:$0xff]
        %v1301 = vld [vmem:[#allocation3 + $0x29] sm:$0xff]
        %v1302 = vld [vmem:[#allocation3 + $0x31] sm:$0xff]
        %v1303 = vld [vmem:[#allocation3 + $0x39] sm:$0xff]
        %v1304 = vld [vmem:[#allocation3 + $0x41] sm:$0xff]
        %v1305 = vld [vmem:[#allocation3 + $0x49] sm:$0xff]
        %v1306 = vld [vmem:[#allocation3 + $0x51] sm:$0xff]
        %v1307 = vld [vmem:[#allocation3 + $0x59] sm:$0xff]
        %v1308 = vld [vmem:[#allocation3 + $0x61] sm:$0xff]
        %v1309 = vld [vmem:[#allocation3 + $0x69] sm:$0xff]
        %v1310 = vld [vmem:[#allocation3 + $0x71] sm:$0xff]
        %v1311 = vld [vmem:[#allocation3 + $0x79] sm:$0xff]
        %v1312 = vld [vmem:[#allocation3 + $0x81] sm:$0xff]
        %v1313 = vld [vmem:[#allocation3 + $0x89] sm:$0xff]
        %v1314 = vld [vmem:[#allocation3 + $0x91] sm:$0xff]
        %v1315 = vld [vmem:[#allocation3 + $0x99] sm:$0xff]
        %v1316 = vld [vmem:[#allocation3 + $0xa1] sm:$0xff]
        %v1317 = vld [vmem:[#allocation3 + $0xa9] sm:$0xff]
        %v1318 = vld [vmem:[#allocation3 + $0xb1] sm:$0xff]
        %v1319 = vld [vmem:[#allocation3 + $0xb9] sm:$0xff]
        %v1320 = vld [vmem:[#allocation3 + $0xc1] sm:$0xff]
        %v1321 = vld [vmem:[#allocation3 + $0xc9] sm:$0xff]
        %v1322 = vld [vmem:[#allocation3 + $0xd1] sm:$0xff]
        %v1323 = vld [vmem:[#allocation3 + $0xd9] sm:$0xff]
        %v1324 = vld [vmem:[#allocation3 + $0xe1] sm:$0xff]
        %v1325 = vld [vmem:[#allocation3 + $0xe9] sm:$0xff]
        %v1326 = vld [vmem:[#allocation3 + $0xf1] sm:$0xff]
        %v1327 = vld [vmem:[#allocation3 + $0xf9] sm:$0xff]
        %v1328 = vld [vmem:[#allocation3 + $0x101] sm:$0xff]
        %v1329 = vld [vmem:[#allocation3 + $0x109] sm:$0xff]
        %v1330 = vld [vmem:[#allocation3 + $0x111] sm:$0xff]
        %v1331 = vld [vmem:[#allocation3 + $0x119] sm:$0x3f]
        %s1332 = scalar_lea.vmem %s4, 4
        %v1333 = vld [vmem:[%s1332] sm:$0xf]
        %v1335 = vsel %vm1216, %v1296, 0
        %v1338 = vsel %vm1216, %v1297, 0
        %v1341 = vsel %vm1216, %v1298, 0
        %v1344 = vsel %vm1216, %v1299, 0
        %v1347 = vsel %vm1216, %v1300, 0
        %v1350 = vsel %vm1216, %v1301, 0
        %v1353 = vsel %vm1216, %v1302, 0
        %v1356 = vsel %vm1216, %v1303, 0
        %v1359 = vsel %vm1216, %v1304, 0
        %v1362 = vsel %vm1216, %v1305, 0
        %v1365 = vsel %vm1216, %v1306, 0
        %v1368 = vsel %vm1216, %v1307, 0
        %v1371 = vsel %vm1216, %v1308, 0
        %v1374 = vsel %vm1216, %v1309, 0
        %v1377 = vsel %vm1216, %v1310, 0
        %v1380 = vsel %vm1216, %v1311, 0
        %v1383 = vsel %vm1216, %v1312, 0
        %v1386 = vsel %vm1216, %v1313, 0
        %v1389 = vsel %vm1216, %v1314, 0
        %v1392 = vsel %vm1216, %v1315, 0
        %v1395 = vsel %vm1216, %v1316, 0
        %v1398 = vsel %vm1216, %v1317, 0
        %v1401 = vsel %vm1216, %v1318, 0
        %v1404 = vsel %vm1216, %v1319, 0
        %v1407 = vsel %vm1216, %v1320, 0
        %v1410 = vsel %vm1216, %v1321, 0
        %v1413 = vsel %vm1216, %v1322, 0
        %v1416 = vsel %vm1216, %v1323, 0
        %v1419 = vsel %vm1216, %v1324, 0
        %v1422 = vsel %vm1216, %v1325, 0
        %v1425 = vsel %vm1216, %v1326, 0
        %v1428 = vsel %vm1216, %v1327, 0
        %v1431 = vsel %vm1216, %v1328, 0
        %v1434 = vsel %vm1216, %v1329, 0
        %v1437 = vsel %vm1216, %v1330, 0
        %v1440 = vsel %vm1216, %v1331, 0
        %vm1442 = vcmask 1043456
        %v1444 = vsel %vm1442, %v1333, 0
        %1446 = vmatprep.subr.mxu0 0.0
        %1447 = vmatpush1.msra.mxu0 0.0
        %1448 = vmatprep.subr.mxu0 0.0
        %1449 = vmatpush1.msra.mxu0 0.0
        %1450 = vmatprep.subr.mxu0 0.0
        %1451 = vmatpush1.msra.mxu0 0.0
        %1452 = vmatprep.subr.mxu0 0.0
        %1453 = vmatpush1.msra.mxu0 0.0
        %1454 = vmatprep.subr.mxu0 0.0
        %1455 = vmatpush1.msra.mxu0 0.0
        %1456 = vmatprep.subr.mxu0 0.0
        %1457 = vmatpush1.msra.mxu0 0.0
        %1458 = vmatprep.subr.mxu0 0.0
        %1459 = vmatpush1.msra.mxu0 0.0
        %1460 = vmatprep.subr.mxu0 0.0
        %1461 = vmatpush1.msra.mxu0 0.0
        %1462 = vmatprep.subr.mxu0 0.0
        %1463 = vmatpush1.msra.mxu0 0.0
        %1464 = vmatprep.subr.mxu0 0.0
        %1465 = vmatpush1.msra.mxu0 0.0
        %1466 = vmatprep.subr.mxu0 0.0
        %1467 = vmatpush1.msra.mxu0 0.0
        %1468 = vmatprep.subr.mxu0 0.0
        %1469 = vmatpush1.msra.mxu0 0.0
        %1470 = vmatprep.subr.mxu0 0.0
        %1471 = vmatpush1.msra.mxu0 0.0
        %1472 = vmatprep.subr.mxu0 0.0
        %1473 = vmatpush1.msra.mxu0 0.0
        %1474 = vmatprep.subr.mxu0 0.0
        %1475 = vmatpush1.msra.mxu0 0.0
        %1476 = vmatprep.subr.mxu0 0.0
        %1477 = vmatpush1.msra.mxu0 %v1444
        %1478 = vmatprep.subr.mxu0 0.0
        %1479 = vmatpush2.msra.mxu0 0.0
        %1480 = vmatprep.subr.mxu0 0.0
        %1481 = vmatpush2.msra.mxu0 0.0
        %1482 = vmatprep.subr.mxu0 0.0
        %1483 = vmatpush2.msra.mxu0 0.0
        %1484 = vmatprep.subr.mxu0 0.0
        %1485 = vmatpush2.msra.mxu0 0.0
        %1486 = vmatprep.subr.mxu0 0.0
        %1487 = vmatpush2.msra.mxu0 0.0
        %1488 = vmatprep.subr.mxu0 0.0
        %1489 = vmatpush2.msra.mxu0 0.0
        %1490 = vmatprep.subr.mxu0 0.0
        %1491 = vmatpush2.msra.mxu0 0.0
        %1492 = vmatprep.subr.mxu0 0.0
        %1493 = vmatpush2.msra.mxu0 0.0
        %1494 = vmatprep.subr.mxu0 0.0
        %1495 = vmatpush2.msra.mxu0 0.0
        %1496 = vmatprep.subr.mxu0 0.0
        %1497 = vmatpush2.msra.mxu0 0.0
        %1498 = vmatprep.subr.mxu0 0.0
        %1499 = vmatpush2.msra.mxu0 0.0
        %1500 = vmatprep.subr.mxu0 0.0
        %1501 = vmatpush2.msra.mxu0 0.0
        %1502 = vmatprep.subr.mxu0 0.0
        %1503 = vmatpush2.msra.mxu0 0.0
        %1504 = vmatprep.subr.mxu0 0.0
        %1505 = vmatpush2.msra.mxu0 0.0
        %1506 = vmatprep.subr.mxu0 0.0
        %1507 = vmatpush2.msra.mxu0 0.0
        %1508 = vmatprep.subr.mxu0 0.0
        %1509 = vmatpush2.msra.mxu0 0.0
        %1510 = vmatprep.mubr.f32.mxu0 0.0
        %1511 = vmatmul.mubr.f32.gmra.mxu0 %v1335
        %v1512 = vpop.f32.mrf.mxu0
        %v1513 = vadd.f32 0.0, %v1512
        %v1514 = vpop.f32.mrf.mxu0
        %1515 = vmatprep.mubr.f32.mxu0 0.0
        %1516 = vmatmul.mubr.f32.gmra.mxu0 %v1338
        %v1517 = vpop.f32.mrf.mxu0
        %v1518 = vadd.f32 0.0, %v1517
        %v1519 = vpop.f32.mrf.mxu0
        %1520 = vmatprep.mubr.f32.mxu0 0.0
        %1521 = vmatmul.mubr.f32.gmra.mxu0 %v1341
        %v1522 = vpop.f32.mrf.mxu0
        %v1523 = vadd.f32 0.0, %v1522
        %v1524 = vpop.f32.mrf.mxu0
        %1525 = vmatprep.mubr.f32.mxu0 0.0
        %1526 = vmatmul.mubr.f32.gmra.mxu0 %v1344
        %v1527 = vpop.f32.mrf.mxu0
        %v1528 = vadd.f32 0.0, %v1527
        %v1529 = vpop.f32.mrf.mxu0
        %1530 = vmatprep.mubr.f32.mxu0 0.0
        %1531 = vmatmul.mubr.f32.gmra.mxu0 %v1347
        %v1532 = vpop.f32.mrf.mxu0
        %v1533 = vadd.f32 0.0, %v1532
        %v1534 = vpop.f32.mrf.mxu0
        %1535 = vmatprep.mubr.f32.mxu0 0.0
        %1536 = vmatmul.mubr.f32.gmra.mxu0 %v1350
        %v1537 = vpop.f32.mrf.mxu0
        %v1538 = vadd.f32 0.0, %v1537
        %v1539 = vpop.f32.mrf.mxu0
        %1540 = vmatprep.mubr.f32.mxu0 0.0
        %1541 = vmatmul.mubr.f32.gmra.mxu0 %v1353
        %v1542 = vpop.f32.mrf.mxu0
        %v1543 = vadd.f32 0.0, %v1542
        %v1544 = vpop.f32.mrf.mxu0
        %1545 = vmatprep.mubr.f32.mxu0 0.0
        %1546 = vmatmul.mubr.f32.gmra.mxu0 %v1356
        %v1547 = vpop.f32.mrf.mxu0
        %v1548 = vadd.f32 0.0, %v1547
        %v1549 = vpop.f32.mrf.mxu0
        %1550 = vmatprep.mubr.f32.mxu0 0.0
        %1551 = vmatmul.mubr.f32.gmra.mxu0 %v1359
        %v1552 = vpop.f32.mrf.mxu0
        %v1553 = vadd.f32 0.0, %v1552
        %v1554 = vpop.f32.mrf.mxu0
        %1555 = vmatprep.mubr.f32.mxu0 0.0
        %1556 = vmatmul.mubr.f32.gmra.mxu0 %v1362
        %v1557 = vpop.f32.mrf.mxu0
        %v1558 = vadd.f32 0.0, %v1557
        %v1559 = vpop.f32.mrf.mxu0
        %1560 = vmatprep.mubr.f32.mxu0 0.0
        %1561 = vmatmul.mubr.f32.gmra.mxu0 %v1365
        %v1562 = vpop.f32.mrf.mxu0
        %v1563 = vadd.f32 0.0, %v1562
        %v1564 = vpop.f32.mrf.mxu0
        %1565 = vmatprep.mubr.f32.mxu0 0.0
        %1566 = vmatmul.mubr.f32.gmra.mxu0 %v1368
        %v1567 = vpop.f32.mrf.mxu0
        %v1568 = vadd.f32 0.0, %v1567
        %v1569 = vpop.f32.mrf.mxu0
        %1570 = vmatprep.mubr.f32.mxu0 0.0
        %1571 = vmatmul.mubr.f32.gmra.mxu0 %v1371
        %v1572 = vpop.f32.mrf.mxu0
        %v1573 = vadd.f32 0.0, %v1572
        %v1574 = vpop.f32.mrf.mxu0
        %1575 = vmatprep.mubr.f32.mxu0 0.0
        %1576 = vmatmul.mubr.f32.gmra.mxu0 %v1374
        %v1577 = vpop.f32.mrf.mxu0
        %v1578 = vadd.f32 0.0, %v1577
        %v1579 = vpop.f32.mrf.mxu0
        %1580 = vmatprep.mubr.f32.mxu0 0.0
        %1581 = vmatmul.mubr.f32.gmra.mxu0 %v1377
        %v1582 = vpop.f32.mrf.mxu0
        %v1583 = vadd.f32 0.0, %v1582
        %v1584 = vpop.f32.mrf.mxu0
        %1585 = vmatprep.mubr.f32.mxu0 0.0
        %1586 = vmatmul.mubr.f32.gmra.mxu0 %v1380
        %v1587 = vpop.f32.mrf.mxu0
        %v1588 = vadd.f32 0.0, %v1587
        %v1589 = vpop.f32.mrf.mxu0
        %1590 = vmatprep.mubr.f32.mxu0 0.0
        %1591 = vmatmul.mubr.f32.gmra.mxu0 %v1383
        %v1592 = vpop.f32.mrf.mxu0
        %v1593 = vadd.f32 0.0, %v1592
        %v1594 = vpop.f32.mrf.mxu0
        %1595 = vmatprep.mubr.f32.mxu0 0.0
        %1596 = vmatmul.mubr.f32.gmra.mxu0 %v1386
        %v1597 = vpop.f32.mrf.mxu0
        %v1598 = vadd.f32 0.0, %v1597
        %v1599 = vpop.f32.mrf.mxu0
        %1600 = vmatprep.mubr.f32.mxu0 0.0
        %1601 = vmatmul.mubr.f32.gmra.mxu0 %v1389
        %v1602 = vpop.f32.mrf.mxu0
        %v1603 = vadd.f32 0.0, %v1602
        %v1604 = vpop.f32.mrf.mxu0
        %1605 = vmatprep.mubr.f32.mxu0 0.0
        %1606 = vmatmul.mubr.f32.gmra.mxu0 %v1392
        %v1607 = vpop.f32.mrf.mxu0
        %v1608 = vadd.f32 0.0, %v1607
        %v1609 = vpop.f32.mrf.mxu0
        %1610 = vmatprep.mubr.f32.mxu0 0.0
        %1611 = vmatmul.mubr.f32.gmra.mxu0 %v1395
        %v1612 = vpop.f32.mrf.mxu0
        %v1613 = vadd.f32 0.0, %v1612
        %v1614 = vpop.f32.mrf.mxu0
        %1615 = vmatprep.mubr.f32.mxu0 0.0
        %1616 = vmatmul.mubr.f32.gmra.mxu0 %v1398
        %v1617 = vpop.f32.mrf.mxu0
        %v1618 = vadd.f32 0.0, %v1617
        %v1619 = vpop.f32.mrf.mxu0
        %1620 = vmatprep.mubr.f32.mxu0 0.0
        %1621 = vmatmul.mubr.f32.gmra.mxu0 %v1401
        %v1622 = vpop.f32.mrf.mxu0
        %v1623 = vadd.f32 0.0, %v1622
        %v1624 = vpop.f32.mrf.mxu0
        %1625 = vmatprep.mubr.f32.mxu0 0.0
        %1626 = vmatmul.mubr.f32.gmra.mxu0 %v1404
        %v1627 = vpop.f32.mrf.mxu0
        %v1628 = vadd.f32 0.0, %v1627
        %v1629 = vpop.f32.mrf.mxu0
        %1630 = vmatprep.mubr.f32.mxu0 0.0
        %1631 = vmatmul.mubr.f32.gmra.mxu0 %v1407
        %v1632 = vpop.f32.mrf.mxu0
        %v1633 = vadd.f32 0.0, %v1632
        %v1634 = vpop.f32.mrf.mxu0
        %1635 = vmatprep.mubr.f32.mxu0 0.0
        %1636 = vmatmul.mubr.f32.gmra.mxu0 %v1410
        %v1637 = vpop.f32.mrf.mxu0
        %v1638 = vadd.f32 0.0, %v1637
        %v1639 = vpop.f32.mrf.mxu0
        %1640 = vmatprep.mubr.f32.mxu0 0.0
        %1641 = vmatmul.mubr.f32.gmra.mxu0 %v1413
        %v1642 = vpop.f32.mrf.mxu0
        %v1643 = vadd.f32 0.0, %v1642
        %v1644 = vpop.f32.mrf.mxu0
        %1645 = vmatprep.mubr.f32.mxu0 0.0
        %1646 = vmatmul.mubr.f32.gmra.mxu0 %v1416
        %v1647 = vpop.f32.mrf.mxu0
        %v1648 = vadd.f32 0.0, %v1647
        %v1649 = vpop.f32.mrf.mxu0
        %1650 = vmatprep.mubr.f32.mxu0 0.0
        %1651 = vmatmul.mubr.f32.gmra.mxu0 %v1419
        %v1652 = vpop.f32.mrf.mxu0
        %v1653 = vadd.f32 0.0, %v1652
        %v1654 = vpop.f32.mrf.mxu0
        %1655 = vmatprep.mubr.f32.mxu0 0.0
        %1656 = vmatmul.mubr.f32.gmra.mxu0 %v1422
        %v1657 = vpop.f32.mrf.mxu0
        %v1658 = vadd.f32 0.0, %v1657
        %v1659 = vpop.f32.mrf.mxu0
        %1660 = vmatprep.mubr.f32.mxu0 0.0
        %1661 = vmatmul.mubr.f32.gmra.mxu0 %v1425
        %v1662 = vpop.f32.mrf.mxu0
        %v1663 = vadd.f32 0.0, %v1662
        %v1664 = vpop.f32.mrf.mxu0
        %1665 = vmatprep.mubr.f32.mxu0 0.0
        %1666 = vmatmul.mubr.f32.gmra.mxu0 %v1428
        %v1667 = vpop.f32.mrf.mxu0
        %v1668 = vadd.f32 0.0, %v1667
        %v1669 = vpop.f32.mrf.mxu0
        %1670 = vmatprep.mubr.f32.mxu0 0.0
        %1671 = vmatmul.mubr.f32.gmra.mxu0 %v1431
        %v1672 = vpop.f32.mrf.mxu0
        %v1673 = vadd.f32 0.0, %v1672
        %v1674 = vpop.f32.mrf.mxu0
        %1675 = vmatprep.mubr.f32.mxu0 0.0
        %1676 = vmatmul.mubr.f32.gmra.mxu0 %v1434
        %v1677 = vpop.f32.mrf.mxu0
        %v1678 = vadd.f32 0.0, %v1677
        %v1679 = vpop.f32.mrf.mxu0
        %1680 = vmatprep.mubr.f32.mxu0 0.0
        %1681 = vmatmul.mubr.f32.gmra.mxu0 %v1437
        %v1682 = vpop.f32.mrf.mxu0
        %v1683 = vadd.f32 0.0, %v1682
        %v1684 = vpop.f32.mrf.mxu0
        %1685 = vmatprep.mubr.f32.mxu0 0.0
        %1686 = vmatmul.mubr.f32.gmra.mxu0 %v1440
        %v1687 = vpop.f32.mrf.mxu0
        %v1688 = vadd.f32 0.0, %v1687
        %v1689 = vpop.f32.mrf.mxu0
        %1690 = vdwg.mxu0
        %v1692 = vsel %vm1216, %v1259, 0
        %v1695 = vsel %vm1216, %v1260, 0
        %v1698 = vsel %vm1216, %v1261, 0
        %v1701 = vsel %vm1216, %v1262, 0
        %v1704 = vsel %vm1216, %v1263, 0
        %v1707 = vsel %vm1216, %v1264, 0
        %v1710 = vsel %vm1216, %v1265, 0
        %v1713 = vsel %vm1216, %v1266, 0
        %v1716 = vsel %vm1216, %v1267, 0
        %v1719 = vsel %vm1216, %v1268, 0
        %v1722 = vsel %vm1216, %v1269, 0
        %v1725 = vsel %vm1216, %v1270, 0
        %v1728 = vsel %vm1216, %v1271, 0
        %v1731 = vsel %vm1216, %v1272, 0
        %v1734 = vsel %vm1216, %v1273, 0
        %v1737 = vsel %vm1216, %v1274, 0
        %v1740 = vsel %vm1216, %v1275, 0
        %v1743 = vsel %vm1216, %v1276, 0
        %v1746 = vsel %vm1216, %v1277, 0
        %v1749 = vsel %vm1216, %v1278, 0
        %v1752 = vsel %vm1216, %v1279, 0
        %v1755 = vsel %vm1216, %v1280, 0
        %v1758 = vsel %vm1216, %v1281, 0
        %v1761 = vsel %vm1216, %v1282, 0
        %v1764 = vsel %vm1216, %v1283, 0
        %v1767 = vsel %vm1216, %v1284, 0
        %v1770 = vsel %vm1216, %v1285, 0
        %v1773 = vsel %vm1216, %v1286, 0
        %v1776 = vsel %vm1216, %v1287, 0
        %v1779 = vsel %vm1216, %v1288, 0
        %v1782 = vsel %vm1216, %v1289, 0
        %v1785 = vsel %vm1216, %v1290, 0
        %v1788 = vsel %vm1216, %v1291, 0
        %v1791 = vsel %vm1216, %v1292, 0
        %v1794 = vsel %vm1216, %v1293, 0
        %v1797 = vsel %vm1216, %v1294, 0
        %v1800 = vsel %vm1442, %v1295, 0
        %1802 = vmatprep.subr.mxu0 0.0
        %1803 = vmatpush1.msra.mxu0 0.0
        %1804 = vmatprep.subr.mxu0 0.0
        %1805 = vmatpush1.msra.mxu0 0.0
        %1806 = vmatprep.subr.mxu0 0.0
        %1807 = vmatpush1.msra.mxu0 0.0
        %1808 = vmatprep.subr.mxu0 0.0
        %1809 = vmatpush1.msra.mxu0 0.0
        %1810 = vmatprep.subr.mxu0 0.0
        %1811 = vmatpush1.msra.mxu0 0.0
        %1812 = vmatprep.subr.mxu0 0.0
        %1813 = vmatpush1.msra.mxu0 0.0
        %1814 = vmatprep.subr.mxu0 0.0
        %1815 = vmatpush1.msra.mxu0 0.0
        %1816 = vmatprep.subr.mxu0 0.0
        %1817 = vmatpush1.msra.mxu0 0.0
        %1818 = vmatprep.subr.mxu0 0.0
        %1819 = vmatpush1.msra.mxu0 0.0
        %1820 = vmatprep.subr.mxu0 0.0
        %1821 = vmatpush1.msra.mxu0 0.0
        %1822 = vmatprep.subr.mxu0 0.0
        %1823 = vmatpush1.msra.mxu0 0.0
        %1824 = vmatprep.subr.mxu0 0.0
        %1825 = vmatpush1.msra.mxu0 0.0
        %1826 = vmatprep.subr.mxu0 0.0
        %1827 = vmatpush1.msra.mxu0 0.0
        %1828 = vmatprep.subr.mxu0 0.0
        %1829 = vmatpush1.msra.mxu0 0.0
        %1830 = vmatprep.subr.mxu0 0.0
        %1831 = vmatpush1.msra.mxu0 0.0
        %1832 = vmatprep.subr.mxu0 0.0
        %1833 = vmatpush1.msra.mxu0 %v1800
        %1834 = vmatprep.subr.mxu0 0.0
        %1835 = vmatpush2.msra.mxu0 0.0
        %1836 = vmatprep.subr.mxu0 0.0
        %1837 = vmatpush2.msra.mxu0 0.0
        %1838 = vmatprep.subr.mxu0 0.0
        %1839 = vmatpush2.msra.mxu0 0.0
        %1840 = vmatprep.subr.mxu0 0.0
        %1841 = vmatpush2.msra.mxu0 0.0
        %1842 = vmatprep.subr.mxu0 0.0
        %1843 = vmatpush2.msra.mxu0 0.0
        %1844 = vmatprep.subr.mxu0 0.0
        %1845 = vmatpush2.msra.mxu0 0.0
        %1846 = vmatprep.subr.mxu0 0.0
        %1847 = vmatpush2.msra.mxu0 0.0
        %1848 = vmatprep.subr.mxu0 0.0
        %1849 = vmatpush2.msra.mxu0 0.0
        %1850 = vmatprep.subr.mxu0 0.0
        %1851 = vmatpush2.msra.mxu0 0.0
        %1852 = vmatprep.subr.mxu0 0.0
        %1853 = vmatpush2.msra.mxu0 0.0
        %1854 = vmatprep.subr.mxu0 0.0
        %1855 = vmatpush2.msra.mxu0 0.0
        %1856 = vmatprep.subr.mxu0 0.0
        %1857 = vmatpush2.msra.mxu0 0.0
        %1858 = vmatprep.subr.mxu0 0.0
        %1859 = vmatpush2.msra.mxu0 0.0
        %1860 = vmatprep.subr.mxu0 0.0
        %1861 = vmatpush2.msra.mxu0 0.0
        %1862 = vmatprep.subr.mxu0 0.0
        %1863 = vmatpush2.msra.mxu0 0.0
        %1864 = vmatprep.subr.mxu0 0.0
        %1865 = vmatpush2.msra.mxu0 0.0
        %1866 = vmatprep.mubr.f32.mxu0 0.0
        %1867 = vmatmul.mubr.f32.gmra.mxu0 %v1692
        %v1868 = vpop.f32.mrf.mxu0
        %v1869 = vadd.f32 %v1513, %v1868
        %v1870 = vpop.f32.mrf.mxu0
        %1871 = vmatprep.mubr.f32.mxu0 0.0
        %1872 = vmatmul.mubr.f32.gmra.mxu0 %v1695
        %v1873 = vpop.f32.mrf.mxu0
        %v1874 = vadd.f32 %v1518, %v1873
        %v1875 = vpop.f32.mrf.mxu0
        %1876 = vmatprep.mubr.f32.mxu0 0.0
        %1877 = vmatmul.mubr.f32.gmra.mxu0 %v1698
        %v1878 = vpop.f32.mrf.mxu0
        %v1879 = vadd.f32 %v1523, %v1878
        %v1880 = vpop.f32.mrf.mxu0
        %1881 = vmatprep.mubr.f32.mxu0 0.0
        %1882 = vmatmul.mubr.f32.gmra.mxu0 %v1701
        %v1883 = vpop.f32.mrf.mxu0
        %v1884 = vadd.f32 %v1528, %v1883
        %v1885 = vpop.f32.mrf.mxu0
        %1886 = vmatprep.mubr.f32.mxu0 0.0
        %1887 = vmatmul.mubr.f32.gmra.mxu0 %v1704
        %v1888 = vpop.f32.mrf.mxu0
        %v1889 = vadd.f32 %v1533, %v1888
        %v1890 = vpop.f32.mrf.mxu0
        %1891 = vmatprep.mubr.f32.mxu0 0.0
        %1892 = vmatmul.mubr.f32.gmra.mxu0 %v1707
        %v1893 = vpop.f32.mrf.mxu0
        %v1894 = vadd.f32 %v1538, %v1893
        %v1895 = vpop.f32.mrf.mxu0
        %1896 = vmatprep.mubr.f32.mxu0 0.0
        %1897 = vmatmul.mubr.f32.gmra.mxu0 %v1710
        %v1898 = vpop.f32.mrf.mxu0
        %v1899 = vadd.f32 %v1543, %v1898
        %v1900 = vpop.f32.mrf.mxu0
        %1901 = vmatprep.mubr.f32.mxu0 0.0
        %1902 = vmatmul.mubr.f32.gmra.mxu0 %v1713
        %v1903 = vpop.f32.mrf.mxu0
        %v1904 = vadd.f32 %v1548, %v1903
        %v1905 = vpop.f32.mrf.mxu0
        %1906 = vmatprep.mubr.f32.mxu0 0.0
        %1907 = vmatmul.mubr.f32.gmra.mxu0 %v1716
        %v1908 = vpop.f32.mrf.mxu0
        %v1909 = vadd.f32 %v1553, %v1908
        %v1910 = vpop.f32.mrf.mxu0
        %1911 = vmatprep.mubr.f32.mxu0 0.0
        %1912 = vmatmul.mubr.f32.gmra.mxu0 %v1719
        %v1913 = vpop.f32.mrf.mxu0
        %v1914 = vadd.f32 %v1558, %v1913
        %v1915 = vpop.f32.mrf.mxu0
        %1916 = vmatprep.mubr.f32.mxu0 0.0
        %1917 = vmatmul.mubr.f32.gmra.mxu0 %v1722
        %v1918 = vpop.f32.mrf.mxu0
        %v1919 = vadd.f32 %v1563, %v1918
        %v1920 = vpop.f32.mrf.mxu0
        %1921 = vmatprep.mubr.f32.mxu0 0.0
        %1922 = vmatmul.mubr.f32.gmra.mxu0 %v1725
        %v1923 = vpop.f32.mrf.mxu0
        %v1924 = vadd.f32 %v1568, %v1923
        %v1925 = vpop.f32.mrf.mxu0
        %1926 = vmatprep.mubr.f32.mxu0 0.0
        %1927 = vmatmul.mubr.f32.gmra.mxu0 %v1728
        %v1928 = vpop.f32.mrf.mxu0
        %v1929 = vadd.f32 %v1573, %v1928
        %v1930 = vpop.f32.mrf.mxu0
        %1931 = vmatprep.mubr.f32.mxu0 0.0
        %1932 = vmatmul.mubr.f32.gmra.mxu0 %v1731
        %v1933 = vpop.f32.mrf.mxu0
        %v1934 = vadd.f32 %v1578, %v1933
        %v1935 = vpop.f32.mrf.mxu0
        %1936 = vmatprep.mubr.f32.mxu0 0.0
        %1937 = vmatmul.mubr.f32.gmra.mxu0 %v1734
        %v1938 = vpop.f32.mrf.mxu0
        %v1939 = vadd.f32 %v1583, %v1938
        %v1940 = vpop.f32.mrf.mxu0
        %1941 = vmatprep.mubr.f32.mxu0 0.0
        %1942 = vmatmul.mubr.f32.gmra.mxu0 %v1737
        %v1943 = vpop.f32.mrf.mxu0
        %v1944 = vadd.f32 %v1588, %v1943
        %v1945 = vpop.f32.mrf.mxu0
        %1946 = vmatprep.mubr.f32.mxu0 0.0
        %1947 = vmatmul.mubr.f32.gmra.mxu0 %v1740
        %v1948 = vpop.f32.mrf.mxu0
        %v1949 = vadd.f32 %v1593, %v1948
        %v1950 = vpop.f32.mrf.mxu0
        %1951 = vmatprep.mubr.f32.mxu0 0.0
        %1952 = vmatmul.mubr.f32.gmra.mxu0 %v1743
        %v1953 = vpop.f32.mrf.mxu0
        %v1954 = vadd.f32 %v1598, %v1953
        %v1955 = vpop.f32.mrf.mxu0
        %1956 = vmatprep.mubr.f32.mxu0 0.0
        %1957 = vmatmul.mubr.f32.gmra.mxu0 %v1746
        %v1958 = vpop.f32.mrf.mxu0
        %v1959 = vadd.f32 %v1603, %v1958
        %v1960 = vpop.f32.mrf.mxu0
        %1961 = vmatprep.mubr.f32.mxu0 0.0
        %1962 = vmatmul.mubr.f32.gmra.mxu0 %v1749
        %v1963 = vpop.f32.mrf.mxu0
        %v1964 = vadd.f32 %v1608, %v1963
        %v1965 = vpop.f32.mrf.mxu0
        %1966 = vmatprep.mubr.f32.mxu0 0.0
        %1967 = vmatmul.mubr.f32.gmra.mxu0 %v1752
        %v1968 = vpop.f32.mrf.mxu0
        %v1969 = vadd.f32 %v1613, %v1968
        %v1970 = vpop.f32.mrf.mxu0
        %1971 = vmatprep.mubr.f32.mxu0 0.0
        %1972 = vmatmul.mubr.f32.gmra.mxu0 %v1755
        %v1973 = vpop.f32.mrf.mxu0
        %v1974 = vadd.f32 %v1618, %v1973
        %v1975 = vpop.f32.mrf.mxu0
        %1976 = vmatprep.mubr.f32.mxu0 0.0
        %1977 = vmatmul.mubr.f32.gmra.mxu0 %v1758
        %v1978 = vpop.f32.mrf.mxu0
        %v1979 = vadd.f32 %v1623, %v1978
        %v1980 = vpop.f32.mrf.mxu0
        %1981 = vmatprep.mubr.f32.mxu0 0.0
        %1982 = vmatmul.mubr.f32.gmra.mxu0 %v1761
        %v1983 = vpop.f32.mrf.mxu0
        %v1984 = vadd.f32 %v1628, %v1983
        %v1985 = vpop.f32.mrf.mxu0
        %1986 = vmatprep.mubr.f32.mxu0 0.0
        %1987 = vmatmul.mubr.f32.gmra.mxu0 %v1764
        %v1988 = vpop.f32.mrf.mxu0
        %v1989 = vadd.f32 %v1633, %v1988
        %v1990 = vpop.f32.mrf.mxu0
        %1991 = vmatprep.mubr.f32.mxu0 0.0
        %1992 = vmatmul.mubr.f32.gmra.mxu0 %v1767
        %v1993 = vpop.f32.mrf.mxu0
        %v1994 = vadd.f32 %v1638, %v1993
        %v1995 = vpop.f32.mrf.mxu0
        %1996 = vmatprep.mubr.f32.mxu0 0.0
        %1997 = vmatmul.mubr.f32.gmra.mxu0 %v1770
        %v1998 = vpop.f32.mrf.mxu0
        %v1999 = vadd.f32 %v1643, %v1998
        %v2000 = vpop.f32.mrf.mxu0
        %2001 = vmatprep.mubr.f32.mxu0 0.0
        %2002 = vmatmul.mubr.f32.gmra.mxu0 %v1773
        %v2003 = vpop.f32.mrf.mxu0
        %v2004 = vadd.f32 %v1648, %v2003
        %v2005 = vpop.f32.mrf.mxu0
        %2006 = vmatprep.mubr.f32.mxu0 0.0
        %2007 = vmatmul.mubr.f32.gmra.mxu0 %v1776
        %v2008 = vpop.f32.mrf.mxu0
        %v2009 = vadd.f32 %v1653, %v2008
        %v2010 = vpop.f32.mrf.mxu0
        %2011 = vmatprep.mubr.f32.mxu0 0.0
        %2012 = vmatmul.mubr.f32.gmra.mxu0 %v1779
        %v2013 = vpop.f32.mrf.mxu0
        %v2014 = vadd.f32 %v1658, %v2013
        %v2015 = vpop.f32.mrf.mxu0
        %2016 = vmatprep.mubr.f32.mxu0 0.0
        %2017 = vmatmul.mubr.f32.gmra.mxu0 %v1782
        %v2018 = vpop.f32.mrf.mxu0
        %v2019 = vadd.f32 %v1663, %v2018
        %v2020 = vpop.f32.mrf.mxu0
        %2021 = vmatprep.mubr.f32.mxu0 0.0
        %2022 = vmatmul.mubr.f32.gmra.mxu0 %v1785
        %v2023 = vpop.f32.mrf.mxu0
        %v2024 = vadd.f32 %v1668, %v2023
        %v2025 = vpop.f32.mrf.mxu0
        %2026 = vmatprep.mubr.f32.mxu0 0.0
        %2027 = vmatmul.mubr.f32.gmra.mxu0 %v1788
        %v2028 = vpop.f32.mrf.mxu0
        %v2029 = vadd.f32 %v1673, %v2028
        %v2030 = vpop.f32.mrf.mxu0
        %2031 = vmatprep.mubr.f32.mxu0 0.0
        %2032 = vmatmul.mubr.f32.gmra.mxu0 %v1791
        %v2033 = vpop.f32.mrf.mxu0
        %v2034 = vadd.f32 %v1678, %v2033
        %v2035 = vpop.f32.mrf.mxu0
        %2036 = vmatprep.mubr.f32.mxu0 0.0
        %2037 = vmatmul.mubr.f32.gmra.mxu0 %v1794
        %v2038 = vpop.f32.mrf.mxu0
        %v2039 = vadd.f32 %v1683, %v2038
        %v2040 = vpop.f32.mrf.mxu0
        %2041 = vmatprep.mubr.f32.mxu0 0.0
        %2042 = vmatmul.mubr.f32.gmra.mxu0 %v1797
        %v2043 = vpop.f32.mrf.mxu0
        %v2044 = vadd.f32 %v1688, %v2043
        %v2045 = vpop.f32.mrf.mxu0
        %2046 = vdwg.mxu0
        %v2047 = vld [vmem:[#allocation3 + $0x2] sm:$0xff]
        %v2048 = vld [vmem:[#allocation3 + $0xa] sm:$0xff]
        %v2049 = vld [vmem:[#allocation3 + $0x12] sm:$0xff]
        %v2050 = vld [vmem:[#allocation3 + $0x1a] sm:$0xff]
        %v2051 = vld [vmem:[#allocation3 + $0x22] sm:$0xff]
        %v2052 = vld [vmem:[#allocation3 + $0x2a] sm:$0xff]
        %v2053 = vld [vmem:[#allocation3 + $0x32] sm:$0xff]
        %v2054 = vld [vmem:[#allocation3 + $0x3a] sm:$0xff]
        %v2055 = vld [vmem:[#allocation3 + $0x42] sm:$0xff]
        %v2056 = vld [vmem:[#allocation3 + $0x4a] sm:$0xff]
        %v2057 = vld [vmem:[#allocation3 + $0x52] sm:$0xff]
        %v2058 = vld [vmem:[#allocation3 + $0x5a] sm:$0xff]
        %v2059 = vld [vmem:[#allocation3 + $0x62] sm:$0xff]
        %v2060 = vld [vmem:[#allocation3 + $0x6a] sm:$0xff]
        %v2061 = vld [vmem:[#allocation3 + $0x72] sm:$0xff]
        %v2062 = vld [vmem:[#allocation3 + $0x7a] sm:$0xff]
        %v2063 = vld [vmem:[#allocation3 + $0x82] sm:$0xff]
        %v2064 = vld [vmem:[#allocation3 + $0x8a] sm:$0xff]
        %v2065 = vld [vmem:[#allocation3 + $0x92] sm:$0xff]
        %v2066 = vld [vmem:[#allocation3 + $0x9a] sm:$0xff]
        %v2067 = vld [vmem:[#allocation3 + $0xa2] sm:$0xff]
        %v2068 = vld [vmem:[#allocation3 + $0xaa] sm:$0xff]
        %v2069 = vld [vmem:[#allocation3 + $0xb2] sm:$0xff]
        %v2070 = vld [vmem:[#allocation3 + $0xba] sm:$0xff]
        %v2071 = vld [vmem:[#allocation3 + $0xc2] sm:$0xff]
        %v2072 = vld [vmem:[#allocation3 + $0xca] sm:$0xff]
        %v2073 = vld [vmem:[#allocation3 + $0xd2] sm:$0xff]
        %v2074 = vld [vmem:[#allocation3 + $0xda] sm:$0xff]
        %v2075 = vld [vmem:[#allocation3 + $0xe2] sm:$0xff]
        %v2076 = vld [vmem:[#allocation3 + $0xea] sm:$0xff]
        %v2077 = vld [vmem:[#allocation3 + $0xf2] sm:$0xff]
        %v2078 = vld [vmem:[#allocation3 + $0xfa] sm:$0xff]
        %v2079 = vld [vmem:[#allocation3 + $0x102] sm:$0xff]
        %v2080 = vld [vmem:[#allocation3 + $0x10a] sm:$0xff]
        %v2081 = vld [vmem:[#allocation3 + $0x112] sm:$0xff]
        %v2082 = vld [vmem:[#allocation3 + $0x11a] sm:$0x3f]
        %s2083 = scalar_lea.vmem %s4, 8
        %v2084 = vld [vmem:[%s2083] sm:$0xf]
        %v2086 = vsel %vm1216, %v2047, 0
        %v2089 = vsel %vm1216, %v2048, 0
        %v2092 = vsel %vm1216, %v2049, 0
        %v2095 = vsel %vm1216, %v2050, 0
        %v2098 = vsel %vm1216, %v2051, 0
        %v2101 = vsel %vm1216, %v2052, 0
        %v2104 = vsel %vm1216, %v2053, 0
        %v2107 = vsel %vm1216, %v2054, 0
        %v2110 = vsel %vm1216, %v2055, 0
        %v2113 = vsel %vm1216, %v2056, 0
        %v2116 = vsel %vm1216, %v2057, 0
        %v2119 = vsel %vm1216, %v2058, 0
        %v2122 = vsel %vm1216, %v2059, 0
        %v2125 = vsel %vm1216, %v2060, 0
        %v2128 = vsel %vm1216, %v2061, 0
        %v2131 = vsel %vm1216, %v2062, 0
        %v2134 = vsel %vm1216, %v2063, 0
        %v2137 = vsel %vm1216, %v2064, 0
        %v2140 = vsel %vm1216, %v2065, 0
        %v2143 = vsel %vm1216, %v2066, 0
        %v2146 = vsel %vm1216, %v2067, 0
        %v2149 = vsel %vm1216, %v2068, 0
        %v2152 = vsel %vm1216, %v2069, 0
        %v2155 = vsel %vm1216, %v2070, 0
        %v2158 = vsel %vm1216, %v2071, 0
        %v2161 = vsel %vm1216, %v2072, 0
        %v2164 = vsel %vm1216, %v2073, 0
        %v2167 = vsel %vm1216, %v2074, 0
        %v2170 = vsel %vm1216, %v2075, 0
        %v2173 = vsel %vm1216, %v2076, 0
        %v2176 = vsel %vm1216, %v2077, 0
        %v2179 = vsel %vm1216, %v2078, 0
        %v2182 = vsel %vm1216, %v2079, 0
        %v2185 = vsel %vm1216, %v2080, 0
        %v2188 = vsel %vm1216, %v2081, 0
        %v2191 = vsel %vm1216, %v2082, 0
        %v2194 = vsel %vm1442, %v2084, 0
        %2196 = vmatprep.subr.mxu0 0.0
        %2197 = vmatpush1.msra.mxu0 0.0
        %2198 = vmatprep.subr.mxu0 0.0
        %2199 = vmatpush1.msra.mxu0 0.0
        %2200 = vmatprep.subr.mxu0 0.0
        %2201 = vmatpush1.msra.mxu0 0.0
        %2202 = vmatprep.subr.mxu0 0.0
        %2203 = vmatpush1.msra.mxu0 0.0
        %2204 = vmatprep.subr.mxu0 0.0
        %2205 = vmatpush1.msra.mxu0 0.0
        %2206 = vmatprep.subr.mxu0 0.0
        %2207 = vmatpush1.msra.mxu0 0.0
        %2208 = vmatprep.subr.mxu0 0.0
        %2209 = vmatpush1.msra.mxu0 0.0
        %2210 = vmatprep.subr.mxu0 0.0
        %2211 = vmatpush1.msra.mxu0 0.0
        %2212 = vmatprep.subr.mxu0 0.0
        %2213 = vmatpush1.msra.mxu0 0.0
        %2214 = vmatprep.subr.mxu0 0.0
        %2215 = vmatpush1.msra.mxu0 0.0
        %2216 = vmatprep.subr.mxu0 0.0
        %2217 = vmatpush1.msra.mxu0 0.0
        %2218 = vmatprep.subr.mxu0 0.0
        %2219 = vmatpush1.msra.mxu0 0.0
        %2220 = vmatprep.subr.mxu0 0.0
        %2221 = vmatpush1.msra.mxu0 0.0
        %2222 = vmatprep.subr.mxu0 0.0
        %2223 = vmatpush1.msra.mxu0 0.0
        %2224 = vmatprep.subr.mxu0 0.0
        %2225 = vmatpush1.msra.mxu0 0.0
        %2226 = vmatprep.subr.mxu0 0.0
        %2227 = vmatpush1.msra.mxu0 %v2194
        %2228 = vmatprep.subr.mxu0 0.0
        %2229 = vmatpush2.msra.mxu0 0.0
        %2230 = vmatprep.subr.mxu0 0.0
        %2231 = vmatpush2.msra.mxu0 0.0
        %2232 = vmatprep.subr.mxu0 0.0
        %2233 = vmatpush2.msra.mxu0 0.0
        %2234 = vmatprep.subr.mxu0 0.0
        %2235 = vmatpush2.msra.mxu0 0.0
        %2236 = vmatprep.subr.mxu0 0.0
        %2237 = vmatpush2.msra.mxu0 0.0
        %2238 = vmatprep.subr.mxu0 0.0
        %2239 = vmatpush2.msra.mxu0 0.0
        %2240 = vmatprep.subr.mxu0 0.0
        %2241 = vmatpush2.msra.mxu0 0.0
        %2242 = vmatprep.subr.mxu0 0.0
        %2243 = vmatpush2.msra.mxu0 0.0
        %2244 = vmatprep.subr.mxu0 0.0
        %2245 = vmatpush2.msra.mxu0 0.0
        %2246 = vmatprep.subr.mxu0 0.0
        %2247 = vmatpush2.msra.mxu0 0.0
        %2248 = vmatprep.subr.mxu0 0.0
        %2249 = vmatpush2.msra.mxu0 0.0
        %2250 = vmatprep.subr.mxu0 0.0
        %2251 = vmatpush2.msra.mxu0 0.0
        %2252 = vmatprep.subr.mxu0 0.0
        %2253 = vmatpush2.msra.mxu0 0.0
        %2254 = vmatprep.subr.mxu0 0.0
        %2255 = vmatpush2.msra.mxu0 0.0
        %2256 = vmatprep.subr.mxu0 0.0
        %2257 = vmatpush2.msra.mxu0 0.0
        %2258 = vmatprep.subr.mxu0 0.0
        %2259 = vmatpush2.msra.mxu0 0.0
        %2260 = vmatprep.mubr.f32.mxu0 0.0
        %2261 = vmatmul.mubr.f32.gmra.mxu0 %v2086
        %v2262 = vpop.f32.mrf.mxu0
        %v2263 = vadd.f32 0.0, %v2262
        %v2264 = vpop.f32.mrf.mxu0
        %2265 = vmatprep.mubr.f32.mxu0 0.0
        %2266 = vmatmul.mubr.f32.gmra.mxu0 %v2089
        %v2267 = vpop.f32.mrf.mxu0
        %v2268 = vadd.f32 0.0, %v2267
        %v2269 = vpop.f32.mrf.mxu0
        %2270 = vmatprep.mubr.f32.mxu0 0.0
        %2271 = vmatmul.mubr.f32.gmra.mxu0 %v2092
        %v2272 = vpop.f32.mrf.mxu0
        %v2273 = vadd.f32 0.0, %v2272
        %v2274 = vpop.f32.mrf.mxu0
        %2275 = vmatprep.mubr.f32.mxu0 0.0
        %2276 = vmatmul.mubr.f32.gmra.mxu0 %v2095
        %v2277 = vpop.f32.mrf.mxu0
        %v2278 = vadd.f32 0.0, %v2277
        %v2279 = vpop.f32.mrf.mxu0
        %2280 = vmatprep.mubr.f32.mxu0 0.0
        %2281 = vmatmul.mubr.f32.gmra.mxu0 %v2098
        %v2282 = vpop.f32.mrf.mxu0
        %v2283 = vadd.f32 0.0, %v2282
        %v2284 = vpop.f32.mrf.mxu0
        %2285 = vmatprep.mubr.f32.mxu0 0.0
        %2286 = vmatmul.mubr.f32.gmra.mxu0 %v2101
        %v2287 = vpop.f32.mrf.mxu0
        %v2288 = vadd.f32 0.0, %v2287
        %v2289 = vpop.f32.mrf.mxu0
        %2290 = vmatprep.mubr.f32.mxu0 0.0
        %2291 = vmatmul.mubr.f32.gmra.mxu0 %v2104
        %v2292 = vpop.f32.mrf.mxu0
        %v2293 = vadd.f32 0.0, %v2292
        %v2294 = vpop.f32.mrf.mxu0
        %2295 = vmatprep.mubr.f32.mxu0 0.0
        %2296 = vmatmul.mubr.f32.gmra.mxu0 %v2107
        %v2297 = vpop.f32.mrf.mxu0
        %v2298 = vadd.f32 0.0, %v2297
        %v2299 = vpop.f32.mrf.mxu0
        %2300 = vmatprep.mubr.f32.mxu0 0.0
        %2301 = vmatmul.mubr.f32.gmra.mxu0 %v2110
        %v2302 = vpop.f32.mrf.mxu0
        %v2303 = vadd.f32 0.0, %v2302
        %v2304 = vpop.f32.mrf.mxu0
        %2305 = vmatprep.mubr.f32.mxu0 0.0
        %2306 = vmatmul.mubr.f32.gmra.mxu0 %v2113
        %v2307 = vpop.f32.mrf.mxu0
        %v2308 = vadd.f32 0.0, %v2307
        %v2309 = vpop.f32.mrf.mxu0
        %2310 = vmatprep.mubr.f32.mxu0 0.0
        %2311 = vmatmul.mubr.f32.gmra.mxu0 %v2116
        %v2312 = vpop.f32.mrf.mxu0
        %v2313 = vadd.f32 0.0, %v2312
        %v2314 = vpop.f32.mrf.mxu0
        %2315 = vmatprep.mubr.f32.mxu0 0.0
        %2316 = vmatmul.mubr.f32.gmra.mxu0 %v2119
        %v2317 = vpop.f32.mrf.mxu0
        %v2318 = vadd.f32 0.0, %v2317
        %v2319 = vpop.f32.mrf.mxu0
        %2320 = vmatprep.mubr.f32.mxu0 0.0
        %2321 = vmatmul.mubr.f32.gmra.mxu0 %v2122
        %v2322 = vpop.f32.mrf.mxu0
        %v2323 = vadd.f32 0.0, %v2322
        %v2324 = vpop.f32.mrf.mxu0
        %2325 = vmatprep.mubr.f32.mxu0 0.0
        %2326 = vmatmul.mubr.f32.gmra.mxu0 %v2125
        %v2327 = vpop.f32.mrf.mxu0
        %v2328 = vadd.f32 0.0, %v2327
        %v2329 = vpop.f32.mrf.mxu0
        %2330 = vmatprep.mubr.f32.mxu0 0.0
        %2331 = vmatmul.mubr.f32.gmra.mxu0 %v2128
        %v2332 = vpop.f32.mrf.mxu0
        %v2333 = vadd.f32 0.0, %v2332
        %v2334 = vpop.f32.mrf.mxu0
        %2335 = vmatprep.mubr.f32.mxu0 0.0
        %2336 = vmatmul.mubr.f32.gmra.mxu0 %v2131
        %v2337 = vpop.f32.mrf.mxu0
        %v2338 = vadd.f32 0.0, %v2337
        %v2339 = vpop.f32.mrf.mxu0
        %2340 = vmatprep.mubr.f32.mxu0 0.0
        %2341 = vmatmul.mubr.f32.gmra.mxu0 %v2134
        %v2342 = vpop.f32.mrf.mxu0
        %v2343 = vadd.f32 0.0, %v2342
        %v2344 = vpop.f32.mrf.mxu0
        %2345 = vmatprep.mubr.f32.mxu0 0.0
        %2346 = vmatmul.mubr.f32.gmra.mxu0 %v2137
        %v2347 = vpop.f32.mrf.mxu0
        %v2348 = vadd.f32 0.0, %v2347
        %v2349 = vpop.f32.mrf.mxu0
        %2350 = vmatprep.mubr.f32.mxu0 0.0
        %2351 = vmatmul.mubr.f32.gmra.mxu0 %v2140
        %v2352 = vpop.f32.mrf.mxu0
        %v2353 = vadd.f32 0.0, %v2352
        %v2354 = vpop.f32.mrf.mxu0
        %2355 = vmatprep.mubr.f32.mxu0 0.0
        %2356 = vmatmul.mubr.f32.gmra.mxu0 %v2143
        %v2357 = vpop.f32.mrf.mxu0
        %v2358 = vadd.f32 0.0, %v2357
        %v2359 = vpop.f32.mrf.mxu0
        %2360 = vmatprep.mubr.f32.mxu0 0.0
        %2361 = vmatmul.mubr.f32.gmra.mxu0 %v2146
        %v2362 = vpop.f32.mrf.mxu0
        %v2363 = vadd.f32 0.0, %v2362
        %v2364 = vpop.f32.mrf.mxu0
        %2365 = vmatprep.mubr.f32.mxu0 0.0
        %2366 = vmatmul.mubr.f32.gmra.mxu0 %v2149
        %v2367 = vpop.f32.mrf.mxu0
        %v2368 = vadd.f32 0.0, %v2367
        %v2369 = vpop.f32.mrf.mxu0
        %2370 = vmatprep.mubr.f32.mxu0 0.0
        %2371 = vmatmul.mubr.f32.gmra.mxu0 %v2152
        %v2372 = vpop.f32.mrf.mxu0
        %v2373 = vadd.f32 0.0, %v2372
        %v2374 = vpop.f32.mrf.mxu0
        %2375 = vmatprep.mubr.f32.mxu0 0.0
        %2376 = vmatmul.mubr.f32.gmra.mxu0 %v2155
        %v2377 = vpop.f32.mrf.mxu0
        %v2378 = vadd.f32 0.0, %v2377
        %v2379 = vpop.f32.mrf.mxu0
        %2380 = vmatprep.mubr.f32.mxu0 0.0
        %2381 = vmatmul.mubr.f32.gmra.mxu0 %v2158
        %v2382 = vpop.f32.mrf.mxu0
        %v2383 = vadd.f32 0.0, %v2382
        %v2384 = vpop.f32.mrf.mxu0
        %2385 = vmatprep.mubr.f32.mxu0 0.0
        %2386 = vmatmul.mubr.f32.gmra.mxu0 %v2161
        %v2387 = vpop.f32.mrf.mxu0
        %v2388 = vadd.f32 0.0, %v2387
        %v2389 = vpop.f32.mrf.mxu0
        %2390 = vmatprep.mubr.f32.mxu0 0.0
        %2391 = vmatmul.mubr.f32.gmra.mxu0 %v2164
        %v2392 = vpop.f32.mrf.mxu0
        %v2393 = vadd.f32 0.0, %v2392
        %v2394 = vpop.f32.mrf.mxu0
        %2395 = vmatprep.mubr.f32.mxu0 0.0
        %2396 = vmatmul.mubr.f32.gmra.mxu0 %v2167
        %v2397 = vpop.f32.mrf.mxu0
        %v2398 = vadd.f32 0.0, %v2397
        %v2399 = vpop.f32.mrf.mxu0
        %2400 = vmatprep.mubr.f32.mxu0 0.0
        %2401 = vmatmul.mubr.f32.gmra.mxu0 %v2170
        %v2402 = vpop.f32.mrf.mxu0
        %v2403 = vadd.f32 0.0, %v2402
        %v2404 = vpop.f32.mrf.mxu0
        %2405 = vmatprep.mubr.f32.mxu0 0.0
        %2406 = vmatmul.mubr.f32.gmra.mxu0 %v2173
        %v2407 = vpop.f32.mrf.mxu0
        %v2408 = vadd.f32 0.0, %v2407
        %v2409 = vpop.f32.mrf.mxu0
        %2410 = vmatprep.mubr.f32.mxu0 0.0
        %2411 = vmatmul.mubr.f32.gmra.mxu0 %v2176
        %v2412 = vpop.f32.mrf.mxu0
        %v2413 = vadd.f32 0.0, %v2412
        %v2414 = vpop.f32.mrf.mxu0
        %2415 = vmatprep.mubr.f32.mxu0 0.0
        %2416 = vmatmul.mubr.f32.gmra.mxu0 %v2179
        %v2417 = vpop.f32.mrf.mxu0
        %v2418 = vadd.f32 0.0, %v2417
        %v2419 = vpop.f32.mrf.mxu0
        %2420 = vmatprep.mubr.f32.mxu0 0.0
        %2421 = vmatmul.mubr.f32.gmra.mxu0 %v2182
        %v2422 = vpop.f32.mrf.mxu0
        %v2423 = vadd.f32 0.0, %v2422
        %v2424 = vpop.f32.mrf.mxu0
        %2425 = vmatprep.mubr.f32.mxu0 0.0
        %2426 = vmatmul.mubr.f32.gmra.mxu0 %v2185
        %v2427 = vpop.f32.mrf.mxu0
        %v2428 = vadd.f32 0.0, %v2427
        %v2429 = vpop.f32.mrf.mxu0
        %2430 = vmatprep.mubr.f32.mxu0 0.0
        %2431 = vmatmul.mubr.f32.gmra.mxu0 %v2188
        %v2432 = vpop.f32.mrf.mxu0
        %v2433 = vadd.f32 0.0, %v2432
        %v2434 = vpop.f32.mrf.mxu0
        %2435 = vmatprep.mubr.f32.mxu0 0.0
        %2436 = vmatmul.mubr.f32.gmra.mxu0 %v2191
        %v2437 = vpop.f32.mrf.mxu0
        %v2438 = vadd.f32 0.0, %v2437
        %v2439 = vpop.f32.mrf.mxu0
        %2440 = vdwg.mxu0
        %v2441 = vadd.f32 %v1869, %v2263
        %v2442 = vadd.f32 %v1874, %v2268
        %v2443 = vadd.f32 %v1879, %v2273
        %v2444 = vadd.f32 %v1884, %v2278
        %v2445 = vadd.f32 %v1889, %v2283
        %v2446 = vadd.f32 %v1894, %v2288
        %v2447 = vadd.f32 %v1899, %v2293
        %v2448 = vadd.f32 %v1904, %v2298
        %v2449 = vadd.f32 %v1909, %v2303
        %v2450 = vadd.f32 %v1914, %v2308
        %v2451 = vadd.f32 %v1919, %v2313
        %v2452 = vadd.f32 %v1924, %v2318
        %v2453 = vadd.f32 %v1929, %v2323
        %v2454 = vadd.f32 %v1934, %v2328
        %v2455 = vadd.f32 %v1939, %v2333
        %v2456 = vadd.f32 %v1944, %v2338
        %v2457 = vadd.f32 %v1949, %v2343
        %v2458 = vadd.f32 %v1954, %v2348
        %v2459 = vadd.f32 %v1959, %v2353
        %v2460 = vadd.f32 %v1964, %v2358
        %v2461 = vadd.f32 %v1969, %v2363
        %v2462 = vadd.f32 %v1974, %v2368
        %v2463 = vadd.f32 %v1979, %v2373
        %v2464 = vadd.f32 %v1984, %v2378
        %v2465 = vadd.f32 %v1989, %v2383
        %v2466 = vadd.f32 %v1994, %v2388
        %v2467 = vadd.f32 %v1999, %v2393
        %v2468 = vadd.f32 %v2004, %v2398
        %v2469 = vadd.f32 %v2009, %v2403
        %v2470 = vadd.f32 %v2014, %v2408
        %v2471 = vadd.f32 %v2019, %v2413
        %v2472 = vadd.f32 %v2024, %v2418
        %v2473 = vadd.f32 %v2029, %v2423
        %v2474 = vadd.f32 %v2034, %v2428
        %v2475 = vadd.f32 %v2039, %v2433
        %v2476 = vadd.f32 %v2044, %v2438
        %v2477 = vld [vmem:[#allocation3 + $0x12] sm:$0xff]
        %v2478 = vld [vmem:[#allocation3 + $0x1a] sm:$0xff]
        %v2479 = vld [vmem:[#allocation3 + $0x22] sm:$0xff]
        %v2480 = vld [vmem:[#allocation3 + $0x2a] sm:$0xff]
        %v2481 = vld [vmem:[#allocation3 + $0x32] sm:$0xff]
        %v2482 = vld [vmem:[#allocation3 + $0x3a] sm:$0xff]
        %v2483 = vld [vmem:[#allocation3 + $0x42] sm:$0xff]
        %v2484 = vld [vmem:[#allocation3 + $0x4a] sm:$0xff]
        %v2485 = vld [vmem:[#allocation3 + $0x52] sm:$0xff]
        %v2486 = vld [vmem:[#allocation3 + $0x5a] sm:$0xff]
        %v2487 = vld [vmem:[#allocation3 + $0x62] sm:$0xff]
        %v2488 = vld [vmem:[#allocation3 + $0x6a] sm:$0xff]
        %v2489 = vld [vmem:[#allocation3 + $0x72] sm:$0xff]
        %v2490 = vld [vmem:[#allocation3 + $0x7a] sm:$0xff]
        %v2491 = vld [vmem:[#allocation3 + $0x82] sm:$0xff]
        %v2492 = vld [vmem:[#allocation3 + $0x8a] sm:$0xff]
        %v2493 = vld [vmem:[#allocation3 + $0x92] sm:$0xff]
        %v2494 = vld [vmem:[#allocation3 + $0x9a] sm:$0xff]
        %v2495 = vld [vmem:[#allocation3 + $0xa2] sm:$0xff]
        %v2496 = vld [vmem:[#allocation3 + $0xaa] sm:$0xff]
        %v2497 = vld [vmem:[#allocation3 + $0xb2] sm:$0xff]
        %v2498 = vld [vmem:[#allocation3 + $0xba] sm:$0xff]
        %v2499 = vld [vmem:[#allocation3 + $0xc2] sm:$0xff]
        %v2500 = vld [vmem:[#allocation3 + $0xca] sm:$0xff]
        %v2501 = vld [vmem:[#allocation3 + $0xd2] sm:$0xff]
        %v2502 = vld [vmem:[#allocation3 + $0xda] sm:$0xff]
        %v2503 = vld [vmem:[#allocation3 + $0xe2] sm:$0xff]
        %v2504 = vld [vmem:[#allocation3 + $0xea] sm:$0xff]
        %v2505 = vld [vmem:[#allocation3 + $0xf2] sm:$0xff]
        %v2506 = vld [vmem:[#allocation3 + $0xfa] sm:$0xff]
        %v2507 = vld [vmem:[#allocation3 + $0x102] sm:$0xff]
        %v2508 = vld [vmem:[#allocation3 + $0x10a] sm:$0xff]
        %v2509 = vld [vmem:[#allocation3 + $0x112] sm:$0xff]
        %v2510 = vld [vmem:[#allocation3 + $0x11a] sm:$0xff]
        %v2511 = vld [vmem:[#allocation3 + $0x122] sm:$0xff]
        %v2512 = vld [vmem:[#allocation3 + $0x12a] sm:$0x3f]
        %s2513 = scalar_lea.vmem %s4, 12
        %v2514 = vld [vmem:[%s2513] sm:$0xf]
        %v2516 = vsel %vm1216, %v2477, 0
        %v2519 = vsel %vm1216, %v2478, 0
        %v2522 = vsel %vm1216, %v2479, 0
        %v2525 = vsel %vm1216, %v2480, 0
        %v2528 = vsel %vm1216, %v2481, 0
        %v2531 = vsel %vm1216, %v2482, 0
        %v2534 = vsel %vm1216, %v2483, 0
        %v2537 = vsel %vm1216, %v2484, 0
        %v2540 = vsel %vm1216, %v2485, 0
        %v2543 = vsel %vm1216, %v2486, 0
        %v2546 = vsel %vm1216, %v2487, 0
        %v2549 = vsel %vm1216, %v2488, 0
        %v2552 = vsel %vm1216, %v2489, 0
        %v2555 = vsel %vm1216, %v2490, 0
        %v2558 = vsel %vm1216, %v2491, 0
        %v2561 = vsel %vm1216, %v2492, 0
        %v2564 = vsel %vm1216, %v2493, 0
        %v2567 = vsel %vm1216, %v2494, 0
        %v2570 = vsel %vm1216, %v2495, 0
        %v2573 = vsel %vm1216, %v2496, 0
        %v2576 = vsel %vm1216, %v2497, 0
        %v2579 = vsel %vm1216, %v2498, 0
        %v2582 = vsel %vm1216, %v2499, 0
        %v2585 = vsel %vm1216, %v2500, 0
        %v2588 = vsel %vm1216, %v2501, 0
        %v2591 = vsel %vm1216, %v2502, 0
        %v2594 = vsel %vm1216, %v2503, 0
        %v2597 = vsel %vm1216, %v2504, 0
        %v2600 = vsel %vm1216, %v2505, 0
        %v2603 = vsel %vm1216, %v2506, 0
        %v2606 = vsel %vm1216, %v2507, 0
        %v2609 = vsel %vm1216, %v2508, 0
        %v2612 = vsel %vm1216, %v2509, 0
        %v2615 = vsel %vm1216, %v2510, 0
        %v2618 = vsel %vm1216, %v2511, 0
        %v2621 = vsel %vm1216, %v2512, 0
        %v2624 = vsel %vm1442, %v2514, 0
        %2626 = vmatprep.subr.mxu0 0.0
        %2627 = vmatpush1.msra.mxu0 0.0
        %2628 = vmatprep.subr.mxu0 0.0
        %2629 = vmatpush1.msra.mxu0 0.0
        %2630 = vmatprep.subr.mxu0 0.0
        %2631 = vmatpush1.msra.mxu0 0.0
        %2632 = vmatprep.subr.mxu0 0.0
        %2633 = vmatpush1.msra.mxu0 0.0
        %2634 = vmatprep.subr.mxu0 0.0
        %2635 = vmatpush1.msra.mxu0 0.0
        %2636 = vmatprep.subr.mxu0 0.0
        %2637 = vmatpush1.msra.mxu0 0.0
        %2638 = vmatprep.subr.mxu0 0.0
        %2639 = vmatpush1.msra.mxu0 0.0
        %2640 = vmatprep.subr.mxu0 0.0
        %2641 = vmatpush1.msra.mxu0 0.0
        %2642 = vmatprep.subr.mxu0 0.0
        %2643 = vmatpush1.msra.mxu0 0.0
        %2644 = vmatprep.subr.mxu0 0.0
        %2645 = vmatpush1.msra.mxu0 0.0
        %2646 = vmatprep.subr.mxu0 0.0
        %2647 = vmatpush1.msra.mxu0 0.0
        %2648 = vmatprep.subr.mxu0 0.0
        %2649 = vmatpush1.msra.mxu0 0.0
        %2650 = vmatprep.subr.mxu0 0.0
        %2651 = vmatpush1.msra.mxu0 0.0
        %2652 = vmatprep.subr.mxu0 0.0
        %2653 = vmatpush1.msra.mxu0 0.0
        %2654 = vmatprep.subr.mxu0 0.0
        %2655 = vmatpush1.msra.mxu0 0.0
        %2656 = vmatprep.subr.mxu0 0.0
        %2657 = vmatpush1.msra.mxu0 %v2624
        %2658 = vmatprep.subr.mxu0 0.0
        %2659 = vmatpush2.msra.mxu0 0.0
        %2660 = vmatprep.subr.mxu0 0.0
        %2661 = vmatpush2.msra.mxu0 0.0
        %2662 = vmatprep.subr.mxu0 0.0
        %2663 = vmatpush2.msra.mxu0 0.0
        %2664 = vmatprep.subr.mxu0 0.0
        %2665 = vmatpush2.msra.mxu0 0.0
        %2666 = vmatprep.subr.mxu0 0.0
        %2667 = vmatpush2.msra.mxu0 0.0
        %2668 = vmatprep.subr.mxu0 0.0
        %2669 = vmatpush2.msra.mxu0 0.0
        %2670 = vmatprep.subr.mxu0 0.0
        %2671 = vmatpush2.msra.mxu0 0.0
        %2672 = vmatprep.subr.mxu0 0.0
        %2673 = vmatpush2.msra.mxu0 0.0
        %2674 = vmatprep.subr.mxu0 0.0
        %2675 = vmatpush2.msra.mxu0 0.0
        %2676 = vmatprep.subr.mxu0 0.0
        %2677 = vmatpush2.msra.mxu0 0.0
        %2678 = vmatprep.subr.mxu0 0.0
        %2679 = vmatpush2.msra.mxu0 0.0
        %2680 = vmatprep.subr.mxu0 0.0
        %2681 = vmatpush2.msra.mxu0 0.0
        %2682 = vmatprep.subr.mxu0 0.0
        %2683 = vmatpush2.msra.mxu0 0.0
        %2684 = vmatprep.subr.mxu0 0.0
        %2685 = vmatpush2.msra.mxu0 0.0
        %2686 = vmatprep.subr.mxu0 0.0
        %2687 = vmatpush2.msra.mxu0 0.0
        %2688 = vmatprep.subr.mxu0 0.0
        %2689 = vmatpush2.msra.mxu0 0.0
        %2690 = vmatprep.mubr.f32.mxu0 0.0
        %2691 = vmatmul.mubr.f32.gmra.mxu0 %v2516
        %v2692 = vpop.f32.mrf.mxu0
        %v2693 = vadd.f32 0.0, %v2692
        %v2694 = vpop.f32.mrf.mxu0
        %2695 = vmatprep.mubr.f32.mxu0 0.0
        %2696 = vmatmul.mubr.f32.gmra.mxu0 %v2519
        %v2697 = vpop.f32.mrf.mxu0
        %v2698 = vadd.f32 0.0, %v2697
        %v2699 = vpop.f32.mrf.mxu0
        %2700 = vmatprep.mubr.f32.mxu0 0.0
        %2701 = vmatmul.mubr.f32.gmra.mxu0 %v2522
        %v2702 = vpop.f32.mrf.mxu0
        %v2703 = vadd.f32 0.0, %v2702
        %v2704 = vpop.f32.mrf.mxu0
        %2705 = vmatprep.mubr.f32.mxu0 0.0
        %2706 = vmatmul.mubr.f32.gmra.mxu0 %v2525
        %v2707 = vpop.f32.mrf.mxu0
        %v2708 = vadd.f32 0.0, %v2707
        %v2709 = vpop.f32.mrf.mxu0
        %2710 = vmatprep.mubr.f32.mxu0 0.0
        %2711 = vmatmul.mubr.f32.gmra.mxu0 %v2528
        %v2712 = vpop.f32.mrf.mxu0
        %v2713 = vadd.f32 0.0, %v2712
        %v2714 = vpop.f32.mrf.mxu0
        %2715 = vmatprep.mubr.f32.mxu0 0.0
        %2716 = vmatmul.mubr.f32.gmra.mxu0 %v2531
        %v2717 = vpop.f32.mrf.mxu0
        %v2718 = vadd.f32 0.0, %v2717
        %v2719 = vpop.f32.mrf.mxu0
        %2720 = vmatprep.mubr.f32.mxu0 0.0
        %2721 = vmatmul.mubr.f32.gmra.mxu0 %v2534
        %v2722 = vpop.f32.mrf.mxu0
        %v2723 = vadd.f32 0.0, %v2722
        %v2724 = vpop.f32.mrf.mxu0
        %2725 = vmatprep.mubr.f32.mxu0 0.0
        %2726 = vmatmul.mubr.f32.gmra.mxu0 %v2537
        %v2727 = vpop.f32.mrf.mxu0
        %v2728 = vadd.f32 0.0, %v2727
        %v2729 = vpop.f32.mrf.mxu0
        %2730 = vmatprep.mubr.f32.mxu0 0.0
        %2731 = vmatmul.mubr.f32.gmra.mxu0 %v2540
        %v2732 = vpop.f32.mrf.mxu0
        %v2733 = vadd.f32 0.0, %v2732
        %v2734 = vpop.f32.mrf.mxu0
        %2735 = vmatprep.mubr.f32.mxu0 0.0
        %2736 = vmatmul.mubr.f32.gmra.mxu0 %v2543
        %v2737 = vpop.f32.mrf.mxu0
        %v2738 = vadd.f32 0.0, %v2737
        %v2739 = vpop.f32.mrf.mxu0
        %2740 = vmatprep.mubr.f32.mxu0 0.0
        %2741 = vmatmul.mubr.f32.gmra.mxu0 %v2546
        %v2742 = vpop.f32.mrf.mxu0
        %v2743 = vadd.f32 0.0, %v2742
        %v2744 = vpop.f32.mrf.mxu0
        %2745 = vmatprep.mubr.f32.mxu0 0.0
        %2746 = vmatmul.mubr.f32.gmra.mxu0 %v2549
        %v2747 = vpop.f32.mrf.mxu0
        %v2748 = vadd.f32 0.0, %v2747
        %v2749 = vpop.f32.mrf.mxu0
        %2750 = vmatprep.mubr.f32.mxu0 0.0
        %2751 = vmatmul.mubr.f32.gmra.mxu0 %v2552
        %v2752 = vpop.f32.mrf.mxu0
        %v2753 = vadd.f32 0.0, %v2752
        %v2754 = vpop.f32.mrf.mxu0
        %2755 = vmatprep.mubr.f32.mxu0 0.0
        %2756 = vmatmul.mubr.f32.gmra.mxu0 %v2555
        %v2757 = vpop.f32.mrf.mxu0
        %v2758 = vadd.f32 0.0, %v2757
        %v2759 = vpop.f32.mrf.mxu0
        %2760 = vmatprep.mubr.f32.mxu0 0.0
        %2761 = vmatmul.mubr.f32.gmra.mxu0 %v2558
        %v2762 = vpop.f32.mrf.mxu0
        %v2763 = vadd.f32 0.0, %v2762
        %v2764 = vpop.f32.mrf.mxu0
        %2765 = vmatprep.mubr.f32.mxu0 0.0
        %2766 = vmatmul.mubr.f32.gmra.mxu0 %v2561
        %v2767 = vpop.f32.mrf.mxu0
        %v2768 = vadd.f32 0.0, %v2767
        %v2769 = vpop.f32.mrf.mxu0
        %2770 = vmatprep.mubr.f32.mxu0 0.0
        %2771 = vmatmul.mubr.f32.gmra.mxu0 %v2564
        %v2772 = vpop.f32.mrf.mxu0
        %v2773 = vadd.f32 0.0, %v2772
        %v2774 = vpop.f32.mrf.mxu0
        %2775 = vmatprep.mubr.f32.mxu0 0.0
        %2776 = vmatmul.mubr.f32.gmra.mxu0 %v2567
        %v2777 = vpop.f32.mrf.mxu0
        %v2778 = vadd.f32 0.0, %v2777
        %v2779 = vpop.f32.mrf.mxu0
        %2780 = vmatprep.mubr.f32.mxu0 0.0
        %2781 = vmatmul.mubr.f32.gmra.mxu0 %v2570
        %v2782 = vpop.f32.mrf.mxu0
        %v2783 = vadd.f32 0.0, %v2782
        %v2784 = vpop.f32.mrf.mxu0
        %2785 = vmatprep.mubr.f32.mxu0 0.0
        %2786 = vmatmul.mubr.f32.gmra.mxu0 %v2573
        %v2787 = vpop.f32.mrf.mxu0
        %v2788 = vadd.f32 0.0, %v2787
        %v2789 = vpop.f32.mrf.mxu0
        %2790 = vmatprep.mubr.f32.mxu0 0.0
        %2791 = vmatmul.mubr.f32.gmra.mxu0 %v2576
        %v2792 = vpop.f32.mrf.mxu0
        %v2793 = vadd.f32 0.0, %v2792
        %v2794 = vpop.f32.mrf.mxu0
        %2795 = vmatprep.mubr.f32.mxu0 0.0
        %2796 = vmatmul.mubr.f32.gmra.mxu0 %v2579
        %v2797 = vpop.f32.mrf.mxu0
        %v2798 = vadd.f32 0.0, %v2797
        %v2799 = vpop.f32.mrf.mxu0
        %2800 = vmatprep.mubr.f32.mxu0 0.0
        %2801 = vmatmul.mubr.f32.gmra.mxu0 %v2582
        %v2802 = vpop.f32.mrf.mxu0
        %v2803 = vadd.f32 0.0, %v2802
        %v2804 = vpop.f32.mrf.mxu0
        %2805 = vmatprep.mubr.f32.mxu0 0.0
        %2806 = vmatmul.mubr.f32.gmra.mxu0 %v2585
        %v2807 = vpop.f32.mrf.mxu0
        %v2808 = vadd.f32 0.0, %v2807
        %v2809 = vpop.f32.mrf.mxu0
        %2810 = vmatprep.mubr.f32.mxu0 0.0
        %2811 = vmatmul.mubr.f32.gmra.mxu0 %v2588
        %v2812 = vpop.f32.mrf.mxu0
        %v2813 = vadd.f32 0.0, %v2812
        %v2814 = vpop.f32.mrf.mxu0
        %2815 = vmatprep.mubr.f32.mxu0 0.0
        %2816 = vmatmul.mubr.f32.gmra.mxu0 %v2591
        %v2817 = vpop.f32.mrf.mxu0
        %v2818 = vadd.f32 0.0, %v2817
        %v2819 = vpop.f32.mrf.mxu0
        %2820 = vmatprep.mubr.f32.mxu0 0.0
        %2821 = vmatmul.mubr.f32.gmra.mxu0 %v2594
        %v2822 = vpop.f32.mrf.mxu0
        %v2823 = vadd.f32 0.0, %v2822
        %v2824 = vpop.f32.mrf.mxu0
        %2825 = vmatprep.mubr.f32.mxu0 0.0
        %2826 = vmatmul.mubr.f32.gmra.mxu0 %v2597
        %v2827 = vpop.f32.mrf.mxu0
        %v2828 = vadd.f32 0.0, %v2827
        %v2829 = vpop.f32.mrf.mxu0
        %2830 = vmatprep.mubr.f32.mxu0 0.0
        %2831 = vmatmul.mubr.f32.gmra.mxu0 %v2600
        %v2832 = vpop.f32.mrf.mxu0
        %v2833 = vadd.f32 0.0, %v2832
        %v2834 = vpop.f32.mrf.mxu0
        %2835 = vmatprep.mubr.f32.mxu0 0.0
        %2836 = vmatmul.mubr.f32.gmra.mxu0 %v2603
        %v2837 = vpop.f32.mrf.mxu0
        %v2838 = vadd.f32 0.0, %v2837
        %v2839 = vpop.f32.mrf.mxu0
        %2840 = vmatprep.mubr.f32.mxu0 0.0
        %2841 = vmatmul.mubr.f32.gmra.mxu0 %v2606
        %v2842 = vpop.f32.mrf.mxu0
        %v2843 = vadd.f32 0.0, %v2842
        %v2844 = vpop.f32.mrf.mxu0
        %2845 = vmatprep.mubr.f32.mxu0 0.0
        %2846 = vmatmul.mubr.f32.gmra.mxu0 %v2609
        %v2847 = vpop.f32.mrf.mxu0
        %v2848 = vadd.f32 0.0, %v2847
        %v2849 = vpop.f32.mrf.mxu0
        %2850 = vmatprep.mubr.f32.mxu0 0.0
        %2851 = vmatmul.mubr.f32.gmra.mxu0 %v2612
        %v2852 = vpop.f32.mrf.mxu0
        %v2853 = vadd.f32 0.0, %v2852
        %v2854 = vpop.f32.mrf.mxu0
        %2855 = vmatprep.mubr.f32.mxu0 0.0
        %2856 = vmatmul.mubr.f32.gmra.mxu0 %v2615
        %v2857 = vpop.f32.mrf.mxu0
        %v2858 = vadd.f32 0.0, %v2857
        %v2859 = vpop.f32.mrf.mxu0
        %2860 = vmatprep.mubr.f32.mxu0 0.0
        %2861 = vmatmul.mubr.f32.gmra.mxu0 %v2618
        %v2862 = vpop.f32.mrf.mxu0
        %v2863 = vadd.f32 0.0, %v2862
        %v2864 = vpop.f32.mrf.mxu0
        %2865 = vmatprep.mubr.f32.mxu0 0.0
        %2866 = vmatmul.mubr.f32.gmra.mxu0 %v2621
        %v2867 = vpop.f32.mrf.mxu0
        %v2868 = vadd.f32 0.0, %v2867
        %v2869 = vpop.f32.mrf.mxu0
        %2870 = vdwg.mxu0
        %v2871 = vadd.f32 %v2441, %v2693
        %v2872 = vadd.f32 %v2442, %v2698
        %v2873 = vadd.f32 %v2443, %v2703
        %v2874 = vadd.f32 %v2444, %v2708
        %v2875 = vadd.f32 %v2445, %v2713
        %v2876 = vadd.f32 %v2446, %v2718
        %v2877 = vadd.f32 %v2447, %v2723
        %v2878 = vadd.f32 %v2448, %v2728
        %v2879 = vadd.f32 %v2449, %v2733
        %v2880 = vadd.f32 %v2450, %v2738
        %v2881 = vadd.f32 %v2451, %v2743
        %v2882 = vadd.f32 %v2452, %v2748
        %v2883 = vadd.f32 %v2453, %v2753
        %v2884 = vadd.f32 %v2454, %v2758
        %v2885 = vadd.f32 %v2455, %v2763
        %v2886 = vadd.f32 %v2456, %v2768
        %v2887 = vadd.f32 %v2457, %v2773
        %v2888 = vadd.f32 %v2458, %v2778
        %v2889 = vadd.f32 %v2459, %v2783
        %v2890 = vadd.f32 %v2460, %v2788
        %v2891 = vadd.f32 %v2461, %v2793
        %v2892 = vadd.f32 %v2462, %v2798
        %v2893 = vadd.f32 %v2463, %v2803
        %v2894 = vadd.f32 %v2464, %v2808
        %v2895 = vadd.f32 %v2465, %v2813
        %v2896 = vadd.f32 %v2466, %v2818
        %v2897 = vadd.f32 %v2467, %v2823
        %v2898 = vadd.f32 %v2468, %v2828
        %v2899 = vadd.f32 %v2469, %v2833
        %v2900 = vadd.f32 %v2470, %v2838
        %v2901 = vadd.f32 %v2471, %v2843
        %v2902 = vadd.f32 %v2472, %v2848
        %v2903 = vadd.f32 %v2473, %v2853
        %v2904 = vadd.f32 %v2474, %v2858
        %v2905 = vadd.f32 %v2475, %v2863
        %v2906 = vadd.f32 %v2476, %v2868
        %v2907 = vld [vmem:[#allocation3 + $0x13] sm:$0xff]
        %v2908 = vld [vmem:[#allocation3 + $0x1b] sm:$0xff]
        %v2909 = vld [vmem:[#allocation3 + $0x23] sm:$0xff]
        %v2910 = vld [vmem:[#allocation3 + $0x2b] sm:$0xff]
        %v2911 = vld [vmem:[#allocation3 + $0x33] sm:$0xff]
        %v2912 = vld [vmem:[#allocation3 + $0x3b] sm:$0xff]
        %v2913 = vld [vmem:[#allocation3 + $0x43] sm:$0xff]
        %v2914 = vld [vmem:[#allocation3 + $0x4b] sm:$0xff]
        %v2915 = vld [vmem:[#allocation3 + $0x53] sm:$0xff]
        %v2916 = vld [vmem:[#allocation3 + $0x5b] sm:$0xff]
        %v2917 = vld [vmem:[#allocation3 + $0x63] sm:$0xff]
        %v2918 = vld [vmem:[#allocation3 + $0x6b] sm:$0xff]
        %v2919 = vld [vmem:[#allocation3 + $0x73] sm:$0xff]
        %v2920 = vld [vmem:[#allocation3 + $0x7b] sm:$0xff]
        %v2921 = vld [vmem:[#allocation3 + $0x83] sm:$0xff]
        %v2922 = vld [vmem:[#allocation3 + $0x8b] sm:$0xff]
        %v2923 = vld [vmem:[#allocation3 + $0x93] sm:$0xff]
        %v2924 = vld [vmem:[#allocation3 + $0x9b] sm:$0xff]
        %v2925 = vld [vmem:[#allocation3 + $0xa3] sm:$0xff]
        %v2926 = vld [vmem:[#allocation3 + $0xab] sm:$0xff]
        %v2927 = vld [vmem:[#allocation3 + $0xb3] sm:$0xff]
        %v2928 = vld [vmem:[#allocation3 + $0xbb] sm:$0xff]
        %v2929 = vld [vmem:[#allocation3 + $0xc3] sm:$0xff]
        %v2930 = vld [vmem:[#allocation3 + $0xcb] sm:$0xff]
        %v2931 = vld [vmem:[#allocation3 + $0xd3] sm:$0xff]
        %v2932 = vld [vmem:[#allocation3 + $0xdb] sm:$0xff]
        %v2933 = vld [vmem:[#allocation3 + $0xe3] sm:$0xff]
        %v2934 = vld [vmem:[#allocation3 + $0xeb] sm:$0xff]
        %v2935 = vld [vmem:[#allocation3 + $0xf3] sm:$0xff]
        %v2936 = vld [vmem:[#allocation3 + $0xfb] sm:$0xff]
        %v2937 = vld [vmem:[#allocation3 + $0x103] sm:$0xff]
        %v2938 = vld [vmem:[#allocation3 + $0x10b] sm:$0xff]
        %v2939 = vld [vmem:[#allocation3 + $0x113] sm:$0xff]
        %v2940 = vld [vmem:[#allocation3 + $0x11b] sm:$0xff]
        %v2941 = vld [vmem:[#allocation3 + $0x123] sm:$0xff]
        %v2942 = vld [vmem:[#allocation3 + $0x12b] sm:$0x3f]
        %s2943 = scalar_lea.vmem %s4, 16
        %v2944 = vld [vmem:[%s2943] sm:$0xf]
        %v2946 = vsel %vm1216, %v2907, 0
        %v2949 = vsel %vm1216, %v2908, 0
        %v2952 = vsel %vm1216, %v2909, 0
        %v2955 = vsel %vm1216, %v2910, 0
        %v2958 = vsel %vm1216, %v2911, 0
        %v2961 = vsel %vm1216, %v2912, 0
        %v2964 = vsel %vm1216, %v2913, 0
        %v2967 = vsel %vm1216, %v2914, 0
        %v2970 = vsel %vm1216, %v2915, 0
        %v2973 = vsel %vm1216, %v2916, 0
        %v2976 = vsel %vm1216, %v2917, 0
        %v2979 = vsel %vm1216, %v2918, 0
        %v2982 = vsel %vm1216, %v2919, 0
        %v2985 = vsel %vm1216, %v2920, 0
        %v2988 = vsel %vm1216, %v2921, 0
        %v2991 = vsel %vm1216, %v2922, 0
        %v2994 = vsel %vm1216, %v2923, 0
        %v2997 = vsel %vm1216, %v2924, 0
        %v3000 = vsel %vm1216, %v2925, 0
        %v3003 = vsel %vm1216, %v2926, 0
        %v3006 = vsel %vm1216, %v2927, 0
        %v3009 = vsel %vm1216, %v2928, 0
        %v3012 = vsel %vm1216, %v2929, 0
        %v3015 = vsel %vm1216, %v2930, 0
        %v3018 = vsel %vm1216, %v2931, 0
        %v3021 = vsel %vm1216, %v2932, 0
        %v3024 = vsel %vm1216, %v2933, 0
        %v3027 = vsel %vm1216, %v2934, 0
        %v3030 = vsel %vm1216, %v2935, 0
        %v3033 = vsel %vm1216, %v2936, 0
        %v3036 = vsel %vm1216, %v2937, 0
        %v3039 = vsel %vm1216, %v2938, 0
        %v3042 = vsel %vm1216, %v2939, 0
        %v3045 = vsel %vm1216, %v2940, 0
        %v3048 = vsel %vm1216, %v2941, 0
        %v3051 = vsel %vm1216, %v2942, 0
        %v3054 = vsel %vm1442, %v2944, 0
        %3056 = vmatprep.subr.mxu0 0.0
        %3057 = vmatpush1.msra.mxu0 0.0
        %3058 = vmatprep.subr.mxu0 0.0
        %3059 = vmatpush1.msra.mxu0 0.0
        %3060 = vmatprep.subr.mxu0 0.0
        %3061 = vmatpush1.msra.mxu0 0.0
        %3062 = vmatprep.subr.mxu0 0.0
        %3063 = vmatpush1.msra.mxu0 0.0
        %3064 = vmatprep.subr.mxu0 0.0
        %3065 = vmatpush1.msra.mxu0 0.0
        %3066 = vmatprep.subr.mxu0 0.0
        %3067 = vmatpush1.msra.mxu0 0.0
        %3068 = vmatprep.subr.mxu0 0.0
        %3069 = vmatpush1.msra.mxu0 0.0
        %3070 = vmatprep.subr.mxu0 0.0
        %3071 = vmatpush1.msra.mxu0 0.0
        %3072 = vmatprep.subr.mxu0 0.0
        %3073 = vmatpush1.msra.mxu0 0.0
        %3074 = vmatprep.subr.mxu0 0.0
        %3075 = vmatpush1.msra.mxu0 0.0
        %3076 = vmatprep.subr.mxu0 0.0
        %3077 = vmatpush1.msra.mxu0 0.0
        %3078 = vmatprep.subr.mxu0 0.0
        %3079 = vmatpush1.msra.mxu0 0.0
        %3080 = vmatprep.subr.mxu0 0.0
        %3081 = vmatpush1.msra.mxu0 0.0
        %3082 = vmatprep.subr.mxu0 0.0
        %3083 = vmatpush1.msra.mxu0 0.0
        %3084 = vmatprep.subr.mxu0 0.0
        %3085 = vmatpush1.msra.mxu0 0.0
        %3086 = vmatprep.subr.mxu0 0.0
        %3087 = vmatpush1.msra.mxu0 %v3054
        %3088 = vmatprep.subr.mxu0 0.0
        %3089 = vmatpush2.msra.mxu0 0.0
        %3090 = vmatprep.subr.mxu0 0.0
        %3091 = vmatpush2.msra.mxu0 0.0
        %3092 = vmatprep.subr.mxu0 0.0
        %3093 = vmatpush2.msra.mxu0 0.0
        %3094 = vmatprep.subr.mxu0 0.0
        %3095 = vmatpush2.msra.mxu0 0.0
        %3096 = vmatprep.subr.mxu0 0.0
        %3097 = vmatpush2.msra.mxu0 0.0
        %3098 = vmatprep.subr.mxu0 0.0
        %3099 = vmatpush2.msra.mxu0 0.0
        %3100 = vmatprep.subr.mxu0 0.0
        %3101 = vmatpush2.msra.mxu0 0.0
        %3102 = vmatprep.subr.mxu0 0.0
        %3103 = vmatpush2.msra.mxu0 0.0
        %3104 = vmatprep.subr.mxu0 0.0
        %3105 = vmatpush2.msra.mxu0 0.0
        %3106 = vmatprep.subr.mxu0 0.0
        %3107 = vmatpush2.msra.mxu0 0.0
        %3108 = vmatprep.subr.mxu0 0.0
        %3109 = vmatpush2.msra.mxu0 0.0
        %3110 = vmatprep.subr.mxu0 0.0
        %3111 = vmatpush2.msra.mxu0 0.0
        %3112 = vmatprep.subr.mxu0 0.0
        %3113 = vmatpush2.msra.mxu0 0.0
        %3114 = vmatprep.subr.mxu0 0.0
        %3115 = vmatpush2.msra.mxu0 0.0
        %3116 = vmatprep.subr.mxu0 0.0
        %3117 = vmatpush2.msra.mxu0 0.0
        %3118 = vmatprep.subr.mxu0 0.0
        %3119 = vmatpush2.msra.mxu0 0.0
        %3120 = vmatprep.mubr.f32.mxu0 0.0
        %3121 = vmatmul.mubr.f32.gmra.mxu0 %v2946
        %v3122 = vpop.f32.mrf.mxu0
        %v3123 = vadd.f32 0.0, %v3122
        %v3124 = vpop.f32.mrf.mxu0
        %3125 = vmatprep.mubr.f32.mxu0 0.0
        %3126 = vmatmul.mubr.f32.gmra.mxu0 %v2949
        %v3127 = vpop.f32.mrf.mxu0
        %v3128 = vadd.f32 0.0, %v3127
        %v3129 = vpop.f32.mrf.mxu0
        %3130 = vmatprep.mubr.f32.mxu0 0.0
        %3131 = vmatmul.mubr.f32.gmra.mxu0 %v2952
        %v3132 = vpop.f32.mrf.mxu0
        %v3133 = vadd.f32 0.0, %v3132
        %v3134 = vpop.f32.mrf.mxu0
        %3135 = vmatprep.mubr.f32.mxu0 0.0
        %3136 = vmatmul.mubr.f32.gmra.mxu0 %v2955
        %v3137 = vpop.f32.mrf.mxu0
        %v3138 = vadd.f32 0.0, %v3137
        %v3139 = vpop.f32.mrf.mxu0
        %3140 = vmatprep.mubr.f32.mxu0 0.0
        %3141 = vmatmul.mubr.f32.gmra.mxu0 %v2958
        %v3142 = vpop.f32.mrf.mxu0
        %v3143 = vadd.f32 0.0, %v3142
        %v3144 = vpop.f32.mrf.mxu0
        %3145 = vmatprep.mubr.f32.mxu0 0.0
        %3146 = vmatmul.mubr.f32.gmra.mxu0 %v2961
        %v3147 = vpop.f32.mrf.mxu0
        %v3148 = vadd.f32 0.0, %v3147
        %v3149 = vpop.f32.mrf.mxu0
        %3150 = vmatprep.mubr.f32.mxu0 0.0
        %3151 = vmatmul.mubr.f32.gmra.mxu0 %v2964
        %v3152 = vpop.f32.mrf.mxu0
        %v3153 = vadd.f32 0.0, %v3152
        %v3154 = vpop.f32.mrf.mxu0
        %3155 = vmatprep.mubr.f32.mxu0 0.0
        %3156 = vmatmul.mubr.f32.gmra.mxu0 %v2967
        %v3157 = vpop.f32.mrf.mxu0
        %v3158 = vadd.f32 0.0, %v3157
        %v3159 = vpop.f32.mrf.mxu0
        %3160 = vmatprep.mubr.f32.mxu0 0.0
        %3161 = vmatmul.mubr.f32.gmra.mxu0 %v2970
        %v3162 = vpop.f32.mrf.mxu0
        %v3163 = vadd.f32 0.0, %v3162
        %v3164 = vpop.f32.mrf.mxu0
        %3165 = vmatprep.mubr.f32.mxu0 0.0
        %3166 = vmatmul.mubr.f32.gmra.mxu0 %v2973
        %v3167 = vpop.f32.mrf.mxu0
        %v3168 = vadd.f32 0.0, %v3167
        %v3169 = vpop.f32.mrf.mxu0
        %3170 = vmatprep.mubr.f32.mxu0 0.0
        %3171 = vmatmul.mubr.f32.gmra.mxu0 %v2976
        %v3172 = vpop.f32.mrf.mxu0
        %v3173 = vadd.f32 0.0, %v3172
        %v3174 = vpop.f32.mrf.mxu0
        %3175 = vmatprep.mubr.f32.mxu0 0.0
        %3176 = vmatmul.mubr.f32.gmra.mxu0 %v2979
        %v3177 = vpop.f32.mrf.mxu0
        %v3178 = vadd.f32 0.0, %v3177
        %v3179 = vpop.f32.mrf.mxu0
        %3180 = vmatprep.mubr.f32.mxu0 0.0
        %3181 = vmatmul.mubr.f32.gmra.mxu0 %v2982
        %v3182 = vpop.f32.mrf.mxu0
        %v3183 = vadd.f32 0.0, %v3182
        %v3184 = vpop.f32.mrf.mxu0
        %3185 = vmatprep.mubr.f32.mxu0 0.0
        %3186 = vmatmul.mubr.f32.gmra.mxu0 %v2985
        %v3187 = vpop.f32.mrf.mxu0
        %v3188 = vadd.f32 0.0, %v3187
        %v3189 = vpop.f32.mrf.mxu0
        %3190 = vmatprep.mubr.f32.mxu0 0.0
        %3191 = vmatmul.mubr.f32.gmra.mxu0 %v2988
        %v3192 = vpop.f32.mrf.mxu0
        %v3193 = vadd.f32 0.0, %v3192
        %v3194 = vpop.f32.mrf.mxu0
        %3195 = vmatprep.mubr.f32.mxu0 0.0
        %3196 = vmatmul.mubr.f32.gmra.mxu0 %v2991
        %v3197 = vpop.f32.mrf.mxu0
        %v3198 = vadd.f32 0.0, %v3197
        %v3199 = vpop.f32.mrf.mxu0
        %3200 = vmatprep.mubr.f32.mxu0 0.0
        %3201 = vmatmul.mubr.f32.gmra.mxu0 %v2994
        %v3202 = vpop.f32.mrf.mxu0
        %v3203 = vadd.f32 0.0, %v3202
        %v3204 = vpop.f32.mrf.mxu0
        %3205 = vmatprep.mubr.f32.mxu0 0.0
        %3206 = vmatmul.mubr.f32.gmra.mxu0 %v2997
        %v3207 = vpop.f32.mrf.mxu0
        %v3208 = vadd.f32 0.0, %v3207
        %v3209 = vpop.f32.mrf.mxu0
        %3210 = vmatprep.mubr.f32.mxu0 0.0
        %3211 = vmatmul.mubr.f32.gmra.mxu0 %v3000
        %v3212 = vpop.f32.mrf.mxu0
        %v3213 = vadd.f32 0.0, %v3212
        %v3214 = vpop.f32.mrf.mxu0
        %3215 = vmatprep.mubr.f32.mxu0 0.0
        %3216 = vmatmul.mubr.f32.gmra.mxu0 %v3003
        %v3217 = vpop.f32.mrf.mxu0
        %v3218 = vadd.f32 0.0, %v3217
        %v3219 = vpop.f32.mrf.mxu0
        %3220 = vmatprep.mubr.f32.mxu0 0.0
        %3221 = vmatmul.mubr.f32.gmra.mxu0 %v3006
        %v3222 = vpop.f32.mrf.mxu0
        %v3223 = vadd.f32 0.0, %v3222
        %v3224 = vpop.f32.mrf.mxu0
        %3225 = vmatprep.mubr.f32.mxu0 0.0
        %3226 = vmatmul.mubr.f32.gmra.mxu0 %v3009
        %v3227 = vpop.f32.mrf.mxu0
        %v3228 = vadd.f32 0.0, %v3227
        %v3229 = vpop.f32.mrf.mxu0
        %3230 = vmatprep.mubr.f32.mxu0 0.0
        %3231 = vmatmul.mubr.f32.gmra.mxu0 %v3012
        %v3232 = vpop.f32.mrf.mxu0
        %v3233 = vadd.f32 0.0, %v3232
        %v3234 = vpop.f32.mrf.mxu0
        %3235 = vmatprep.mubr.f32.mxu0 0.0
        %3236 = vmatmul.mubr.f32.gmra.mxu0 %v3015
        %v3237 = vpop.f32.mrf.mxu0
        %v3238 = vadd.f32 0.0, %v3237
        %v3239 = vpop.f32.mrf.mxu0
        %3240 = vmatprep.mubr.f32.mxu0 0.0
        %3241 = vmatmul.mubr.f32.gmra.mxu0 %v3018
        %v3242 = vpop.f32.mrf.mxu0
        %v3243 = vadd.f32 0.0, %v3242
        %v3244 = vpop.f32.mrf.mxu0
        %3245 = vmatprep.mubr.f32.mxu0 0.0
        %3246 = vmatmul.mubr.f32.gmra.mxu0 %v3021
        %v3247 = vpop.f32.mrf.mxu0
        %v3248 = vadd.f32 0.0, %v3247
        %v3249 = vpop.f32.mrf.mxu0
        %3250 = vmatprep.mubr.f32.mxu0 0.0
        %3251 = vmatmul.mubr.f32.gmra.mxu0 %v3024
        %v3252 = vpop.f32.mrf.mxu0
        %v3253 = vadd.f32 0.0, %v3252
        %v3254 = vpop.f32.mrf.mxu0
        %3255 = vmatprep.mubr.f32.mxu0 0.0
        %3256 = vmatmul.mubr.f32.gmra.mxu0 %v3027
        %v3257 = vpop.f32.mrf.mxu0
        %v3258 = vadd.f32 0.0, %v3257
        %v3259 = vpop.f32.mrf.mxu0
        %3260 = vmatprep.mubr.f32.mxu0 0.0
        %3261 = vmatmul.mubr.f32.gmra.mxu0 %v3030
        %v3262 = vpop.f32.mrf.mxu0
        %v3263 = vadd.f32 0.0, %v3262
        %v3264 = vpop.f32.mrf.mxu0
        %3265 = vmatprep.mubr.f32.mxu0 0.0
        %3266 = vmatmul.mubr.f32.gmra.mxu0 %v3033
        %v3267 = vpop.f32.mrf.mxu0
        %v3268 = vadd.f32 0.0, %v3267
        %v3269 = vpop.f32.mrf.mxu0
        %3270 = vmatprep.mubr.f32.mxu0 0.0
        %3271 = vmatmul.mubr.f32.gmra.mxu0 %v3036
        %v3272 = vpop.f32.mrf.mxu0
        %v3273 = vadd.f32 0.0, %v3272
        %v3274 = vpop.f32.mrf.mxu0
        %3275 = vmatprep.mubr.f32.mxu0 0.0
        %3276 = vmatmul.mubr.f32.gmra.mxu0 %v3039
        %v3277 = vpop.f32.mrf.mxu0
        %v3278 = vadd.f32 0.0, %v3277
        %v3279 = vpop.f32.mrf.mxu0
        %3280 = vmatprep.mubr.f32.mxu0 0.0
        %3281 = vmatmul.mubr.f32.gmra.mxu0 %v3042
        %v3282 = vpop.f32.mrf.mxu0
        %v3283 = vadd.f32 0.0, %v3282
        %v3284 = vpop.f32.mrf.mxu0
        %3285 = vmatprep.mubr.f32.mxu0 0.0
        %3286 = vmatmul.mubr.f32.gmra.mxu0 %v3045
        %v3287 = vpop.f32.mrf.mxu0
        %v3288 = vadd.f32 0.0, %v3287
        %v3289 = vpop.f32.mrf.mxu0
        %3290 = vmatprep.mubr.f32.mxu0 0.0
        %3291 = vmatmul.mubr.f32.gmra.mxu0 %v3048
        %v3292 = vpop.f32.mrf.mxu0
        %v3293 = vadd.f32 0.0, %v3292
        %v3294 = vpop.f32.mrf.mxu0
        %3295 = vmatprep.mubr.f32.mxu0 0.0
        %3296 = vmatmul.mubr.f32.gmra.mxu0 %v3051
        %v3297 = vpop.f32.mrf.mxu0
        %v3298 = vadd.f32 0.0, %v3297
        %v3299 = vpop.f32.mrf.mxu0
        %3300 = vdwg.mxu0
        %v3301 = vadd.f32 %v2871, %v3123
        %v3302 = vadd.f32 %v2872, %v3128
        %v3303 = vadd.f32 %v2873, %v3133
        %v3304 = vadd.f32 %v2874, %v3138
        %v3305 = vadd.f32 %v2875, %v3143
        %v3306 = vadd.f32 %v2876, %v3148
        %v3307 = vadd.f32 %v2877, %v3153
        %v3308 = vadd.f32 %v2878, %v3158
        %v3309 = vadd.f32 %v2879, %v3163
        %v3310 = vadd.f32 %v2880, %v3168
        %v3311 = vadd.f32 %v2881, %v3173
        %v3312 = vadd.f32 %v2882, %v3178
        %v3313 = vadd.f32 %v2883, %v3183
        %v3314 = vadd.f32 %v2884, %v3188
        %v3315 = vadd.f32 %v2885, %v3193
        %v3316 = vadd.f32 %v2886, %v3198
        %v3317 = vadd.f32 %v2887, %v3203
        %v3318 = vadd.f32 %v2888, %v3208
        %v3319 = vadd.f32 %v2889, %v3213
        %v3320 = vadd.f32 %v2890, %v3218
        %v3321 = vadd.f32 %v2891, %v3223
        %v3322 = vadd.f32 %v2892, %v3228
        %v3323 = vadd.f32 %v2893, %v3233
        %v3324 = vadd.f32 %v2894, %v3238
        %v3325 = vadd.f32 %v2895, %v3243
        %v3326 = vadd.f32 %v2896, %v3248
        %v3327 = vadd.f32 %v2897, %v3253
        %v3328 = vadd.f32 %v2898, %v3258
        %v3329 = vadd.f32 %v2899, %v3263
        %v3330 = vadd.f32 %v2900, %v3268
        %v3331 = vadd.f32 %v2901, %v3273
        %v3332 = vadd.f32 %v2902, %v3278
        %v3333 = vadd.f32 %v2903, %v3283
        %v3334 = vadd.f32 %v2904, %v3288
        %v3335 = vadd.f32 %v2905, %v3293
        %v3336 = vadd.f32 %v2906, %v3298
        %v3337 = vld [vmem:[#allocation3 + $0x14] sm:$0xff]
        %v3338 = vld [vmem:[#allocation3 + $0x1c] sm:$0xff]
        %v3339 = vld [vmem:[#allocation3 + $0x24] sm:$0xff]
        %v3340 = vld [vmem:[#allocation3 + $0x2c] sm:$0xff]
        %v3341 = vld [vmem:[#allocation3 + $0x34] sm:$0xff]
        %v3342 = vld [vmem:[#allocation3 + $0x3c] sm:$0xff]
        %v3343 = vld [vmem:[#allocation3 + $0x44] sm:$0xff]
        %v3344 = vld [vmem:[#allocation3 + $0x4c] sm:$0xff]
        %v3345 = vld [vmem:[#allocation3 + $0x54] sm:$0xff]
        %v3346 = vld [vmem:[#allocation3 + $0x5c] sm:$0xff]
        %v3347 = vld [vmem:[#allocation3 + $0x64] sm:$0xff]
        %v3348 = vld [vmem:[#allocation3 + $0x6c] sm:$0xff]
        %v3349 = vld [vmem:[#allocation3 + $0x74] sm:$0xff]
        %v3350 = vld [vmem:[#allocation3 + $0x7c] sm:$0xff]
        %v3351 = vld [vmem:[#allocation3 + $0x84] sm:$0xff]
        %v3352 = vld [vmem:[#allocation3 + $0x8c] sm:$0xff]
        %v3353 = vld [vmem:[#allocation3 + $0x94] sm:$0xff]
        %v3354 = vld [vmem:[#allocation3 + $0x9c] sm:$0xff]
        %v3355 = vld [vmem:[#allocation3 + $0xa4] sm:$0xff]
        %v3356 = vld [vmem:[#allocation3 + $0xac] sm:$0xff]
        %v3357 = vld [vmem:[#allocation3 + $0xb4] sm:$0xff]
        %v3358 = vld [vmem:[#allocation3 + $0xbc] sm:$0xff]
        %v3359 = vld [vmem:[#allocation3 + $0xc4] sm:$0xff]
        %v3360 = vld [vmem:[#allocation3 + $0xcc] sm:$0xff]
        %v3361 = vld [vmem:[#allocation3 + $0xd4] sm:$0xff]
        %v3362 = vld [vmem:[#allocation3 + $0xdc] sm:$0xff]
        %v3363 = vld [vmem:[#allocation3 + $0xe4] sm:$0xff]
        %v3364 = vld [vmem:[#allocation3 + $0xec] sm:$0xff]
        %v3365 = vld [vmem:[#allocation3 + $0xf4] sm:$0xff]
        %v3366 = vld [vmem:[#allocation3 + $0xfc] sm:$0xff]
        %v3367 = vld [vmem:[#allocation3 + $0x104] sm:$0xff]
        %v3368 = vld [vmem:[#allocation3 + $0x10c] sm:$0xff]
        %v3369 = vld [vmem:[#allocation3 + $0x114] sm:$0xff]
        %v3370 = vld [vmem:[#allocation3 + $0x11c] sm:$0xff]
        %v3371 = vld [vmem:[#allocation3 + $0x124] sm:$0xff]
        %v3372 = vld [vmem:[#allocation3 + $0x12c] sm:$0x3f]
        %s3373 = scalar_lea.vmem %s4, 20
        %v3374 = vld [vmem:[%s3373] sm:$0xf]
        %v3376 = vsel %vm1216, %v3337, 0
        %v3379 = vsel %vm1216, %v3338, 0
        %v3382 = vsel %vm1216, %v3339, 0
        %v3385 = vsel %vm1216, %v3340, 0
        %v3388 = vsel %vm1216, %v3341, 0
        %v3391 = vsel %vm1216, %v3342, 0
        %v3394 = vsel %vm1216, %v3343, 0
        %v3397 = vsel %vm1216, %v3344, 0
        %v3400 = vsel %vm1216, %v3345, 0
        %v3403 = vsel %vm1216, %v3346, 0
        %v3406 = vsel %vm1216, %v3347, 0
        %v3409 = vsel %vm1216, %v3348, 0
        %v3412 = vsel %vm1216, %v3349, 0
        %v3415 = vsel %vm1216, %v3350, 0
        %v3418 = vsel %vm1216, %v3351, 0
        %v3421 = vsel %vm1216, %v3352, 0
        %v3424 = vsel %vm1216, %v3353, 0
        %v3427 = vsel %vm1216, %v3354, 0
        %v3430 = vsel %vm1216, %v3355, 0
        %v3433 = vsel %vm1216, %v3356, 0
        %v3436 = vsel %vm1216, %v3357, 0
        %v3439 = vsel %vm1216, %v3358, 0
        %v3442 = vsel %vm1216, %v3359, 0
        %v3445 = vsel %vm1216, %v3360, 0
        %v3448 = vsel %vm1216, %v3361, 0
        %v3451 = vsel %vm1216, %v3362, 0
        %v3454 = vsel %vm1216, %v3363, 0
        %v3457 = vsel %vm1216, %v3364, 0
        %v3460 = vsel %vm1216, %v3365, 0
        %v3463 = vsel %vm1216, %v3366, 0
        %v3466 = vsel %vm1216, %v3367, 0
        %v3469 = vsel %vm1216, %v3368, 0
        %v3472 = vsel %vm1216, %v3369, 0
        %v3475 = vsel %vm1216, %v3370, 0
        %v3478 = vsel %vm1216, %v3371, 0
        %v3481 = vsel %vm1216, %v3372, 0
        %v3484 = vsel %vm1442, %v3374, 0
        %3486 = vmatprep.subr.mxu0 0.0
        %3487 = vmatpush1.msra.mxu0 0.0
        %3488 = vmatprep.subr.mxu0 0.0
        %3489 = vmatpush1.msra.mxu0 0.0
        %3490 = vmatprep.subr.mxu0 0.0
        %3491 = vmatpush1.msra.mxu0 0.0
        %3492 = vmatprep.subr.mxu0 0.0
        %3493 = vmatpush1.msra.mxu0 0.0
        %3494 = vmatprep.subr.mxu0 0.0
        %3495 = vmatpush1.msra.mxu0 0.0
        %3496 = vmatprep.subr.mxu0 0.0
        %3497 = vmatpush1.msra.mxu0 0.0
        %3498 = vmatprep.subr.mxu0 0.0
        %3499 = vmatpush1.msra.mxu0 0.0
        %3500 = vmatprep.subr.mxu0 0.0
        %3501 = vmatpush1.msra.mxu0 0.0
        %3502 = vmatprep.subr.mxu0 0.0
        %3503 = vmatpush1.msra.mxu0 0.0
        %3504 = vmatprep.subr.mxu0 0.0
        %3505 = vmatpush1.msra.mxu0 0.0
        %3506 = vmatprep.subr.mxu0 0.0
        %3507 = vmatpush1.msra.mxu0 0.0
        %3508 = vmatprep.subr.mxu0 0.0
        %3509 = vmatpush1.msra.mxu0 0.0
        %3510 = vmatprep.subr.mxu0 0.0
        %3511 = vmatpush1.msra.mxu0 0.0
        %3512 = vmatprep.subr.mxu0 0.0
        %3513 = vmatpush1.msra.mxu0 0.0
        %3514 = vmatprep.subr.mxu0 0.0
        %3515 = vmatpush1.msra.mxu0 0.0
        %3516 = vmatprep.subr.mxu0 0.0
        %3517 = vmatpush1.msra.mxu0 %v3484
        %3518 = vmatprep.subr.mxu0 0.0
        %3519 = vmatpush2.msra.mxu0 0.0
        %3520 = vmatprep.subr.mxu0 0.0
        %3521 = vmatpush2.msra.mxu0 0.0
        %3522 = vmatprep.subr.mxu0 0.0
        %3523 = vmatpush2.msra.mxu0 0.0
        %3524 = vmatprep.subr.mxu0 0.0
        %3525 = vmatpush2.msra.mxu0 0.0
        %3526 = vmatprep.subr.mxu0 0.0
        %3527 = vmatpush2.msra.mxu0 0.0
        %3528 = vmatprep.subr.mxu0 0.0
        %3529 = vmatpush2.msra.mxu0 0.0
        %3530 = vmatprep.subr.mxu0 0.0
        %3531 = vmatpush2.msra.mxu0 0.0
        %3532 = vmatprep.subr.mxu0 0.0
        %3533 = vmatpush2.msra.mxu0 0.0
        %3534 = vmatprep.subr.mxu0 0.0
        %3535 = vmatpush2.msra.mxu0 0.0
        %3536 = vmatprep.subr.mxu0 0.0
        %3537 = vmatpush2.msra.mxu0 0.0
        %3538 = vmatprep.subr.mxu0 0.0
        %3539 = vmatpush2.msra.mxu0 0.0
        %3540 = vmatprep.subr.mxu0 0.0
        %3541 = vmatpush2.msra.mxu0 0.0
        %3542 = vmatprep.subr.mxu0 0.0
        %3543 = vmatpush2.msra.mxu0 0.0
        %3544 = vmatprep.subr.mxu0 0.0
        %3545 = vmatpush2.msra.mxu0 0.0
        %3546 = vmatprep.subr.mxu0 0.0
        %3547 = vmatpush2.msra.mxu0 0.0
        %3548 = vmatprep.subr.mxu0 0.0
        %3549 = vmatpush2.msra.mxu0 0.0
        %3550 = vmatprep.mubr.f32.mxu0 0.0
        %3551 = vmatmul.mubr.f32.gmra.mxu0 %v3376
        %v3552 = vpop.f32.mrf.mxu0
        %v3553 = vadd.f32 0.0, %v3552
        %v3554 = vpop.f32.mrf.mxu0
        %3555 = vmatprep.mubr.f32.mxu0 0.0
        %3556 = vmatmul.mubr.f32.gmra.mxu0 %v3379
        %v3557 = vpop.f32.mrf.mxu0
        %v3558 = vadd.f32 0.0, %v3557
        %v3559 = vpop.f32.mrf.mxu0
        %3560 = vmatprep.mubr.f32.mxu0 0.0
        %3561 = vmatmul.mubr.f32.gmra.mxu0 %v3382
        %v3562 = vpop.f32.mrf.mxu0
        %v3563 = vadd.f32 0.0, %v3562
        %v3564 = vpop.f32.mrf.mxu0
        %3565 = vmatprep.mubr.f32.mxu0 0.0
        %3566 = vmatmul.mubr.f32.gmra.mxu0 %v3385
        %v3567 = vpop.f32.mrf.mxu0
        %v3568 = vadd.f32 0.0, %v3567
        %v3569 = vpop.f32.mrf.mxu0
        %3570 = vmatprep.mubr.f32.mxu0 0.0
        %3571 = vmatmul.mubr.f32.gmra.mxu0 %v3388
        %v3572 = vpop.f32.mrf.mxu0
        %v3573 = vadd.f32 0.0, %v3572
        %v3574 = vpop.f32.mrf.mxu0
        %3575 = vmatprep.mubr.f32.mxu0 0.0
        %3576 = vmatmul.mubr.f32.gmra.mxu0 %v3391
        %v3577 = vpop.f32.mrf.mxu0
        %v3578 = vadd.f32 0.0, %v3577
        %v3579 = vpop.f32.mrf.mxu0
        %3580 = vmatprep.mubr.f32.mxu0 0.0
        %3581 = vmatmul.mubr.f32.gmra.mxu0 %v3394
        %v3582 = vpop.f32.mrf.mxu0
        %v3583 = vadd.f32 0.0, %v3582
        %v3584 = vpop.f32.mrf.mxu0
        %3585 = vmatprep.mubr.f32.mxu0 0.0
        %3586 = vmatmul.mubr.f32.gmra.mxu0 %v3397
        %v3587 = vpop.f32.mrf.mxu0
        %v3588 = vadd.f32 0.0, %v3587
        %v3589 = vpop.f32.mrf.mxu0
        %3590 = vmatprep.mubr.f32.mxu0 0.0
        %3591 = vmatmul.mubr.f32.gmra.mxu0 %v3400
        %v3592 = vpop.f32.mrf.mxu0
        %v3593 = vadd.f32 0.0, %v3592
        %v3594 = vpop.f32.mrf.mxu0
        %3595 = vmatprep.mubr.f32.mxu0 0.0
        %3596 = vmatmul.mubr.f32.gmra.mxu0 %v3403
        %v3597 = vpop.f32.mrf.mxu0
        %v3598 = vadd.f32 0.0, %v3597
        %v3599 = vpop.f32.mrf.mxu0
        %3600 = vmatprep.mubr.f32.mxu0 0.0
        %3601 = vmatmul.mubr.f32.gmra.mxu0 %v3406
        %v3602 = vpop.f32.mrf.mxu0
        %v3603 = vadd.f32 0.0, %v3602
        %v3604 = vpop.f32.mrf.mxu0
        %3605 = vmatprep.mubr.f32.mxu0 0.0
        %3606 = vmatmul.mubr.f32.gmra.mxu0 %v3409
        %v3607 = vpop.f32.mrf.mxu0
        %v3608 = vadd.f32 0.0, %v3607
        %v3609 = vpop.f32.mrf.mxu0
        %3610 = vmatprep.mubr.f32.mxu0 0.0
        %3611 = vmatmul.mubr.f32.gmra.mxu0 %v3412
        %v3612 = vpop.f32.mrf.mxu0
        %v3613 = vadd.f32 0.0, %v3612
        %v3614 = vpop.f32.mrf.mxu0
        %3615 = vmatprep.mubr.f32.mxu0 0.0
        %3616 = vmatmul.mubr.f32.gmra.mxu0 %v3415
        %v3617 = vpop.f32.mrf.mxu0
        %v3618 = vadd.f32 0.0, %v3617
        %v3619 = vpop.f32.mrf.mxu0
        %3620 = vmatprep.mubr.f32.mxu0 0.0
        %3621 = vmatmul.mubr.f32.gmra.mxu0 %v3418
        %v3622 = vpop.f32.mrf.mxu0
        %v3623 = vadd.f32 0.0, %v3622
        %v3624 = vpop.f32.mrf.mxu0
        %3625 = vmatprep.mubr.f32.mxu0 0.0
        %3626 = vmatmul.mubr.f32.gmra.mxu0 %v3421
        %v3627 = vpop.f32.mrf.mxu0
        %v3628 = vadd.f32 0.0, %v3627
        %v3629 = vpop.f32.mrf.mxu0
        %3630 = vmatprep.mubr.f32.mxu0 0.0
        %3631 = vmatmul.mubr.f32.gmra.mxu0 %v3424
        %v3632 = vpop.f32.mrf.mxu0
        %v3633 = vadd.f32 0.0, %v3632
        %v3634 = vpop.f32.mrf.mxu0
        %3635 = vmatprep.mubr.f32.mxu0 0.0
        %3636 = vmatmul.mubr.f32.gmra.mxu0 %v3427
        %v3637 = vpop.f32.mrf.mxu0
        %v3638 = vadd.f32 0.0, %v3637
        %v3639 = vpop.f32.mrf.mxu0
        %3640 = vmatprep.mubr.f32.mxu0 0.0
        %3641 = vmatmul.mubr.f32.gmra.mxu0 %v3430
        %v3642 = vpop.f32.mrf.mxu0
        %v3643 = vadd.f32 0.0, %v3642
        %v3644 = vpop.f32.mrf.mxu0
        %3645 = vmatprep.mubr.f32.mxu0 0.0
        %3646 = vmatmul.mubr.f32.gmra.mxu0 %v3433
        %v3647 = vpop.f32.mrf.mxu0
        %v3648 = vadd.f32 0.0, %v3647
        %v3649 = vpop.f32.mrf.mxu0
        %3650 = vmatprep.mubr.f32.mxu0 0.0
        %3651 = vmatmul.mubr.f32.gmra.mxu0 %v3436
        %v3652 = vpop.f32.mrf.mxu0
        %v3653 = vadd.f32 0.0, %v3652
        %v3654 = vpop.f32.mrf.mxu0
        %3655 = vmatprep.mubr.f32.mxu0 0.0
        %3656 = vmatmul.mubr.f32.gmra.mxu0 %v3439
        %v3657 = vpop.f32.mrf.mxu0
        %v3658 = vadd.f32 0.0, %v3657
        %v3659 = vpop.f32.mrf.mxu0
        %3660 = vmatprep.mubr.f32.mxu0 0.0
        %3661 = vmatmul.mubr.f32.gmra.mxu0 %v3442
        %v3662 = vpop.f32.mrf.mxu0
        %v3663 = vadd.f32 0.0, %v3662
        %v3664 = vpop.f32.mrf.mxu0
        %3665 = vmatprep.mubr.f32.mxu0 0.0
        %3666 = vmatmul.mubr.f32.gmra.mxu0 %v3445
        %v3667 = vpop.f32.mrf.mxu0
        %v3668 = vadd.f32 0.0, %v3667
        %v3669 = vpop.f32.mrf.mxu0
        %3670 = vmatprep.mubr.f32.mxu0 0.0
        %3671 = vmatmul.mubr.f32.gmra.mxu0 %v3448
        %v3672 = vpop.f32.mrf.mxu0
        %v3673 = vadd.f32 0.0, %v3672
        %v3674 = vpop.f32.mrf.mxu0
        %3675 = vmatprep.mubr.f32.mxu0 0.0
        %3676 = vmatmul.mubr.f32.gmra.mxu0 %v3451
        %v3677 = vpop.f32.mrf.mxu0
        %v3678 = vadd.f32 0.0, %v3677
        %v3679 = vpop.f32.mrf.mxu0
        %3680 = vmatprep.mubr.f32.mxu0 0.0
        %3681 = vmatmul.mubr.f32.gmra.mxu0 %v3454
        %v3682 = vpop.f32.mrf.mxu0
        %v3683 = vadd.f32 0.0, %v3682
        %v3684 = vpop.f32.mrf.mxu0
        %3685 = vmatprep.mubr.f32.mxu0 0.0
        %3686 = vmatmul.mubr.f32.gmra.mxu0 %v3457
        %v3687 = vpop.f32.mrf.mxu0
        %v3688 = vadd.f32 0.0, %v3687
        %v3689 = vpop.f32.mrf.mxu0
        %3690 = vmatprep.mubr.f32.mxu0 0.0
        %3691 = vmatmul.mubr.f32.gmra.mxu0 %v3460
        %v3692 = vpop.f32.mrf.mxu0
        %v3693 = vadd.f32 0.0, %v3692
        %v3694 = vpop.f32.mrf.mxu0
        %3695 = vmatprep.mubr.f32.mxu0 0.0
        %3696 = vmatmul.mubr.f32.gmra.mxu0 %v3463
        %v3697 = vpop.f32.mrf.mxu0
        %v3698 = vadd.f32 0.0, %v3697
        %v3699 = vpop.f32.mrf.mxu0
        %3700 = vmatprep.mubr.f32.mxu0 0.0
        %3701 = vmatmul.mubr.f32.gmra.mxu0 %v3466
        %v3702 = vpop.f32.mrf.mxu0
        %v3703 = vadd.f32 0.0, %v3702
        %v3704 = vpop.f32.mrf.mxu0
        %3705 = vmatprep.mubr.f32.mxu0 0.0
        %3706 = vmatmul.mubr.f32.gmra.mxu0 %v3469
        %v3707 = vpop.f32.mrf.mxu0
        %v3708 = vadd.f32 0.0, %v3707
        %v3709 = vpop.f32.mrf.mxu0
        %3710 = vmatprep.mubr.f32.mxu0 0.0
        %3711 = vmatmul.mubr.f32.gmra.mxu0 %v3472
        %v3712 = vpop.f32.mrf.mxu0
        %v3713 = vadd.f32 0.0, %v3712
        %v3714 = vpop.f32.mrf.mxu0
        %3715 = vmatprep.mubr.f32.mxu0 0.0
        %3716 = vmatmul.mubr.f32.gmra.mxu0 %v3475
        %v3717 = vpop.f32.mrf.mxu0
        %v3718 = vadd.f32 0.0, %v3717
        %v3719 = vpop.f32.mrf.mxu0
        %3720 = vmatprep.mubr.f32.mxu0 0.0
        %3721 = vmatmul.mubr.f32.gmra.mxu0 %v3478
        %v3722 = vpop.f32.mrf.mxu0
        %v3723 = vadd.f32 0.0, %v3722
        %v3724 = vpop.f32.mrf.mxu0
        %3725 = vmatprep.mubr.f32.mxu0 0.0
        %3726 = vmatmul.mubr.f32.gmra.mxu0 %v3481
        %v3727 = vpop.f32.mrf.mxu0
        %v3728 = vadd.f32 0.0, %v3727
        %v3729 = vpop.f32.mrf.mxu0
        %3730 = vdwg.mxu0
        %v3731 = vadd.f32 %v3301, %v3553
        %v3732 = vadd.f32 %v3302, %v3558
        %v3733 = vadd.f32 %v3303, %v3563
        %v3734 = vadd.f32 %v3304, %v3568
        %v3735 = vadd.f32 %v3305, %v3573
        %v3736 = vadd.f32 %v3306, %v3578
        %v3737 = vadd.f32 %v3307, %v3583
        %v3738 = vadd.f32 %v3308, %v3588
        %v3739 = vadd.f32 %v3309, %v3593
        %v3740 = vadd.f32 %v3310, %v3598
        %v3741 = vadd.f32 %v3311, %v3603
        %v3742 = vadd.f32 %v3312, %v3608
        %v3743 = vadd.f32 %v3313, %v3613
        %v3744 = vadd.f32 %v3314, %v3618
        %v3745 = vadd.f32 %v3315, %v3623
        %v3746 = vadd.f32 %v3316, %v3628
        %v3747 = vadd.f32 %v3317, %v3633
        %v3748 = vadd.f32 %v3318, %v3638
        %v3749 = vadd.f32 %v3319, %v3643
        %v3750 = vadd.f32 %v3320, %v3648
        %v3751 = vadd.f32 %v3321, %v3653
        %v3752 = vadd.f32 %v3322, %v3658
        %v3753 = vadd.f32 %v3323, %v3663
        %v3754 = vadd.f32 %v3324, %v3668
        %v3755 = vadd.f32 %v3325, %v3673
        %v3756 = vadd.f32 %v3326, %v3678
        %v3757 = vadd.f32 %v3327, %v3683
        %v3758 = vadd.f32 %v3328, %v3688
        %v3759 = vadd.f32 %v3329, %v3693
        %v3760 = vadd.f32 %v3330, %v3698
        %v3761 = vadd.f32 %v3331, %v3703
        %v3762 = vadd.f32 %v3332, %v3708
        %v3763 = vadd.f32 %v3333, %v3713
        %v3764 = vadd.f32 %v3334, %v3718
        %v3765 = vadd.f32 %v3335, %v3723
        %v3766 = vadd.f32 %v3336, %v3728
        %v3767 = vld [vmem:[#allocation3 + $0x24] sm:$0xff]
        %v3768 = vld [vmem:[#allocation3 + $0x2c] sm:$0xff]
        %v3769 = vld [vmem:[#allocation3 + $0x34] sm:$0xff]
        %v3770 = vld [vmem:[#allocation3 + $0x3c] sm:$0xff]
        %v3771 = vld [vmem:[#allocation3 + $0x44] sm:$0xff]
        %v3772 = vld [vmem:[#allocation3 + $0x4c] sm:$0xff]
        %v3773 = vld [vmem:[#allocation3 + $0x54] sm:$0xff]
        %v3774 = vld [vmem:[#allocation3 + $0x5c] sm:$0xff]
        %v3775 = vld [vmem:[#allocation3 + $0x64] sm:$0xff]
        %v3776 = vld [vmem:[#allocation3 + $0x6c] sm:$0xff]
        %v3777 = vld [vmem:[#allocation3 + $0x74] sm:$0xff]
        %v3778 = vld [vmem:[#allocation3 + $0x7c] sm:$0xff]
        %v3779 = vld [vmem:[#allocation3 + $0x84] sm:$0xff]
        %v3780 = vld [vmem:[#allocation3 + $0x8c] sm:$0xff]
        %v3781 = vld [vmem:[#allocation3 + $0x94] sm:$0xff]
        %v3782 = vld [vmem:[#allocation3 + $0x9c] sm:$0xff]
        %v3783 = vld [vmem:[#allocation3 + $0xa4] sm:$0xff]
        %v3784 = vld [vmem:[#allocation3 + $0xac] sm:$0xff]
        %v3785 = vld [vmem:[#allocation3 + $0xb4] sm:$0xff]
        %v3786 = vld [vmem:[#allocation3 + $0xbc] sm:$0xff]
        %v3787 = vld [vmem:[#allocation3 + $0xc4] sm:$0xff]
        %v3788 = vld [vmem:[#allocation3 + $0xcc] sm:$0xff]
        %v3789 = vld [vmem:[#allocation3 + $0xd4] sm:$0xff]
        %v3790 = vld [vmem:[#allocation3 + $0xdc] sm:$0xff]
        %v3791 = vld [vmem:[#allocation3 + $0xe4] sm:$0xff]
        %v3792 = vld [vmem:[#allocation3 + $0xec] sm:$0xff]
        %v3793 = vld [vmem:[#allocation3 + $0xf4] sm:$0xff]
        %v3794 = vld [vmem:[#allocation3 + $0xfc] sm:$0xff]
        %v3795 = vld [vmem:[#allocation3 + $0x104] sm:$0xff]
        %v3796 = vld [vmem:[#allocation3 + $0x10c] sm:$0xff]
        %v3797 = vld [vmem:[#allocation3 + $0x114] sm:$0xff]
        %v3798 = vld [vmem:[#allocation3 + $0x11c] sm:$0xff]
        %v3799 = vld [vmem:[#allocation3 + $0x124] sm:$0xff]
        %v3800 = vld [vmem:[#allocation3 + $0x12c] sm:$0xff]
        %v3801 = vld [vmem:[#allocation3 + $0x134] sm:$0xff]
        %v3802 = vld [vmem:[#allocation3 + $0x13c] sm:$0x3f]
        %s3803 = scalar_lea.vmem %s4, 24
        %v3804 = vld [vmem:[%s3803] sm:$0xf]
        %v3806 = vsel %vm1216, %v3767, 0
        %v3809 = vsel %vm1216, %v3768, 0
        %v3812 = vsel %vm1216, %v3769, 0
        %v3815 = vsel %vm1216, %v3770, 0
        %v3818 = vsel %vm1216, %v3771, 0
        %v3821 = vsel %vm1216, %v3772, 0
        %v3824 = vsel %vm1216, %v3773, 0
        %v3827 = vsel %vm1216, %v3774, 0
        %v3830 = vsel %vm1216, %v3775, 0
        %v3833 = vsel %vm1216, %v3776, 0
        %v3836 = vsel %vm1216, %v3777, 0
        %v3839 = vsel %vm1216, %v3778, 0
        %v3842 = vsel %vm1216, %v3779, 0
        %v3845 = vsel %vm1216, %v3780, 0
        %v3848 = vsel %vm1216, %v3781, 0
        %v3851 = vsel %vm1216, %v3782, 0
        %v3854 = vsel %vm1216, %v3783, 0
        %v3857 = vsel %vm1216, %v3784, 0
        %v3860 = vsel %vm1216, %v3785, 0
        %v3863 = vsel %vm1216, %v3786, 0
        %v3866 = vsel %vm1216, %v3787, 0
        %v3869 = vsel %vm1216, %v3788, 0
        %v3872 = vsel %vm1216, %v3789, 0
        %v3875 = vsel %vm1216, %v3790, 0
        %v3878 = vsel %vm1216, %v3791, 0
        %v3881 = vsel %vm1216, %v3792, 0
        %v3884 = vsel %vm1216, %v3793, 0
        %v3887 = vsel %vm1216, %v3794, 0
        %v3890 = vsel %vm1216, %v3795, 0
        %v3893 = vsel %vm1216, %v3796, 0
        %v3896 = vsel %vm1216, %v3797, 0
        %v3899 = vsel %vm1216, %v3798, 0
        %v3902 = vsel %vm1216, %v3799, 0
        %v3905 = vsel %vm1216, %v3800, 0
        %v3908 = vsel %vm1216, %v3801, 0
        %v3911 = vsel %vm1216, %v3802, 0
        %v3914 = vsel %vm1442, %v3804, 0
        %3916 = vmatprep.subr.mxu0 0.0
        %3917 = vmatpush1.msra.mxu0 0.0
        %3918 = vmatprep.subr.mxu0 0.0
        %3919 = vmatpush1.msra.mxu0 0.0
        %3920 = vmatprep.subr.mxu0 0.0
        %3921 = vmatpush1.msra.mxu0 0.0
        %3922 = vmatprep.subr.mxu0 0.0
        %3923 = vmatpush1.msra.mxu0 0.0
        %3924 = vmatprep.subr.mxu0 0.0
        %3925 = vmatpush1.msra.mxu0 0.0
        %3926 = vmatprep.subr.mxu0 0.0
        %3927 = vmatpush1.msra.mxu0 0.0
        %3928 = vmatprep.subr.mxu0 0.0
        %3929 = vmatpush1.msra.mxu0 0.0
        %3930 = vmatprep.subr.mxu0 0.0
        %3931 = vmatpush1.msra.mxu0 0.0
        %3932 = vmatprep.subr.mxu0 0.0
        %3933 = vmatpush1.msra.mxu0 0.0
        %3934 = vmatprep.subr.mxu0 0.0
        %3935 = vmatpush1.msra.mxu0 0.0
        %3936 = vmatprep.subr.mxu0 0.0
        %3937 = vmatpush1.msra.mxu0 0.0
        %3938 = vmatprep.subr.mxu0 0.0
        %3939 = vmatpush1.msra.mxu0 0.0
        %3940 = vmatprep.subr.mxu0 0.0
        %3941 = vmatpush1.msra.mxu0 0.0
        %3942 = vmatprep.subr.mxu0 0.0
        %3943 = vmatpush1.msra.mxu0 0.0
        %3944 = vmatprep.subr.mxu0 0.0
        %3945 = vmatpush1.msra.mxu0 0.0
        %3946 = vmatprep.subr.mxu0 0.0
        %3947 = vmatpush1.msra.mxu0 %v3914
        %3948 = vmatprep.subr.mxu0 0.0
        %3949 = vmatpush2.msra.mxu0 0.0
        %3950 = vmatprep.subr.mxu0 0.0
        %3951 = vmatpush2.msra.mxu0 0.0
        %3952 = vmatprep.subr.mxu0 0.0
        %3953 = vmatpush2.msra.mxu0 0.0
        %3954 = vmatprep.subr.mxu0 0.0
        %3955 = vmatpush2.msra.mxu0 0.0
        %3956 = vmatprep.subr.mxu0 0.0
        %3957 = vmatpush2.msra.mxu0 0.0
        %3958 = vmatprep.subr.mxu0 0.0
        %3959 = vmatpush2.msra.mxu0 0.0
        %3960 = vmatprep.subr.mxu0 0.0
        %3961 = vmatpush2.msra.mxu0 0.0
        %3962 = vmatprep.subr.mxu0 0.0
        %3963 = vmatpush2.msra.mxu0 0.0
        %3964 = vmatprep.subr.mxu0 0.0
        %3965 = vmatpush2.msra.mxu0 0.0
        %3966 = vmatprep.subr.mxu0 0.0
        %3967 = vmatpush2.msra.mxu0 0.0
        %3968 = vmatprep.subr.mxu0 0.0
        %3969 = vmatpush2.msra.mxu0 0.0
        %3970 = vmatprep.subr.mxu0 0.0
        %3971 = vmatpush2.msra.mxu0 0.0
        %3972 = vmatprep.subr.mxu0 0.0
        %3973 = vmatpush2.msra.mxu0 0.0
        %3974 = vmatprep.subr.mxu0 0.0
        %3975 = vmatpush2.msra.mxu0 0.0
        %3976 = vmatprep.subr.mxu0 0.0
        %3977 = vmatpush2.msra.mxu0 0.0
        %3978 = vmatprep.subr.mxu0 0.0
        %3979 = vmatpush2.msra.mxu0 0.0
        %3980 = vmatprep.mubr.f32.mxu0 0.0
        %3981 = vmatmul.mubr.f32.gmra.mxu0 %v3806
        %v3982 = vpop.f32.mrf.mxu0
        %v3983 = vadd.f32 0.0, %v3982
        %v3984 = vpop.f32.mrf.mxu0
        %3985 = vmatprep.mubr.f32.mxu0 0.0
        %3986 = vmatmul.mubr.f32.gmra.mxu0 %v3809
        %v3987 = vpop.f32.mrf.mxu0
        %v3988 = vadd.f32 0.0, %v3987
        %v3989 = vpop.f32.mrf.mxu0
        %3990 = vmatprep.mubr.f32.mxu0 0.0
        %3991 = vmatmul.mubr.f32.gmra.mxu0 %v3812
        %v3992 = vpop.f32.mrf.mxu0
        %v3993 = vadd.f32 0.0, %v3992
        %v3994 = vpop.f32.mrf.mxu0
        %3995 = vmatprep.mubr.f32.mxu0 0.0
        %3996 = vmatmul.mubr.f32.gmra.mxu0 %v3815
        %v3997 = vpop.f32.mrf.mxu0
        %v3998 = vadd.f32 0.0, %v3997
        %v3999 = vpop.f32.mrf.mxu0
        %4000 = vmatprep.mubr.f32.mxu0 0.0
        %4001 = vmatmul.mubr.f32.gmra.mxu0 %v3818
        %v4002 = vpop.f32.mrf.mxu0
        %v4003 = vadd.f32 0.0, %v4002
        %v4004 = vpop.f32.mrf.mxu0
        %4005 = vmatprep.mubr.f32.mxu0 0.0
        %4006 = vmatmul.mubr.f32.gmra.mxu0 %v3821
        %v4007 = vpop.f32.mrf.mxu0
        %v4008 = vadd.f32 0.0, %v4007
        %v4009 = vpop.f32.mrf.mxu0
        %4010 = vmatprep.mubr.f32.mxu0 0.0
        %4011 = vmatmul.mubr.f32.gmra.mxu0 %v3824
        %v4012 = vpop.f32.mrf.mxu0
        %v4013 = vadd.f32 0.0, %v4012
        %v4014 = vpop.f32.mrf.mxu0
        %4015 = vmatprep.mubr.f32.mxu0 0.0
        %4016 = vmatmul.mubr.f32.gmra.mxu0 %v3827
        %v4017 = vpop.f32.mrf.mxu0
        %v4018 = vadd.f32 0.0, %v4017
        %v4019 = vpop.f32.mrf.mxu0
        %4020 = vmatprep.mubr.f32.mxu0 0.0
        %4021 = vmatmul.mubr.f32.gmra.mxu0 %v3830
        %v4022 = vpop.f32.mrf.mxu0
        %v4023 = vadd.f32 0.0, %v4022
        %v4024 = vpop.f32.mrf.mxu0
        %4025 = vmatprep.mubr.f32.mxu0 0.0
        %4026 = vmatmul.mubr.f32.gmra.mxu0 %v3833
        %v4027 = vpop.f32.mrf.mxu0
        %v4028 = vadd.f32 0.0, %v4027
        %v4029 = vpop.f32.mrf.mxu0
        %4030 = vmatprep.mubr.f32.mxu0 0.0
        %4031 = vmatmul.mubr.f32.gmra.mxu0 %v3836
        %v4032 = vpop.f32.mrf.mxu0
        %v4033 = vadd.f32 0.0, %v4032
        %v4034 = vpop.f32.mrf.mxu0
        %4035 = vmatprep.mubr.f32.mxu0 0.0
        %4036 = vmatmul.mubr.f32.gmra.mxu0 %v3839
        %v4037 = vpop.f32.mrf.mxu0
        %v4038 = vadd.f32 0.0, %v4037
        %v4039 = vpop.f32.mrf.mxu0
        %4040 = vmatprep.mubr.f32.mxu0 0.0
        %4041 = vmatmul.mubr.f32.gmra.mxu0 %v3842
        %v4042 = vpop.f32.mrf.mxu0
        %v4043 = vadd.f32 0.0, %v4042
        %v4044 = vpop.f32.mrf.mxu0
        %4045 = vmatprep.mubr.f32.mxu0 0.0
        %4046 = vmatmul.mubr.f32.gmra.mxu0 %v3845
        %v4047 = vpop.f32.mrf.mxu0
        %v4048 = vadd.f32 0.0, %v4047
        %v4049 = vpop.f32.mrf.mxu0
        %4050 = vmatprep.mubr.f32.mxu0 0.0
        %4051 = vmatmul.mubr.f32.gmra.mxu0 %v3848
        %v4052 = vpop.f32.mrf.mxu0
        %v4053 = vadd.f32 0.0, %v4052
        %v4054 = vpop.f32.mrf.mxu0
        %4055 = vmatprep.mubr.f32.mxu0 0.0
        %4056 = vmatmul.mubr.f32.gmra.mxu0 %v3851
        %v4057 = vpop.f32.mrf.mxu0
        %v4058 = vadd.f32 0.0, %v4057
        %v4059 = vpop.f32.mrf.mxu0
        %4060 = vmatprep.mubr.f32.mxu0 0.0
        %4061 = vmatmul.mubr.f32.gmra.mxu0 %v3854
        %v4062 = vpop.f32.mrf.mxu0
        %v4063 = vadd.f32 0.0, %v4062
        %v4064 = vpop.f32.mrf.mxu0
        %4065 = vmatprep.mubr.f32.mxu0 0.0
        %4066 = vmatmul.mubr.f32.gmra.mxu0 %v3857
        %v4067 = vpop.f32.mrf.mxu0
        %v4068 = vadd.f32 0.0, %v4067
        %v4069 = vpop.f32.mrf.mxu0
        %4070 = vmatprep.mubr.f32.mxu0 0.0
        %4071 = vmatmul.mubr.f32.gmra.mxu0 %v3860
        %v4072 = vpop.f32.mrf.mxu0
        %v4073 = vadd.f32 0.0, %v4072
        %v4074 = vpop.f32.mrf.mxu0
        %4075 = vmatprep.mubr.f32.mxu0 0.0
        %4076 = vmatmul.mubr.f32.gmra.mxu0 %v3863
        %v4077 = vpop.f32.mrf.mxu0
        %v4078 = vadd.f32 0.0, %v4077
        %v4079 = vpop.f32.mrf.mxu0
        %4080 = vmatprep.mubr.f32.mxu0 0.0
        %4081 = vmatmul.mubr.f32.gmra.mxu0 %v3866
        %v4082 = vpop.f32.mrf.mxu0
        %v4083 = vadd.f32 0.0, %v4082
        %v4084 = vpop.f32.mrf.mxu0
        %4085 = vmatprep.mubr.f32.mxu0 0.0
        %4086 = vmatmul.mubr.f32.gmra.mxu0 %v3869
        %v4087 = vpop.f32.mrf.mxu0
        %v4088 = vadd.f32 0.0, %v4087
        %v4089 = vpop.f32.mrf.mxu0
        %4090 = vmatprep.mubr.f32.mxu0 0.0
        %4091 = vmatmul.mubr.f32.gmra.mxu0 %v3872
        %v4092 = vpop.f32.mrf.mxu0
        %v4093 = vadd.f32 0.0, %v4092
        %v4094 = vpop.f32.mrf.mxu0
        %4095 = vmatprep.mubr.f32.mxu0 0.0
        %4096 = vmatmul.mubr.f32.gmra.mxu0 %v3875
        %v4097 = vpop.f32.mrf.mxu0
        %v4098 = vadd.f32 0.0, %v4097
        %v4099 = vpop.f32.mrf.mxu0
        %4100 = vmatprep.mubr.f32.mxu0 0.0
        %4101 = vmatmul.mubr.f32.gmra.mxu0 %v3878
        %v4102 = vpop.f32.mrf.mxu0
        %v4103 = vadd.f32 0.0, %v4102
        %v4104 = vpop.f32.mrf.mxu0
        %4105 = vmatprep.mubr.f32.mxu0 0.0
        %4106 = vmatmul.mubr.f32.gmra.mxu0 %v3881
        %v4107 = vpop.f32.mrf.mxu0
        %v4108 = vadd.f32 0.0, %v4107
        %v4109 = vpop.f32.mrf.mxu0
        %4110 = vmatprep.mubr.f32.mxu0 0.0
        %4111 = vmatmul.mubr.f32.gmra.mxu0 %v3884
        %v4112 = vpop.f32.mrf.mxu0
        %v4113 = vadd.f32 0.0, %v4112
        %v4114 = vpop.f32.mrf.mxu0
        %4115 = vmatprep.mubr.f32.mxu0 0.0
        %4116 = vmatmul.mubr.f32.gmra.mxu0 %v3887
        %v4117 = vpop.f32.mrf.mxu0
        %v4118 = vadd.f32 0.0, %v4117
        %v4119 = vpop.f32.mrf.mxu0
        %4120 = vmatprep.mubr.f32.mxu0 0.0
        %4121 = vmatmul.mubr.f32.gmra.mxu0 %v3890
        %v4122 = vpop.f32.mrf.mxu0
        %v4123 = vadd.f32 0.0, %v4122
        %v4124 = vpop.f32.mrf.mxu0
        %4125 = vmatprep.mubr.f32.mxu0 0.0
        %4126 = vmatmul.mubr.f32.gmra.mxu0 %v3893
        %v4127 = vpop.f32.mrf.mxu0
        %v4128 = vadd.f32 0.0, %v4127
        %v4129 = vpop.f32.mrf.mxu0
        %4130 = vmatprep.mubr.f32.mxu0 0.0
        %4131 = vmatmul.mubr.f32.gmra.mxu0 %v3896
        %v4132 = vpop.f32.mrf.mxu0
        %v4133 = vadd.f32 0.0, %v4132
        %v4134 = vpop.f32.mrf.mxu0
        %4135 = vmatprep.mubr.f32.mxu0 0.0
        %4136 = vmatmul.mubr.f32.gmra.mxu0 %v3899
        %v4137 = vpop.f32.mrf.mxu0
        %v4138 = vadd.f32 0.0, %v4137
        %v4139 = vpop.f32.mrf.mxu0
        %4140 = vmatprep.mubr.f32.mxu0 0.0
        %4141 = vmatmul.mubr.f32.gmra.mxu0 %v3902
        %v4142 = vpop.f32.mrf.mxu0
        %v4143 = vadd.f32 0.0, %v4142
        %v4144 = vpop.f32.mrf.mxu0
        %4145 = vmatprep.mubr.f32.mxu0 0.0
        %4146 = vmatmul.mubr.f32.gmra.mxu0 %v3905
        %v4147 = vpop.f32.mrf.mxu0
        %v4148 = vadd.f32 0.0, %v4147
        %v4149 = vpop.f32.mrf.mxu0
        %4150 = vmatprep.mubr.f32.mxu0 0.0
        %4151 = vmatmul.mubr.f32.gmra.mxu0 %v3908
        %v4152 = vpop.f32.mrf.mxu0
        %v4153 = vadd.f32 0.0, %v4152
        %v4154 = vpop.f32.mrf.mxu0
        %4155 = vmatprep.mubr.f32.mxu0 0.0
        %4156 = vmatmul.mubr.f32.gmra.mxu0 %v3911
        %v4157 = vpop.f32.mrf.mxu0
        %v4158 = vadd.f32 0.0, %v4157
        %v4159 = vpop.f32.mrf.mxu0
        %4160 = vdwg.mxu0
        %v4161 = vadd.f32 %v3731, %v3983
        %v4162 = vadd.f32 %v3732, %v3988
        %v4163 = vadd.f32 %v3733, %v3993
        %v4164 = vadd.f32 %v3734, %v3998
        %v4165 = vadd.f32 %v3735, %v4003
        %v4166 = vadd.f32 %v3736, %v4008
        %v4167 = vadd.f32 %v3737, %v4013
        %v4168 = vadd.f32 %v3738, %v4018
        %v4169 = vadd.f32 %v3739, %v4023
        %v4170 = vadd.f32 %v3740, %v4028
        %v4171 = vadd.f32 %v3741, %v4033
        %v4172 = vadd.f32 %v3742, %v4038
        %v4173 = vadd.f32 %v3743, %v4043
        %v4174 = vadd.f32 %v3744, %v4048
        %v4175 = vadd.f32 %v3745, %v4053
        %v4176 = vadd.f32 %v3746, %v4058
        %v4177 = vadd.f32 %v3747, %v4063
        %v4178 = vadd.f32 %v3748, %v4068
        %v4179 = vadd.f32 %v3749, %v4073
        %v4180 = vadd.f32 %v3750, %v4078
        %v4181 = vadd.f32 %v3751, %v4083
        %v4182 = vadd.f32 %v3752, %v4088
        %v4183 = vadd.f32 %v3753, %v4093
        %v4184 = vadd.f32 %v3754, %v4098
        %v4185 = vadd.f32 %v3755, %v4103
        %v4186 = vadd.f32 %v3756, %v4108
        %v4187 = vadd.f32 %v3757, %v4113
        %v4188 = vadd.f32 %v3758, %v4118
        %v4189 = vadd.f32 %v3759, %v4123
        %v4190 = vadd.f32 %v3760, %v4128
        %v4191 = vadd.f32 %v3761, %v4133
        %v4192 = vadd.f32 %v3762, %v4138
        %v4193 = vadd.f32 %v3763, %v4143
        %v4194 = vadd.f32 %v3764, %v4148
        %v4195 = vadd.f32 %v3765, %v4153
        %v4196 = vadd.f32 %v3766, %v4158
        %v4197 = vld [vmem:[#allocation3 + $0x25] sm:$0xff]
        %v4198 = vld [vmem:[#allocation3 + $0x2d] sm:$0xff]
        %v4199 = vld [vmem:[#allocation3 + $0x35] sm:$0xff]
        %v4200 = vld [vmem:[#allocation3 + $0x3d] sm:$0xff]
        %v4201 = vld [vmem:[#allocation3 + $0x45] sm:$0xff]
        %v4202 = vld [vmem:[#allocation3 + $0x4d] sm:$0xff]
        %v4203 = vld [vmem:[#allocation3 + $0x55] sm:$0xff]
        %v4204 = vld [vmem:[#allocation3 + $0x5d] sm:$0xff]
        %v4205 = vld [vmem:[#allocation3 + $0x65] sm:$0xff]
        %v4206 = vld [vmem:[#allocation3 + $0x6d] sm:$0xff]
        %v4207 = vld [vmem:[#allocation3 + $0x75] sm:$0xff]
        %v4208 = vld [vmem:[#allocation3 + $0x7d] sm:$0xff]
        %v4209 = vld [vmem:[#allocation3 + $0x85] sm:$0xff]
        %v4210 = vld [vmem:[#allocation3 + $0x8d] sm:$0xff]
        %v4211 = vld [vmem:[#allocation3 + $0x95] sm:$0xff]
        %v4212 = vld [vmem:[#allocation3 + $0x9d] sm:$0xff]
        %v4213 = vld [vmem:[#allocation3 + $0xa5] sm:$0xff]
        %v4214 = vld [vmem:[#allocation3 + $0xad] sm:$0xff]
        %v4215 = vld [vmem:[#allocation3 + $0xb5] sm:$0xff]
        %v4216 = vld [vmem:[#allocation3 + $0xbd] sm:$0xff]
        %v4217 = vld [vmem:[#allocation3 + $0xc5] sm:$0xff]
        %v4218 = vld [vmem:[#allocation3 + $0xcd] sm:$0xff]
        %v4219 = vld [vmem:[#allocation3 + $0xd5] sm:$0xff]
        %v4220 = vld [vmem:[#allocation3 + $0xdd] sm:$0xff]
        %v4221 = vld [vmem:[#allocation3 + $0xe5] sm:$0xff]
        %v4222 = vld [vmem:[#allocation3 + $0xed] sm:$0xff]
        %v4223 = vld [vmem:[#allocation3 + $0xf5] sm:$0xff]
        %v4224 = vld [vmem:[#allocation3 + $0xfd] sm:$0xff]
        %v4225 = vld [vmem:[#allocation3 + $0x105] sm:$0xff]
        %v4226 = vld [vmem:[#allocation3 + $0x10d] sm:$0xff]
        %v4227 = vld [vmem:[#allocation3 + $0x115] sm:$0xff]
        %v4228 = vld [vmem:[#allocation3 + $0x11d] sm:$0xff]
        %v4229 = vld [vmem:[#allocation3 + $0x125] sm:$0xff]
        %v4230 = vld [vmem:[#allocation3 + $0x12d] sm:$0xff]
        %v4231 = vld [vmem:[#allocation3 + $0x135] sm:$0xff]
        %v4232 = vld [vmem:[#allocation3 + $0x13d] sm:$0x3f]
        %s4233 = scalar_lea.vmem %s4, 28
        %v4234 = vld [vmem:[%s4233] sm:$0xf]
        %v4236 = vsel %vm1216, %v4197, 0
        %v4239 = vsel %vm1216, %v4198, 0
        %v4242 = vsel %vm1216, %v4199, 0
        %v4245 = vsel %vm1216, %v4200, 0
        %v4248 = vsel %vm1216, %v4201, 0
        %v4251 = vsel %vm1216, %v4202, 0
        %v4254 = vsel %vm1216, %v4203, 0
        %v4257 = vsel %vm1216, %v4204, 0
        %v4260 = vsel %vm1216, %v4205, 0
        %v4263 = vsel %vm1216, %v4206, 0
        %v4266 = vsel %vm1216, %v4207, 0
        %v4269 = vsel %vm1216, %v4208, 0
        %v4272 = vsel %vm1216, %v4209, 0
        %v4275 = vsel %vm1216, %v4210, 0
        %v4278 = vsel %vm1216, %v4211, 0
        %v4281 = vsel %vm1216, %v4212, 0
        %v4284 = vsel %vm1216, %v4213, 0
        %v4287 = vsel %vm1216, %v4214, 0
        %v4290 = vsel %vm1216, %v4215, 0
        %v4293 = vsel %vm1216, %v4216, 0
        %v4296 = vsel %vm1216, %v4217, 0
        %v4299 = vsel %vm1216, %v4218, 0
        %v4302 = vsel %vm1216, %v4219, 0
        %v4305 = vsel %vm1216, %v4220, 0
        %v4308 = vsel %vm1216, %v4221, 0
        %v4311 = vsel %vm1216, %v4222, 0
        %v4314 = vsel %vm1216, %v4223, 0
        %v4317 = vsel %vm1216, %v4224, 0
        %v4320 = vsel %vm1216, %v4225, 0
        %v4323 = vsel %vm1216, %v4226, 0
        %v4326 = vsel %vm1216, %v4227, 0
        %v4329 = vsel %vm1216, %v4228, 0
        %v4332 = vsel %vm1216, %v4229, 0
        %v4335 = vsel %vm1216, %v4230, 0
        %v4338 = vsel %vm1216, %v4231, 0
        %v4341 = vsel %vm1216, %v4232, 0
        %v4344 = vsel %vm1442, %v4234, 0
        %4346 = vmatprep.subr.mxu0 0.0
        %4347 = vmatpush1.msra.mxu0 0.0
        %4348 = vmatprep.subr.mxu0 0.0
        %4349 = vmatpush1.msra.mxu0 0.0
        %4350 = vmatprep.subr.mxu0 0.0
        %4351 = vmatpush1.msra.mxu0 0.0
        %4352 = vmatprep.subr.mxu0 0.0
        %4353 = vmatpush1.msra.mxu0 0.0
        %4354 = vmatprep.subr.mxu0 0.0
        %4355 = vmatpush1.msra.mxu0 0.0
        %4356 = vmatprep.subr.mxu0 0.0
        %4357 = vmatpush1.msra.mxu0 0.0
        %4358 = vmatprep.subr.mxu0 0.0
        %4359 = vmatpush1.msra.mxu0 0.0
        %4360 = vmatprep.subr.mxu0 0.0
        %4361 = vmatpush1.msra.mxu0 0.0
        %4362 = vmatprep.subr.mxu0 0.0
        %4363 = vmatpush1.msra.mxu0 0.0
        %4364 = vmatprep.subr.mxu0 0.0
        %4365 = vmatpush1.msra.mxu0 0.0
        %4366 = vmatprep.subr.mxu0 0.0
        %4367 = vmatpush1.msra.mxu0 0.0
        %4368 = vmatprep.subr.mxu0 0.0
        %4369 = vmatpush1.msra.mxu0 0.0
        %4370 = vmatprep.subr.mxu0 0.0
        %4371 = vmatpush1.msra.mxu0 0.0
        %4372 = vmatprep.subr.mxu0 0.0
        %4373 = vmatpush1.msra.mxu0 0.0
        %4374 = vmatprep.subr.mxu0 0.0
        %4375 = vmatpush1.msra.mxu0 0.0
        %4376 = vmatprep.subr.mxu0 0.0
        %4377 = vmatpush1.msra.mxu0 %v4344
        %4378 = vmatprep.subr.mxu0 0.0
        %4379 = vmatpush2.msra.mxu0 0.0
        %4380 = vmatprep.subr.mxu0 0.0
        %4381 = vmatpush2.msra.mxu0 0.0
        %4382 = vmatprep.subr.mxu0 0.0
        %4383 = vmatpush2.msra.mxu0 0.0
        %4384 = vmatprep.subr.mxu0 0.0
        %4385 = vmatpush2.msra.mxu0 0.0
        %4386 = vmatprep.subr.mxu0 0.0
        %4387 = vmatpush2.msra.mxu0 0.0
        %4388 = vmatprep.subr.mxu0 0.0
        %4389 = vmatpush2.msra.mxu0 0.0
        %4390 = vmatprep.subr.mxu0 0.0
        %4391 = vmatpush2.msra.mxu0 0.0
        %4392 = vmatprep.subr.mxu0 0.0
        %4393 = vmatpush2.msra.mxu0 0.0
        %4394 = vmatprep.subr.mxu0 0.0
        %4395 = vmatpush2.msra.mxu0 0.0
        %4396 = vmatprep.subr.mxu0 0.0
        %4397 = vmatpush2.msra.mxu0 0.0
        %4398 = vmatprep.subr.mxu0 0.0
        %4399 = vmatpush2.msra.mxu0 0.0
        %4400 = vmatprep.subr.mxu0 0.0
        %4401 = vmatpush2.msra.mxu0 0.0
        %4402 = vmatprep.subr.mxu0 0.0
        %4403 = vmatpush2.msra.mxu0 0.0
        %4404 = vmatprep.subr.mxu0 0.0
        %4405 = vmatpush2.msra.mxu0 0.0
        %4406 = vmatprep.subr.mxu0 0.0
        %4407 = vmatpush2.msra.mxu0 0.0
        %4408 = vmatprep.subr.mxu0 0.0
        %4409 = vmatpush2.msra.mxu0 0.0
        %4410 = vmatprep.mubr.f32.mxu0 0.0
        %4411 = vmatmul.mubr.f32.gmra.mxu0 %v4236
        %v4412 = vpop.f32.mrf.mxu0
        %v4413 = vadd.f32 0.0, %v4412
        %v4414 = vpop.f32.mrf.mxu0
        %4415 = vmatprep.mubr.f32.mxu0 0.0
        %4416 = vmatmul.mubr.f32.gmra.mxu0 %v4239
        %v4417 = vpop.f32.mrf.mxu0
        %v4418 = vadd.f32 0.0, %v4417
        %v4419 = vpop.f32.mrf.mxu0
        %4420 = vmatprep.mubr.f32.mxu0 0.0
        %4421 = vmatmul.mubr.f32.gmra.mxu0 %v4242
        %v4422 = vpop.f32.mrf.mxu0
        %v4423 = vadd.f32 0.0, %v4422
        %v4424 = vpop.f32.mrf.mxu0
        %4425 = vmatprep.mubr.f32.mxu0 0.0
        %4426 = vmatmul.mubr.f32.gmra.mxu0 %v4245
        %v4427 = vpop.f32.mrf.mxu0
        %v4428 = vadd.f32 0.0, %v4427
        %v4429 = vpop.f32.mrf.mxu0
        %4430 = vmatprep.mubr.f32.mxu0 0.0
        %4431 = vmatmul.mubr.f32.gmra.mxu0 %v4248
        %v4432 = vpop.f32.mrf.mxu0
        %v4433 = vadd.f32 0.0, %v4432
        %v4434 = vpop.f32.mrf.mxu0
        %4435 = vmatprep.mubr.f32.mxu0 0.0
        %4436 = vmatmul.mubr.f32.gmra.mxu0 %v4251
        %v4437 = vpop.f32.mrf.mxu0
        %v4438 = vadd.f32 0.0, %v4437
        %v4439 = vpop.f32.mrf.mxu0
        %4440 = vmatprep.mubr.f32.mxu0 0.0
        %4441 = vmatmul.mubr.f32.gmra.mxu0 %v4254
        %v4442 = vpop.f32.mrf.mxu0
        %v4443 = vadd.f32 0.0, %v4442
        %v4444 = vpop.f32.mrf.mxu0
        %4445 = vmatprep.mubr.f32.mxu0 0.0
        %4446 = vmatmul.mubr.f32.gmra.mxu0 %v4257
        %v4447 = vpop.f32.mrf.mxu0
        %v4448 = vadd.f32 0.0, %v4447
        %v4449 = vpop.f32.mrf.mxu0
        %4450 = vmatprep.mubr.f32.mxu0 0.0
        %4451 = vmatmul.mubr.f32.gmra.mxu0 %v4260
        %v4452 = vpop.f32.mrf.mxu0
        %v4453 = vadd.f32 0.0, %v4452
        %v4454 = vpop.f32.mrf.mxu0
        %4455 = vmatprep.mubr.f32.mxu0 0.0
        %4456 = vmatmul.mubr.f32.gmra.mxu0 %v4263
        %v4457 = vpop.f32.mrf.mxu0
        %v4458 = vadd.f32 0.0, %v4457
        %v4459 = vpop.f32.mrf.mxu0
        %4460 = vmatprep.mubr.f32.mxu0 0.0
        %4461 = vmatmul.mubr.f32.gmra.mxu0 %v4266
        %v4462 = vpop.f32.mrf.mxu0
        %v4463 = vadd.f32 0.0, %v4462
        %v4464 = vpop.f32.mrf.mxu0
        %4465 = vmatprep.mubr.f32.mxu0 0.0
        %4466 = vmatmul.mubr.f32.gmra.mxu0 %v4269
        %v4467 = vpop.f32.mrf.mxu0
        %v4468 = vadd.f32 0.0, %v4467
        %v4469 = vpop.f32.mrf.mxu0
        %4470 = vmatprep.mubr.f32.mxu0 0.0
        %4471 = vmatmul.mubr.f32.gmra.mxu0 %v4272
        %v4472 = vpop.f32.mrf.mxu0
        %v4473 = vadd.f32 0.0, %v4472
        %v4474 = vpop.f32.mrf.mxu0
        %4475 = vmatprep.mubr.f32.mxu0 0.0
        %4476 = vmatmul.mubr.f32.gmra.mxu0 %v4275
        %v4477 = vpop.f32.mrf.mxu0
        %v4478 = vadd.f32 0.0, %v4477
        %v4479 = vpop.f32.mrf.mxu0
        %4480 = vmatprep.mubr.f32.mxu0 0.0
        %4481 = vmatmul.mubr.f32.gmra.mxu0 %v4278
        %v4482 = vpop.f32.mrf.mxu0
        %v4483 = vadd.f32 0.0, %v4482
        %v4484 = vpop.f32.mrf.mxu0
        %4485 = vmatprep.mubr.f32.mxu0 0.0
        %4486 = vmatmul.mubr.f32.gmra.mxu0 %v4281
        %v4487 = vpop.f32.mrf.mxu0
        %v4488 = vadd.f32 0.0, %v4487
        %v4489 = vpop.f32.mrf.mxu0
        %4490 = vmatprep.mubr.f32.mxu0 0.0
        %4491 = vmatmul.mubr.f32.gmra.mxu0 %v4284
        %v4492 = vpop.f32.mrf.mxu0
        %v4493 = vadd.f32 0.0, %v4492
        %v4494 = vpop.f32.mrf.mxu0
        %4495 = vmatprep.mubr.f32.mxu0 0.0
        %4496 = vmatmul.mubr.f32.gmra.mxu0 %v4287
        %v4497 = vpop.f32.mrf.mxu0
        %v4498 = vadd.f32 0.0, %v4497
        %v4499 = vpop.f32.mrf.mxu0
        %4500 = vmatprep.mubr.f32.mxu0 0.0
        %4501 = vmatmul.mubr.f32.gmra.mxu0 %v4290
        %v4502 = vpop.f32.mrf.mxu0
        %v4503 = vadd.f32 0.0, %v4502
        %v4504 = vpop.f32.mrf.mxu0
        %4505 = vmatprep.mubr.f32.mxu0 0.0
        %4506 = vmatmul.mubr.f32.gmra.mxu0 %v4293
        %v4507 = vpop.f32.mrf.mxu0
        %v4508 = vadd.f32 0.0, %v4507
        %v4509 = vpop.f32.mrf.mxu0
        %4510 = vmatprep.mubr.f32.mxu0 0.0
        %4511 = vmatmul.mubr.f32.gmra.mxu0 %v4296
        %v4512 = vpop.f32.mrf.mxu0
        %v4513 = vadd.f32 0.0, %v4512
        %v4514 = vpop.f32.mrf.mxu0
        %4515 = vmatprep.mubr.f32.mxu0 0.0
        %4516 = vmatmul.mubr.f32.gmra.mxu0 %v4299
        %v4517 = vpop.f32.mrf.mxu0
        %v4518 = vadd.f32 0.0, %v4517
        %v4519 = vpop.f32.mrf.mxu0
        %4520 = vmatprep.mubr.f32.mxu0 0.0
        %4521 = vmatmul.mubr.f32.gmra.mxu0 %v4302
        %v4522 = vpop.f32.mrf.mxu0
        %v4523 = vadd.f32 0.0, %v4522
        %v4524 = vpop.f32.mrf.mxu0
        %4525 = vmatprep.mubr.f32.mxu0 0.0
        %4526 = vmatmul.mubr.f32.gmra.mxu0 %v4305
        %v4527 = vpop.f32.mrf.mxu0
        %v4528 = vadd.f32 0.0, %v4527
        %v4529 = vpop.f32.mrf.mxu0
        %4530 = vmatprep.mubr.f32.mxu0 0.0
        %4531 = vmatmul.mubr.f32.gmra.mxu0 %v4308
        %v4532 = vpop.f32.mrf.mxu0
        %v4533 = vadd.f32 0.0, %v4532
        %v4534 = vpop.f32.mrf.mxu0
        %4535 = vmatprep.mubr.f32.mxu0 0.0
        %4536 = vmatmul.mubr.f32.gmra.mxu0 %v4311
        %v4537 = vpop.f32.mrf.mxu0
        %v4538 = vadd.f32 0.0, %v4537
        %v4539 = vpop.f32.mrf.mxu0
        %4540 = vmatprep.mubr.f32.mxu0 0.0
        %4541 = vmatmul.mubr.f32.gmra.mxu0 %v4314
        %v4542 = vpop.f32.mrf.mxu0
        %v4543 = vadd.f32 0.0, %v4542
        %v4544 = vpop.f32.mrf.mxu0
        %4545 = vmatprep.mubr.f32.mxu0 0.0
        %4546 = vmatmul.mubr.f32.gmra.mxu0 %v4317
        %v4547 = vpop.f32.mrf.mxu0
        %v4548 = vadd.f32 0.0, %v4547
        %v4549 = vpop.f32.mrf.mxu0
        %4550 = vmatprep.mubr.f32.mxu0 0.0
        %4551 = vmatmul.mubr.f32.gmra.mxu0 %v4320
        %v4552 = vpop.f32.mrf.mxu0
        %v4553 = vadd.f32 0.0, %v4552
        %v4554 = vpop.f32.mrf.mxu0
        %4555 = vmatprep.mubr.f32.mxu0 0.0
        %4556 = vmatmul.mubr.f32.gmra.mxu0 %v4323
        %v4557 = vpop.f32.mrf.mxu0
        %v4558 = vadd.f32 0.0, %v4557
        %v4559 = vpop.f32.mrf.mxu0
        %4560 = vmatprep.mubr.f32.mxu0 0.0
        %4561 = vmatmul.mubr.f32.gmra.mxu0 %v4326
        %v4562 = vpop.f32.mrf.mxu0
        %v4563 = vadd.f32 0.0, %v4562
        %v4564 = vpop.f32.mrf.mxu0
        %4565 = vmatprep.mubr.f32.mxu0 0.0
        %4566 = vmatmul.mubr.f32.gmra.mxu0 %v4329
        %v4567 = vpop.f32.mrf.mxu0
        %v4568 = vadd.f32 0.0, %v4567
        %v4569 = vpop.f32.mrf.mxu0
        %4570 = vmatprep.mubr.f32.mxu0 0.0
        %4571 = vmatmul.mubr.f32.gmra.mxu0 %v4332
        %v4572 = vpop.f32.mrf.mxu0
        %v4573 = vadd.f32 0.0, %v4572
        %v4574 = vpop.f32.mrf.mxu0
        %4575 = vmatprep.mubr.f32.mxu0 0.0
        %4576 = vmatmul.mubr.f32.gmra.mxu0 %v4335
        %v4577 = vpop.f32.mrf.mxu0
        %v4578 = vadd.f32 0.0, %v4577
        %v4579 = vpop.f32.mrf.mxu0
        %4580 = vmatprep.mubr.f32.mxu0 0.0
        %4581 = vmatmul.mubr.f32.gmra.mxu0 %v4338
        %v4582 = vpop.f32.mrf.mxu0
        %v4583 = vadd.f32 0.0, %v4582
        %v4584 = vpop.f32.mrf.mxu0
        %4585 = vmatprep.mubr.f32.mxu0 0.0
        %4586 = vmatmul.mubr.f32.gmra.mxu0 %v4341
        %v4587 = vpop.f32.mrf.mxu0
        %v4588 = vadd.f32 0.0, %v4587
        %v4589 = vpop.f32.mrf.mxu0
        %4590 = vdwg.mxu0
        %v4591 = vadd.f32 %v4161, %v4413
        %v4592 = vadd.f32 %v4162, %v4418
        %v4593 = vadd.f32 %v4163, %v4423
        %v4594 = vadd.f32 %v4164, %v4428
        %v4595 = vadd.f32 %v4165, %v4433
        %v4596 = vadd.f32 %v4166, %v4438
        %v4597 = vadd.f32 %v4167, %v4443
        %v4598 = vadd.f32 %v4168, %v4448
        %v4599 = vadd.f32 %v4169, %v4453
        %v4600 = vadd.f32 %v4170, %v4458
        %v4601 = vadd.f32 %v4171, %v4463
        %v4602 = vadd.f32 %v4172, %v4468
        %v4603 = vadd.f32 %v4173, %v4473
        %v4604 = vadd.f32 %v4174, %v4478
        %v4605 = vadd.f32 %v4175, %v4483
        %v4606 = vadd.f32 %v4176, %v4488
        %v4607 = vadd.f32 %v4177, %v4493
        %v4608 = vadd.f32 %v4178, %v4498
        %v4609 = vadd.f32 %v4179, %v4503
        %v4610 = vadd.f32 %v4180, %v4508
        %v4611 = vadd.f32 %v4181, %v4513
        %v4612 = vadd.f32 %v4182, %v4518
        %v4613 = vadd.f32 %v4183, %v4523
        %v4614 = vadd.f32 %v4184, %v4528
        %v4615 = vadd.f32 %v4185, %v4533
        %v4616 = vadd.f32 %v4186, %v4538
        %v4617 = vadd.f32 %v4187, %v4543
        %v4618 = vadd.f32 %v4188, %v4548
        %v4619 = vadd.f32 %v4189, %v4553
        %v4620 = vadd.f32 %v4190, %v4558
        %v4621 = vadd.f32 %v4191, %v4563
        %v4622 = vadd.f32 %v4192, %v4568
        %v4623 = vadd.f32 %v4193, %v4573
        %v4624 = vadd.f32 %v4194, %v4578
        %v4625 = vadd.f32 %v4195, %v4583
        %v4626 = vadd.f32 %v4196, %v4588
        %v4627 = vld [vmem:[#allocation3 + $0x26] sm:$0xff]
        %v4628 = vld [vmem:[#allocation3 + $0x2e] sm:$0xff]
        %v4629 = vld [vmem:[#allocation3 + $0x36] sm:$0xff]
        %v4630 = vld [vmem:[#allocation3 + $0x3e] sm:$0xff]
        %v4631 = vld [vmem:[#allocation3 + $0x46] sm:$0xff]
        %v4632 = vld [vmem:[#allocation3 + $0x4e] sm:$0xff]
        %v4633 = vld [vmem:[#allocation3 + $0x56] sm:$0xff]
        %v4634 = vld [vmem:[#allocation3 + $0x5e] sm:$0xff]
        %v4635 = vld [vmem:[#allocation3 + $0x66] sm:$0xff]
        %v4636 = vld [vmem:[#allocation3 + $0x6e] sm:$0xff]
        %v4637 = vld [vmem:[#allocation3 + $0x76] sm:$0xff]
        %v4638 = vld [vmem:[#allocation3 + $0x7e] sm:$0xff]
        %v4639 = vld [vmem:[#allocation3 + $0x86] sm:$0xff]
        %v4640 = vld [vmem:[#allocation3 + $0x8e] sm:$0xff]
        %v4641 = vld [vmem:[#allocation3 + $0x96] sm:$0xff]
        %v4642 = vld [vmem:[#allocation3 + $0x9e] sm:$0xff]
        %v4643 = vld [vmem:[#allocation3 + $0xa6] sm:$0xff]
        %v4644 = vld [vmem:[#allocation3 + $0xae] sm:$0xff]
        %v4645 = vld [vmem:[#allocation3 + $0xb6] sm:$0xff]
        %v4646 = vld [vmem:[#allocation3 + $0xbe] sm:$0xff]
        %v4647 = vld [vmem:[#allocation3 + $0xc6] sm:$0xff]
        %v4648 = vld [vmem:[#allocation3 + $0xce] sm:$0xff]
        %v4649 = vld [vmem:[#allocation3 + $0xd6] sm:$0xff]
        %v4650 = vld [vmem:[#allocation3 + $0xde] sm:$0xff]
        %v4651 = vld [vmem:[#allocation3 + $0xe6] sm:$0xff]
        %v4652 = vld [vmem:[#allocation3 + $0xee] sm:$0xff]
        %v4653 = vld [vmem:[#allocation3 + $0xf6] sm:$0xff]
        %v4654 = vld [vmem:[#allocation3 + $0xfe] sm:$0xff]
        %v4655 = vld [vmem:[#allocation3 + $0x106] sm:$0xff]
        %v4656 = vld [vmem:[#allocation3 + $0x10e] sm:$0xff]
        %v4657 = vld [vmem:[#allocation3 + $0x116] sm:$0xff]
        %v4658 = vld [vmem:[#allocation3 + $0x11e] sm:$0xff]
        %v4659 = vld [vmem:[#allocation3 + $0x126] sm:$0xff]
        %v4660 = vld [vmem:[#allocation3 + $0x12e] sm:$0xff]
        %v4661 = vld [vmem:[#allocation3 + $0x136] sm:$0xff]
        %v4662 = vld [vmem:[#allocation3 + $0x13e] sm:$0x3f]
        %s4663 = scalar_lea.vmem %s4, 32
        %v4664 = vld [vmem:[%s4663] sm:$0xf]
        %v4666 = vsel %vm1216, %v4627, 0
        %v4669 = vsel %vm1216, %v4628, 0
        %v4672 = vsel %vm1216, %v4629, 0
        %v4675 = vsel %vm1216, %v4630, 0
        %v4678 = vsel %vm1216, %v4631, 0
        %v4681 = vsel %vm1216, %v4632, 0
        %v4684 = vsel %vm1216, %v4633, 0
        %v4687 = vsel %vm1216, %v4634, 0
        %v4690 = vsel %vm1216, %v4635, 0
        %v4693 = vsel %vm1216, %v4636, 0
        %v4696 = vsel %vm1216, %v4637, 0
        %v4699 = vsel %vm1216, %v4638, 0
        %v4702 = vsel %vm1216, %v4639, 0
        %v4705 = vsel %vm1216, %v4640, 0
        %v4708 = vsel %vm1216, %v4641, 0
        %v4711 = vsel %vm1216, %v4642, 0
        %v4714 = vsel %vm1216, %v4643, 0
        %v4717 = vsel %vm1216, %v4644, 0
        %v4720 = vsel %vm1216, %v4645, 0
        %v4723 = vsel %vm1216, %v4646, 0
        %v4726 = vsel %vm1216, %v4647, 0
        %v4729 = vsel %vm1216, %v4648, 0
        %v4732 = vsel %vm1216, %v4649, 0
        %v4735 = vsel %vm1216, %v4650, 0
        %v4738 = vsel %vm1216, %v4651, 0
        %v4741 = vsel %vm1216, %v4652, 0
        %v4744 = vsel %vm1216, %v4653, 0
        %v4747 = vsel %vm1216, %v4654, 0
        %v4750 = vsel %vm1216, %v4655, 0
        %v4753 = vsel %vm1216, %v4656, 0
        %v4756 = vsel %vm1216, %v4657, 0
        %v4759 = vsel %vm1216, %v4658, 0
        %v4762 = vsel %vm1216, %v4659, 0
        %v4765 = vsel %vm1216, %v4660, 0
        %v4768 = vsel %vm1216, %v4661, 0
        %v4771 = vsel %vm1216, %v4662, 0
        %v4774 = vsel %vm1442, %v4664, 0
        %4776 = vmatprep.subr.mxu0 0.0
        %4777 = vmatpush1.msra.mxu0 0.0
        %4778 = vmatprep.subr.mxu0 0.0
        %4779 = vmatpush1.msra.mxu0 0.0
        %4780 = vmatprep.subr.mxu0 0.0
        %4781 = vmatpush1.msra.mxu0 0.0
        %4782 = vmatprep.subr.mxu0 0.0
        %4783 = vmatpush1.msra.mxu0 0.0
        %4784 = vmatprep.subr.mxu0 0.0
        %4785 = vmatpush1.msra.mxu0 0.0
        %4786 = vmatprep.subr.mxu0 0.0
        %4787 = vmatpush1.msra.mxu0 0.0
        %4788 = vmatprep.subr.mxu0 0.0
        %4789 = vmatpush1.msra.mxu0 0.0
        %4790 = vmatprep.subr.mxu0 0.0
        %4791 = vmatpush1.msra.mxu0 0.0
        %4792 = vmatprep.subr.mxu0 0.0
        %4793 = vmatpush1.msra.mxu0 0.0
        %4794 = vmatprep.subr.mxu0 0.0
        %4795 = vmatpush1.msra.mxu0 0.0
        %4796 = vmatprep.subr.mxu0 0.0
        %4797 = vmatpush1.msra.mxu0 0.0
        %4798 = vmatprep.subr.mxu0 0.0
        %4799 = vmatpush1.msra.mxu0 0.0
        %4800 = vmatprep.subr.mxu0 0.0
        %4801 = vmatpush1.msra.mxu0 0.0
        %4802 = vmatprep.subr.mxu0 0.0
        %4803 = vmatpush1.msra.mxu0 0.0
        %4804 = vmatprep.subr.mxu0 0.0
        %4805 = vmatpush1.msra.mxu0 0.0
        %4806 = vmatprep.subr.mxu0 0.0
        %4807 = vmatpush1.msra.mxu0 %v4774
        %4808 = vmatprep.subr.mxu0 0.0
        %4809 = vmatpush2.msra.mxu0 0.0
        %4810 = vmatprep.subr.mxu0 0.0
        %4811 = vmatpush2.msra.mxu0 0.0
        %4812 = vmatprep.subr.mxu0 0.0
        %4813 = vmatpush2.msra.mxu0 0.0
        %4814 = vmatprep.subr.mxu0 0.0
        %4815 = vmatpush2.msra.mxu0 0.0
        %4816 = vmatprep.subr.mxu0 0.0
        %4817 = vmatpush2.msra.mxu0 0.0
        %4818 = vmatprep.subr.mxu0 0.0
        %4819 = vmatpush2.msra.mxu0 0.0
        %4820 = vmatprep.subr.mxu0 0.0
        %4821 = vmatpush2.msra.mxu0 0.0
        %4822 = vmatprep.subr.mxu0 0.0
        %4823 = vmatpush2.msra.mxu0 0.0
        %4824 = vmatprep.subr.mxu0 0.0
        %4825 = vmatpush2.msra.mxu0 0.0
        %4826 = vmatprep.subr.mxu0 0.0
        %4827 = vmatpush2.msra.mxu0 0.0
        %4828 = vmatprep.subr.mxu0 0.0
        %4829 = vmatpush2.msra.mxu0 0.0
        %4830 = vmatprep.subr.mxu0 0.0
        %4831 = vmatpush2.msra.mxu0 0.0
        %4832 = vmatprep.subr.mxu0 0.0
        %4833 = vmatpush2.msra.mxu0 0.0
        %4834 = vmatprep.subr.mxu0 0.0
        %4835 = vmatpush2.msra.mxu0 0.0
        %4836 = vmatprep.subr.mxu0 0.0
        %4837 = vmatpush2.msra.mxu0 0.0
        %4838 = vmatprep.subr.mxu0 0.0
        %4839 = vmatpush2.msra.mxu0 0.0
        %4840 = vmatprep.mubr.f32.mxu0 0.0
        %4841 = vmatmul.mubr.f32.gmra.mxu0 %v4666
        %v4842 = vpop.f32.mrf.mxu0
        %v4843 = vadd.f32 0.0, %v4842
        %v4844 = vpop.f32.mrf.mxu0
        %4845 = vmatprep.mubr.f32.mxu0 0.0
        %4846 = vmatmul.mubr.f32.gmra.mxu0 %v4669
        %v4847 = vpop.f32.mrf.mxu0
        %v4848 = vadd.f32 0.0, %v4847
        %v4849 = vpop.f32.mrf.mxu0
        %4850 = vmatprep.mubr.f32.mxu0 0.0
        %4851 = vmatmul.mubr.f32.gmra.mxu0 %v4672
        %v4852 = vpop.f32.mrf.mxu0
        %v4853 = vadd.f32 0.0, %v4852
        %v4854 = vpop.f32.mrf.mxu0
        %4855 = vmatprep.mubr.f32.mxu0 0.0
        %4856 = vmatmul.mubr.f32.gmra.mxu0 %v4675
        %v4857 = vpop.f32.mrf.mxu0
        %v4858 = vadd.f32 0.0, %v4857
        %v4859 = vpop.f32.mrf.mxu0
        %4860 = vmatprep.mubr.f32.mxu0 0.0
        %4861 = vmatmul.mubr.f32.gmra.mxu0 %v4678
        %v4862 = vpop.f32.mrf.mxu0
        %v4863 = vadd.f32 0.0, %v4862
        %v4864 = vpop.f32.mrf.mxu0
        %4865 = vmatprep.mubr.f32.mxu0 0.0
        %4866 = vmatmul.mubr.f32.gmra.mxu0 %v4681
        %v4867 = vpop.f32.mrf.mxu0
        %v4868 = vadd.f32 0.0, %v4867
        %v4869 = vpop.f32.mrf.mxu0
        %4870 = vmatprep.mubr.f32.mxu0 0.0
        %4871 = vmatmul.mubr.f32.gmra.mxu0 %v4684
        %v4872 = vpop.f32.mrf.mxu0
        %v4873 = vadd.f32 0.0, %v4872
        %v4874 = vpop.f32.mrf.mxu0
        %4875 = vmatprep.mubr.f32.mxu0 0.0
        %4876 = vmatmul.mubr.f32.gmra.mxu0 %v4687
        %v4877 = vpop.f32.mrf.mxu0
        %v4878 = vadd.f32 0.0, %v4877
        %v4879 = vpop.f32.mrf.mxu0
        %4880 = vmatprep.mubr.f32.mxu0 0.0
        %4881 = vmatmul.mubr.f32.gmra.mxu0 %v4690
        %v4882 = vpop.f32.mrf.mxu0
        %v4883 = vadd.f32 0.0, %v4882
        %v4884 = vpop.f32.mrf.mxu0
        %4885 = vmatprep.mubr.f32.mxu0 0.0
        %4886 = vmatmul.mubr.f32.gmra.mxu0 %v4693
        %v4887 = vpop.f32.mrf.mxu0
        %v4888 = vadd.f32 0.0, %v4887
        %v4889 = vpop.f32.mrf.mxu0
        %4890 = vmatprep.mubr.f32.mxu0 0.0
        %4891 = vmatmul.mubr.f32.gmra.mxu0 %v4696
        %v4892 = vpop.f32.mrf.mxu0
        %v4893 = vadd.f32 0.0, %v4892
        %v4894 = vpop.f32.mrf.mxu0
        %4895 = vmatprep.mubr.f32.mxu0 0.0
        %4896 = vmatmul.mubr.f32.gmra.mxu0 %v4699
        %v4897 = vpop.f32.mrf.mxu0
        %v4898 = vadd.f32 0.0, %v4897
        %v4899 = vpop.f32.mrf.mxu0
        %4900 = vmatprep.mubr.f32.mxu0 0.0
        %4901 = vmatmul.mubr.f32.gmra.mxu0 %v4702
        %v4902 = vpop.f32.mrf.mxu0
        %v4903 = vadd.f32 0.0, %v4902
        %v4904 = vpop.f32.mrf.mxu0
        %4905 = vmatprep.mubr.f32.mxu0 0.0
        %4906 = vmatmul.mubr.f32.gmra.mxu0 %v4705
        %v4907 = vpop.f32.mrf.mxu0
        %v4908 = vadd.f32 0.0, %v4907
        %v4909 = vpop.f32.mrf.mxu0
        %4910 = vmatprep.mubr.f32.mxu0 0.0
        %4911 = vmatmul.mubr.f32.gmra.mxu0 %v4708
        %v4912 = vpop.f32.mrf.mxu0
        %v4913 = vadd.f32 0.0, %v4912
        %v4914 = vpop.f32.mrf.mxu0
        %4915 = vmatprep.mubr.f32.mxu0 0.0
        %4916 = vmatmul.mubr.f32.gmra.mxu0 %v4711
        %v4917 = vpop.f32.mrf.mxu0
        %v4918 = vadd.f32 0.0, %v4917
        %v4919 = vpop.f32.mrf.mxu0
        %4920 = vmatprep.mubr.f32.mxu0 0.0
        %4921 = vmatmul.mubr.f32.gmra.mxu0 %v4714
        %v4922 = vpop.f32.mrf.mxu0
        %v4923 = vadd.f32 0.0, %v4922
        %v4924 = vpop.f32.mrf.mxu0
        %4925 = vmatprep.mubr.f32.mxu0 0.0
        %4926 = vmatmul.mubr.f32.gmra.mxu0 %v4717
        %v4927 = vpop.f32.mrf.mxu0
        %v4928 = vadd.f32 0.0, %v4927
        %v4929 = vpop.f32.mrf.mxu0
        %4930 = vmatprep.mubr.f32.mxu0 0.0
        %4931 = vmatmul.mubr.f32.gmra.mxu0 %v4720
        %v4932 = vpop.f32.mrf.mxu0
        %v4933 = vadd.f32 0.0, %v4932
        %v4934 = vpop.f32.mrf.mxu0
        %4935 = vmatprep.mubr.f32.mxu0 0.0
        %4936 = vmatmul.mubr.f32.gmra.mxu0 %v4723
        %v4937 = vpop.f32.mrf.mxu0
        %v4938 = vadd.f32 0.0, %v4937
        %v4939 = vpop.f32.mrf.mxu0
        %4940 = vmatprep.mubr.f32.mxu0 0.0
        %4941 = vmatmul.mubr.f32.gmra.mxu0 %v4726
        %v4942 = vpop.f32.mrf.mxu0
        %v4943 = vadd.f32 0.0, %v4942
        %v4944 = vpop.f32.mrf.mxu0
        %4945 = vmatprep.mubr.f32.mxu0 0.0
        %4946 = vmatmul.mubr.f32.gmra.mxu0 %v4729
        %v4947 = vpop.f32.mrf.mxu0
        %v4948 = vadd.f32 0.0, %v4947
        %v4949 = vpop.f32.mrf.mxu0
        %4950 = vmatprep.mubr.f32.mxu0 0.0
        %4951 = vmatmul.mubr.f32.gmra.mxu0 %v4732
        %v4952 = vpop.f32.mrf.mxu0
        %v4953 = vadd.f32 0.0, %v4952
        %v4954 = vpop.f32.mrf.mxu0
        %4955 = vmatprep.mubr.f32.mxu0 0.0
        %4956 = vmatmul.mubr.f32.gmra.mxu0 %v4735
        %v4957 = vpop.f32.mrf.mxu0
        %v4958 = vadd.f32 0.0, %v4957
        %v4959 = vpop.f32.mrf.mxu0
        %4960 = vmatprep.mubr.f32.mxu0 0.0
        %4961 = vmatmul.mubr.f32.gmra.mxu0 %v4738
        %v4962 = vpop.f32.mrf.mxu0
        %v4963 = vadd.f32 0.0, %v4962
        %v4964 = vpop.f32.mrf.mxu0
        %4965 = vmatprep.mubr.f32.mxu0 0.0
        %4966 = vmatmul.mubr.f32.gmra.mxu0 %v4741
        %v4967 = vpop.f32.mrf.mxu0
        %v4968 = vadd.f32 0.0, %v4967
        %v4969 = vpop.f32.mrf.mxu0
        %4970 = vmatprep.mubr.f32.mxu0 0.0
        %4971 = vmatmul.mubr.f32.gmra.mxu0 %v4744
        %v4972 = vpop.f32.mrf.mxu0
        %v4973 = vadd.f32 0.0, %v4972
        %v4974 = vpop.f32.mrf.mxu0
        %4975 = vmatprep.mubr.f32.mxu0 0.0
        %4976 = vmatmul.mubr.f32.gmra.mxu0 %v4747
        %v4977 = vpop.f32.mrf.mxu0
        %v4978 = vadd.f32 0.0, %v4977
        %v4979 = vpop.f32.mrf.mxu0
        %4980 = vmatprep.mubr.f32.mxu0 0.0
        %4981 = vmatmul.mubr.f32.gmra.mxu0 %v4750
        %v4982 = vpop.f32.mrf.mxu0
        %v4983 = vadd.f32 0.0, %v4982
        %v4984 = vpop.f32.mrf.mxu0
        %4985 = vmatprep.mubr.f32.mxu0 0.0
        %4986 = vmatmul.mubr.f32.gmra.mxu0 %v4753
        %v4987 = vpop.f32.mrf.mxu0
        %v4988 = vadd.f32 0.0, %v4987
        %v4989 = vpop.f32.mrf.mxu0
        %4990 = vmatprep.mubr.f32.mxu0 0.0
        %4991 = vmatmul.mubr.f32.gmra.mxu0 %v4756
        %v4992 = vpop.f32.mrf.mxu0
        %v4993 = vadd.f32 0.0, %v4992
        %v4994 = vpop.f32.mrf.mxu0
        %4995 = vmatprep.mubr.f32.mxu0 0.0
        %4996 = vmatmul.mubr.f32.gmra.mxu0 %v4759
        %v4997 = vpop.f32.mrf.mxu0
        %v4998 = vadd.f32 0.0, %v4997
        %v4999 = vpop.f32.mrf.mxu0
        %5000 = vmatprep.mubr.f32.mxu0 0.0
        %5001 = vmatmul.mubr.f32.gmra.mxu0 %v4762
        %v5002 = vpop.f32.mrf.mxu0
        %v5003 = vadd.f32 0.0, %v5002
        %v5004 = vpop.f32.mrf.mxu0
        %5005 = vmatprep.mubr.f32.mxu0 0.0
        %5006 = vmatmul.mubr.f32.gmra.mxu0 %v4765
        %v5007 = vpop.f32.mrf.mxu0
        %v5008 = vadd.f32 0.0, %v5007
        %v5009 = vpop.f32.mrf.mxu0
        %5010 = vmatprep.mubr.f32.mxu0 0.0
        %5011 = vmatmul.mubr.f32.gmra.mxu0 %v4768
        %v5012 = vpop.f32.mrf.mxu0
        %v5013 = vadd.f32 0.0, %v5012
        %v5014 = vpop.f32.mrf.mxu0
        %5015 = vmatprep.mubr.f32.mxu0 0.0
        %5016 = vmatmul.mubr.f32.gmra.mxu0 %v4771
        %v5017 = vpop.f32.mrf.mxu0
        %v5018 = vadd.f32 0.0, %v5017
        %v5019 = vpop.f32.mrf.mxu0
        %5020 = vdwg.mxu0
        %v5021 = vadd.f32 %v4591, %v4843
        %v5022 = vadd.f32 %v4592, %v4848
        %v5023 = vadd.f32 %v4593, %v4853
        %v5024 = vadd.f32 %v4594, %v4858
        %v5025 = vadd.f32 %v4595, %v4863
        %v5026 = vadd.f32 %v4596, %v4868
        %v5027 = vadd.f32 %v4597, %v4873
        %v5028 = vadd.f32 %v4598, %v4878
        %v5029 = vadd.f32 %v4599, %v4883
        %v5030 = vadd.f32 %v4600, %v4888
        %v5031 = vadd.f32 %v4601, %v4893
        %v5032 = vadd.f32 %v4602, %v4898
        %v5033 = vadd.f32 %v4603, %v4903
        %v5034 = vadd.f32 %v4604, %v4908
        %v5035 = vadd.f32 %v4605, %v4913
        %v5036 = vadd.f32 %v4606, %v4918
        %v5037 = vadd.f32 %v4607, %v4923
        %v5038 = vadd.f32 %v4608, %v4928
        %v5039 = vadd.f32 %v4609, %v4933
        %v5040 = vadd.f32 %v4610, %v4938
        %v5041 = vadd.f32 %v4611, %v4943
        %v5042 = vadd.f32 %v4612, %v4948
        %v5043 = vadd.f32 %v4613, %v4953
        %v5044 = vadd.f32 %v4614, %v4958
        %v5045 = vadd.f32 %v4615, %v4963
        %v5046 = vadd.f32 %v4616, %v4968
        %v5047 = vadd.f32 %v4617, %v4973
        %v5048 = vadd.f32 %v4618, %v4978
        %v5049 = vadd.f32 %v4619, %v4983
        %v5050 = vadd.f32 %v4620, %v4988
        %v5051 = vadd.f32 %v4621, %v4993
        %v5052 = vadd.f32 %v4622, %v4998
        %v5053 = vadd.f32 %v4623, %v5003
        %v5054 = vadd.f32 %v4624, %v5008
        %v5055 = vadd.f32 %v4625, %v5013
        %v5056 = vadd.f32 %v4626, %v5018
        %v5057 = vld [vmem:[%s5] sm:$0x1]
        %v5059 = vlaneseq
        %v5060 = vshrl.u32 %v5059, 7
        %v5061 = vsub.s32 0, %v5060
        %v5062 = vrot.slane %v5057, %v5061
        %v5064 = vadd.f32 %v5021, %v5062
        %v5065 = vadd.f32 %v5022, %v5062
        %v5066 = vadd.f32 %v5023, %v5062
        %v5067 = vadd.f32 %v5024, %v5062
        %v5068 = vadd.f32 %v5025, %v5062
        %v5069 = vadd.f32 %v5026, %v5062
        %v5070 = vadd.f32 %v5027, %v5062
        %v5071 = vadd.f32 %v5028, %v5062
        %v5072 = vadd.f32 %v5029, %v5062
        %v5073 = vadd.f32 %v5030, %v5062
        %v5074 = vadd.f32 %v5031, %v5062
        %v5075 = vadd.f32 %v5032, %v5062
        %v5076 = vadd.f32 %v5033, %v5062
        %v5077 = vadd.f32 %v5034, %v5062
        %v5078 = vadd.f32 %v5035, %v5062
        %v5079 = vadd.f32 %v5036, %v5062
        %v5080 = vadd.f32 %v5037, %v5062
        %v5081 = vadd.f32 %v5038, %v5062
        %v5082 = vadd.f32 %v5039, %v5062
        %v5083 = vadd.f32 %v5040, %v5062
        %v5084 = vadd.f32 %v5041, %v5062
        %v5085 = vadd.f32 %v5042, %v5062
        %v5086 = vadd.f32 %v5043, %v5062
        %v5087 = vadd.f32 %v5044, %v5062
        %v5088 = vadd.f32 %v5045, %v5062
        %v5089 = vadd.f32 %v5046, %v5062
        %v5090 = vadd.f32 %v5047, %v5062
        %v5091 = vadd.f32 %v5048, %v5062
        %v5092 = vadd.f32 %v5049, %v5062
        %v5093 = vadd.f32 %v5050, %v5062
        %v5094 = vadd.f32 %v5051, %v5062
        %v5095 = vadd.f32 %v5052, %v5062
        %v5096 = vadd.f32 %v5053, %v5062
        %v5097 = vadd.f32 %v5054, %v5062
        %v5098 = vadd.f32 %v5055, %v5062
        %v5099 = vadd.f32 %v5056, %v5062
        %v5100 = vmax.f32 %v5064, 0.0
        %v5101 = vmax.f32 %v5065, 0.0
        %v5102 = vmax.f32 %v5066, 0.0
        %v5103 = vmax.f32 %v5067, 0.0
        %v5104 = vmax.f32 %v5068, 0.0
        %v5105 = vmax.f32 %v5069, 0.0
        %v5106 = vmax.f32 %v5070, 0.0
        %v5107 = vmax.f32 %v5071, 0.0
        %v5108 = vmax.f32 %v5072, 0.0
        %v5109 = vmax.f32 %v5073, 0.0
        %v5110 = vmax.f32 %v5074, 0.0
        %v5111 = vmax.f32 %v5075, 0.0
        %v5112 = vmax.f32 %v5076, 0.0
        %v5113 = vmax.f32 %v5077, 0.0
        %v5114 = vmax.f32 %v5078, 0.0
        %v5115 = vmax.f32 %v5079, 0.0
        %v5116 = vmax.f32 %v5080, 0.0
        %v5117 = vmax.f32 %v5081, 0.0
        %v5118 = vmax.f32 %v5082, 0.0
        %v5119 = vmax.f32 %v5083, 0.0
        %v5120 = vmax.f32 %v5084, 0.0
        %v5121 = vmax.f32 %v5085, 0.0
        %v5122 = vmax.f32 %v5086, 0.0
        %v5123 = vmax.f32 %v5087, 0.0
        %v5124 = vmax.f32 %v5088, 0.0
        %v5125 = vmax.f32 %v5089, 0.0
        %v5126 = vmax.f32 %v5090, 0.0
        %v5127 = vmax.f32 %v5091, 0.0
        %v5128 = vmax.f32 %v5092, 0.0
        %v5129 = vmax.f32 %v5093, 0.0
        %v5130 = vmax.f32 %v5094, 0.0
        %v5131 = vmax.f32 %v5095, 0.0
        %v5132 = vmax.f32 %v5096, 0.0
        %v5133 = vmax.f32 %v5097, 0.0
        %v5134 = vmax.f32 %v5098, 0.0
        %v5135 = vmax.f32 %v5099, 0.0
        %v5136 = vld [vmem:[#allocation2 + $0x13] sm:$0xff]
        %v5137 = vld [vmem:[#allocation2 + $0x1b] sm:$0xff]
        %v5138 = vld [vmem:[#allocation2 + $0x23] sm:$0xff]
        %v5139 = vld [vmem:[#allocation2 + $0x2b] sm:$0xff]
        %v5140 = vld [vmem:[#allocation2 + $0x33] sm:$0xff]
        %v5141 = vld [vmem:[#allocation2 + $0x3b] sm:$0xff]
        %v5142 = vld [vmem:[#allocation2 + $0x43] sm:$0xff]
        %v5143 = vld [vmem:[#allocation2 + $0x4b] sm:$0xff]
        %v5144 = vld [vmem:[#allocation2 + $0x53] sm:$0xff]
        %v5145 = vld [vmem:[#allocation2 + $0x5b] sm:$0xff]
        %v5146 = vld [vmem:[#allocation2 + $0x63] sm:$0xff]
        %v5147 = vld [vmem:[#allocation2 + $0x6b] sm:$0xff]
        %v5148 = vld [vmem:[#allocation2 + $0x73] sm:$0xff]
        %v5149 = vld [vmem:[#allocation2 + $0x7b] sm:$0xff]
        %v5150 = vld [vmem:[#allocation2 + $0x83] sm:$0xff]
        %v5151 = vld [vmem:[#allocation2 + $0x8b] sm:$0xff]
        %v5152 = vld [vmem:[#allocation2 + $0x93] sm:$0xff]
        %v5153 = vld [vmem:[#allocation2 + $0x9b] sm:$0xff]
        %v5154 = vld [vmem:[#allocation2 + $0xa3] sm:$0xff]
        %v5155 = vld [vmem:[#allocation2 + $0xab] sm:$0xff]
        %v5156 = vld [vmem:[#allocation2 + $0xb3] sm:$0xff]
        %v5157 = vld [vmem:[#allocation2 + $0xbb] sm:$0xff]
        %v5158 = vld [vmem:[#allocation2 + $0xc3] sm:$0xff]
        %v5159 = vld [vmem:[#allocation2 + $0xcb] sm:$0xff]
        %v5160 = vld [vmem:[#allocation2 + $0xd3] sm:$0xff]
        %v5161 = vld [vmem:[#allocation2 + $0xdb] sm:$0xff]
        %v5162 = vld [vmem:[#allocation2 + $0xe3] sm:$0xff]
        %v5163 = vld [vmem:[#allocation2 + $0xeb] sm:$0xff]
        %v5164 = vld [vmem:[#allocation2 + $0xf3] sm:$0xff]
        %v5165 = vld [vmem:[#allocation2 + $0xfb] sm:$0xff]
        %v5166 = vld [vmem:[#allocation2 + $0x103] sm:$0xff]
        %v5167 = vld [vmem:[#allocation2 + $0x10b] sm:$0xff]
        %v5168 = vld [vmem:[#allocation2 + $0x113] sm:$0xff]
        %v5169 = vld [vmem:[#allocation2 + $0x11b] sm:$0xff]
        %v5170 = vld [vmem:[#allocation2 + $0x123] sm:$0xff]
        %v5171 = vld [vmem:[#allocation2 + $0x12b] sm:$0x3f]
        %v5172 = vld [vmem:[%s6] sm:$0xf]
        %v5173 = vld [vmem:[%s7] sm:$0x1]
        %v5175 = vlaneseq
        %v5176 = vshrl.u32 %v5175, 7
        %v5177 = vsub.s32 0, %v5176
        %v5178 = vrot.slane %v5173, %v5177
        %v5181 = vsel %vm1216, %v5100, 0
        %v5184 = vsel %vm1216, %v5101, 0
        %v5187 = vsel %vm1216, %v5102, 0
        %v5190 = vsel %vm1216, %v5103, 0
        %v5193 = vsel %vm1216, %v5104, 0
        %v5196 = vsel %vm1216, %v5105, 0
        %v5199 = vsel %vm1216, %v5106, 0
        %v5202 = vsel %vm1216, %v5107, 0
        %v5205 = vsel %vm1216, %v5108, 0
        %v5208 = vsel %vm1216, %v5109, 0
        %v5211 = vsel %vm1216, %v5110, 0
        %v5214 = vsel %vm1216, %v5111, 0
        %v5217 = vsel %vm1216, %v5112, 0
        %v5220 = vsel %vm1216, %v5113, 0
        %v5223 = vsel %vm1216, %v5114, 0
        %v5226 = vsel %vm1216, %v5115, 0
        %v5229 = vsel %vm1216, %v5116, 0
        %v5232 = vsel %vm1216, %v5117, 0
        %v5235 = vsel %vm1216, %v5118, 0
        %v5238 = vsel %vm1216, %v5119, 0
        %v5241 = vsel %vm1216, %v5120, 0
        %v5244 = vsel %vm1216, %v5121, 0
        %v5247 = vsel %vm1216, %v5122, 0
        %v5250 = vsel %vm1216, %v5123, 0
        %v5253 = vsel %vm1216, %v5124, 0
        %v5256 = vsel %vm1216, %v5125, 0
        %v5259 = vsel %vm1216, %v5126, 0
        %v5262 = vsel %vm1216, %v5127, 0
        %v5265 = vsel %vm1216, %v5128, 0
        %v5268 = vsel %vm1216, %v5129, 0
        %v5271 = vsel %vm1216, %v5130, 0
        %v5274 = vsel %vm1216, %v5131, 0
        %v5277 = vsel %vm1216, %v5132, 0
        %v5280 = vsel %vm1216, %v5133, 0
        %v5283 = vsel %vm1216, %v5134, 0
        %v5286 = vsel %vm1216, %v5135, 0
        %v5289 = vsel %vm1442, %v5172, 0
        %5291 = vmatprep.subr.mxu0 0.0
        %5292 = vmatpush1.msra.mxu0 0.0
        %5293 = vmatprep.subr.mxu0 0.0
        %5294 = vmatpush1.msra.mxu0 0.0
        %5295 = vmatprep.subr.mxu0 0.0
        %5296 = vmatpush1.msra.mxu0 0.0
        %5297 = vmatprep.subr.mxu0 0.0
        %5298 = vmatpush1.msra.mxu0 0.0
        %5299 = vmatprep.subr.mxu0 0.0
        %5300 = vmatpush1.msra.mxu0 0.0
        %5301 = vmatprep.subr.mxu0 0.0
        %5302 = vmatpush1.msra.mxu0 0.0
        %5303 = vmatprep.subr.mxu0 0.0
        %5304 = vmatpush1.msra.mxu0 0.0
        %5305 = vmatprep.subr.mxu0 0.0
        %5306 = vmatpush1.msra.mxu0 0.0
        %5307 = vmatprep.subr.mxu0 0.0
        %5308 = vmatpush1.msra.mxu0 0.0
        %5309 = vmatprep.subr.mxu0 0.0
        %5310 = vmatpush1.msra.mxu0 0.0
        %5311 = vmatprep.subr.mxu0 0.0
        %5312 = vmatpush1.msra.mxu0 0.0
        %5313 = vmatprep.subr.mxu0 0.0
        %5314 = vmatpush1.msra.mxu0 0.0
        %5315 = vmatprep.subr.mxu0 0.0
        %5316 = vmatpush1.msra.mxu0 0.0
        %5317 = vmatprep.subr.mxu0 0.0
        %5318 = vmatpush1.msra.mxu0 0.0
        %5319 = vmatprep.subr.mxu0 0.0
        %5320 = vmatpush1.msra.mxu0 0.0
        %5321 = vmatprep.subr.mxu0 0.0
        %5322 = vmatpush1.msra.mxu0 %v5289
        %5323 = vmatprep.subr.mxu0 0.0
        %5324 = vmatpush2.msra.mxu0 0.0
        %5325 = vmatprep.subr.mxu0 0.0
        %5326 = vmatpush2.msra.mxu0 0.0
        %5327 = vmatprep.subr.mxu0 0.0
        %5328 = vmatpush2.msra.mxu0 0.0
        %5329 = vmatprep.subr.mxu0 0.0
        %5330 = vmatpush2.msra.mxu0 0.0
        %5331 = vmatprep.subr.mxu0 0.0
        %5332 = vmatpush2.msra.mxu0 0.0
        %5333 = vmatprep.subr.mxu0 0.0
        %5334 = vmatpush2.msra.mxu0 0.0
        %5335 = vmatprep.subr.mxu0 0.0
        %5336 = vmatpush2.msra.mxu0 0.0
        %5337 = vmatprep.subr.mxu0 0.0
        %5338 = vmatpush2.msra.mxu0 0.0
        %5339 = vmatprep.subr.mxu0 0.0
        %5340 = vmatpush2.msra.mxu0 0.0
        %5341 = vmatprep.subr.mxu0 0.0
        %5342 = vmatpush2.msra.mxu0 0.0
        %5343 = vmatprep.subr.mxu0 0.0
        %5344 = vmatpush2.msra.mxu0 0.0
        %5345 = vmatprep.subr.mxu0 0.0
        %5346 = vmatpush2.msra.mxu0 0.0
        %5347 = vmatprep.subr.mxu0 0.0
        %5348 = vmatpush2.msra.mxu0 0.0
        %5349 = vmatprep.subr.mxu0 0.0
        %5350 = vmatpush2.msra.mxu0 0.0
        %5351 = vmatprep.subr.mxu0 0.0
        %5352 = vmatpush2.msra.mxu0 0.0
        %5353 = vmatprep.subr.mxu0 0.0
        %5354 = vmatpush2.msra.mxu0 0.0
        %5355 = vmatprep.mubr.f32.mxu0 0.0
        %5356 = vmatmul.mubr.f32.gmra.mxu0 %v5181
        %v5357 = vpop.f32.mrf.mxu0
        %v5358 = vadd.f32 %v5178, %v5357
        %v5359 = vpop.f32.mrf.mxu0
        %5360 = vmatprep.mubr.f32.mxu0 0.0
        %5361 = vmatmul.mubr.f32.gmra.mxu0 %v5184
        %v5362 = vpop.f32.mrf.mxu0
        %v5363 = vadd.f32 %v5178, %v5362
        %v5364 = vpop.f32.mrf.mxu0
        %5365 = vmatprep.mubr.f32.mxu0 0.0
        %5366 = vmatmul.mubr.f32.gmra.mxu0 %v5187
        %v5367 = vpop.f32.mrf.mxu0
        %v5368 = vadd.f32 %v5178, %v5367
        %v5369 = vpop.f32.mrf.mxu0
        %5370 = vmatprep.mubr.f32.mxu0 0.0
        %5371 = vmatmul.mubr.f32.gmra.mxu0 %v5190
        %v5372 = vpop.f32.mrf.mxu0
        %v5373 = vadd.f32 %v5178, %v5372
        %v5374 = vpop.f32.mrf.mxu0
        %5375 = vmatprep.mubr.f32.mxu0 0.0
        %5376 = vmatmul.mubr.f32.gmra.mxu0 %v5193
        %v5377 = vpop.f32.mrf.mxu0
        %v5378 = vadd.f32 %v5178, %v5377
        %v5379 = vpop.f32.mrf.mxu0
        %5380 = vmatprep.mubr.f32.mxu0 0.0
        %5381 = vmatmul.mubr.f32.gmra.mxu0 %v5196
        %v5382 = vpop.f32.mrf.mxu0
        %v5383 = vadd.f32 %v5178, %v5382
        %v5384 = vpop.f32.mrf.mxu0
        %5385 = vmatprep.mubr.f32.mxu0 0.0
        %5386 = vmatmul.mubr.f32.gmra.mxu0 %v5199
        %v5387 = vpop.f32.mrf.mxu0
        %v5388 = vadd.f32 %v5178, %v5387
        %v5389 = vpop.f32.mrf.mxu0
        %5390 = vmatprep.mubr.f32.mxu0 0.0
        %5391 = vmatmul.mubr.f32.gmra.mxu0 %v5202
        %v5392 = vpop.f32.mrf.mxu0
        %v5393 = vadd.f32 %v5178, %v5392
        %v5394 = vpop.f32.mrf.mxu0
        %5395 = vmatprep.mubr.f32.mxu0 0.0
        %5396 = vmatmul.mubr.f32.gmra.mxu0 %v5205
        %v5397 = vpop.f32.mrf.mxu0
        %v5398 = vadd.f32 %v5178, %v5397
        %v5399 = vpop.f32.mrf.mxu0
        %5400 = vmatprep.mubr.f32.mxu0 0.0
        %5401 = vmatmul.mubr.f32.gmra.mxu0 %v5208
        %v5402 = vpop.f32.mrf.mxu0
        %v5403 = vadd.f32 %v5178, %v5402
        %v5404 = vpop.f32.mrf.mxu0
        %5405 = vmatprep.mubr.f32.mxu0 0.0
        %5406 = vmatmul.mubr.f32.gmra.mxu0 %v5211
        %v5407 = vpop.f32.mrf.mxu0
        %v5408 = vadd.f32 %v5178, %v5407
        %v5409 = vpop.f32.mrf.mxu0
        %5410 = vmatprep.mubr.f32.mxu0 0.0
        %5411 = vmatmul.mubr.f32.gmra.mxu0 %v5214
        %v5412 = vpop.f32.mrf.mxu0
        %v5413 = vadd.f32 %v5178, %v5412
        %v5414 = vpop.f32.mrf.mxu0
        %5415 = vmatprep.mubr.f32.mxu0 0.0
        %5416 = vmatmul.mubr.f32.gmra.mxu0 %v5217
        %v5417 = vpop.f32.mrf.mxu0
        %v5418 = vadd.f32 %v5178, %v5417
        %v5419 = vpop.f32.mrf.mxu0
        %5420 = vmatprep.mubr.f32.mxu0 0.0
        %5421 = vmatmul.mubr.f32.gmra.mxu0 %v5220
        %v5422 = vpop.f32.mrf.mxu0
        %v5423 = vadd.f32 %v5178, %v5422
        %v5424 = vpop.f32.mrf.mxu0
        %5425 = vmatprep.mubr.f32.mxu0 0.0
        %5426 = vmatmul.mubr.f32.gmra.mxu0 %v5223
        %v5427 = vpop.f32.mrf.mxu0
        %v5428 = vadd.f32 %v5178, %v5427
        %v5429 = vpop.f32.mrf.mxu0
        %5430 = vmatprep.mubr.f32.mxu0 0.0
        %5431 = vmatmul.mubr.f32.gmra.mxu0 %v5226
        %v5432 = vpop.f32.mrf.mxu0
        %v5433 = vadd.f32 %v5178, %v5432
        %v5434 = vpop.f32.mrf.mxu0
        %5435 = vmatprep.mubr.f32.mxu0 0.0
        %5436 = vmatmul.mubr.f32.gmra.mxu0 %v5229
        %v5437 = vpop.f32.mrf.mxu0
        %v5438 = vadd.f32 %v5178, %v5437
        %v5439 = vpop.f32.mrf.mxu0
        %5440 = vmatprep.mubr.f32.mxu0 0.0
        %5441 = vmatmul.mubr.f32.gmra.mxu0 %v5232
        %v5442 = vpop.f32.mrf.mxu0
        %v5443 = vadd.f32 %v5178, %v5442
        %v5444 = vpop.f32.mrf.mxu0
        %5445 = vmatprep.mubr.f32.mxu0 0.0
        %5446 = vmatmul.mubr.f32.gmra.mxu0 %v5235
        %v5447 = vpop.f32.mrf.mxu0
        %v5448 = vadd.f32 %v5178, %v5447
        %v5449 = vpop.f32.mrf.mxu0
        %5450 = vmatprep.mubr.f32.mxu0 0.0
        %5451 = vmatmul.mubr.f32.gmra.mxu0 %v5238
        %v5452 = vpop.f32.mrf.mxu0
        %v5453 = vadd.f32 %v5178, %v5452
        %v5454 = vpop.f32.mrf.mxu0
        %5455 = vmatprep.mubr.f32.mxu0 0.0
        %5456 = vmatmul.mubr.f32.gmra.mxu0 %v5241
        %v5457 = vpop.f32.mrf.mxu0
        %v5458 = vadd.f32 %v5178, %v5457
        %v5459 = vpop.f32.mrf.mxu0
        %5460 = vmatprep.mubr.f32.mxu0 0.0
        %5461 = vmatmul.mubr.f32.gmra.mxu0 %v5244
        %v5462 = vpop.f32.mrf.mxu0
        %v5463 = vadd.f32 %v5178, %v5462
        %v5464 = vpop.f32.mrf.mxu0
        %5465 = vmatprep.mubr.f32.mxu0 0.0
        %5466 = vmatmul.mubr.f32.gmra.mxu0 %v5247
        %v5467 = vpop.f32.mrf.mxu0
        %v5468 = vadd.f32 %v5178, %v5467
        %v5469 = vpop.f32.mrf.mxu0
        %5470 = vmatprep.mubr.f32.mxu0 0.0
        %5471 = vmatmul.mubr.f32.gmra.mxu0 %v5250
        %v5472 = vpop.f32.mrf.mxu0
        %v5473 = vadd.f32 %v5178, %v5472
        %v5474 = vpop.f32.mrf.mxu0
        %5475 = vmatprep.mubr.f32.mxu0 0.0
        %5476 = vmatmul.mubr.f32.gmra.mxu0 %v5253
        %v5477 = vpop.f32.mrf.mxu0
        %v5478 = vadd.f32 %v5178, %v5477
        %v5479 = vpop.f32.mrf.mxu0
        %5480 = vmatprep.mubr.f32.mxu0 0.0
        %5481 = vmatmul.mubr.f32.gmra.mxu0 %v5256
        %v5482 = vpop.f32.mrf.mxu0
        %v5483 = vadd.f32 %v5178, %v5482
        %v5484 = vpop.f32.mrf.mxu0
        %5485 = vmatprep.mubr.f32.mxu0 0.0
        %5486 = vmatmul.mubr.f32.gmra.mxu0 %v5259
        %v5487 = vpop.f32.mrf.mxu0
        %v5488 = vadd.f32 %v5178, %v5487
        %v5489 = vpop.f32.mrf.mxu0
        %5490 = vmatprep.mubr.f32.mxu0 0.0
        %5491 = vmatmul.mubr.f32.gmra.mxu0 %v5262
        %v5492 = vpop.f32.mrf.mxu0
        %v5493 = vadd.f32 %v5178, %v5492
        %v5494 = vpop.f32.mrf.mxu0
        %5495 = vmatprep.mubr.f32.mxu0 0.0
        %5496 = vmatmul.mubr.f32.gmra.mxu0 %v5265
        %v5497 = vpop.f32.mrf.mxu0
        %v5498 = vadd.f32 %v5178, %v5497
        %v5499 = vpop.f32.mrf.mxu0
        %5500 = vmatprep.mubr.f32.mxu0 0.0
        %5501 = vmatmul.mubr.f32.gmra.mxu0 %v5268
        %v5502 = vpop.f32.mrf.mxu0
        %v5503 = vadd.f32 %v5178, %v5502
        %v5504 = vpop.f32.mrf.mxu0
        %5505 = vmatprep.mubr.f32.mxu0 0.0
        %5506 = vmatmul.mubr.f32.gmra.mxu0 %v5271
        %v5507 = vpop.f32.mrf.mxu0
        %v5508 = vadd.f32 %v5178, %v5507
        %v5509 = vpop.f32.mrf.mxu0
        %5510 = vmatprep.mubr.f32.mxu0 0.0
        %5511 = vmatmul.mubr.f32.gmra.mxu0 %v5274
        %v5512 = vpop.f32.mrf.mxu0
        %v5513 = vadd.f32 %v5178, %v5512
        %v5514 = vpop.f32.mrf.mxu0
        %5515 = vmatprep.mubr.f32.mxu0 0.0
        %5516 = vmatmul.mubr.f32.gmra.mxu0 %v5277
        %v5517 = vpop.f32.mrf.mxu0
        %v5518 = vadd.f32 %v5178, %v5517
        %v5519 = vpop.f32.mrf.mxu0
        %5520 = vmatprep.mubr.f32.mxu0 0.0
        %5521 = vmatmul.mubr.f32.gmra.mxu0 %v5280
        %v5522 = vpop.f32.mrf.mxu0
        %v5523 = vadd.f32 %v5178, %v5522
        %v5524 = vpop.f32.mrf.mxu0
        %5525 = vmatprep.mubr.f32.mxu0 0.0
        %5526 = vmatmul.mubr.f32.gmra.mxu0 %v5283
        %v5527 = vpop.f32.mrf.mxu0
        %v5528 = vadd.f32 %v5178, %v5527
        %v5529 = vpop.f32.mrf.mxu0
        %5530 = vmatprep.mubr.f32.mxu0 0.0
        %5531 = vmatmul.mubr.f32.gmra.mxu0 %v5286
        %v5532 = vpop.f32.mrf.mxu0
        %v5533 = vadd.f32 %v5178, %v5532
        %v5534 = vpop.f32.mrf.mxu0
        %5535 = vdwg.mxu0
        %v5536 = vadd.f32 %v5358, %v5136
        %v5537 = vadd.f32 %v5363, %v5137
        %v5538 = vadd.f32 %v5368, %v5138
        %v5539 = vadd.f32 %v5373, %v5139
        %v5540 = vadd.f32 %v5378, %v5140
        %v5541 = vadd.f32 %v5383, %v5141
        %v5542 = vadd.f32 %v5388, %v5142
        %v5543 = vadd.f32 %v5393, %v5143
        %v5544 = vadd.f32 %v5398, %v5144
        %v5545 = vadd.f32 %v5403, %v5145
        %v5546 = vadd.f32 %v5408, %v5146
        %v5547 = vadd.f32 %v5413, %v5147
        %v5548 = vadd.f32 %v5418, %v5148
        %v5549 = vadd.f32 %v5423, %v5149
        %v5550 = vadd.f32 %v5428, %v5150
        %v5551 = vadd.f32 %v5433, %v5151
        %v5552 = vadd.f32 %v5438, %v5152
        %v5553 = vadd.f32 %v5443, %v5153
        %v5554 = vadd.f32 %v5448, %v5154
        %v5555 = vadd.f32 %v5453, %v5155
        %v5556 = vadd.f32 %v5458, %v5156
        %v5557 = vadd.f32 %v5463, %v5157
        %v5558 = vadd.f32 %v5468, %v5158
        %v5559 = vadd.f32 %v5473, %v5159
        %v5560 = vadd.f32 %v5478, %v5160
        %v5561 = vadd.f32 %v5483, %v5161
        %v5562 = vadd.f32 %v5488, %v5162
        %v5563 = vadd.f32 %v5493, %v5163
        %v5564 = vadd.f32 %v5498, %v5164
        %v5565 = vadd.f32 %v5503, %v5165
        %v5566 = vadd.f32 %v5508, %v5166
        %v5567 = vadd.f32 %v5513, %v5167
        %v5568 = vadd.f32 %v5518, %v5168
        %v5569 = vadd.f32 %v5523, %v5169
        %v5570 = vadd.f32 %v5528, %v5170
        %v5571 = vadd.f32 %v5533, %v5171
        %v5572 = vmax.f32 %v5536, 0.0
        %v5573 = vmax.f32 %v5537, 0.0
        %v5574 = vmax.f32 %v5538, 0.0
        %v5575 = vmax.f32 %v5539, 0.0
        %v5576 = vmax.f32 %v5540, 0.0
        %v5577 = vmax.f32 %v5541, 0.0
        %v5578 = vmax.f32 %v5542, 0.0
        %v5579 = vmax.f32 %v5543, 0.0
        %v5580 = vmax.f32 %v5544, 0.0
        %v5581 = vmax.f32 %v5545, 0.0
        %v5582 = vmax.f32 %v5546, 0.0
        %v5583 = vmax.f32 %v5547, 0.0
        %v5584 = vmax.f32 %v5548, 0.0
        %v5585 = vmax.f32 %v5549, 0.0
        %v5586 = vmax.f32 %v5550, 0.0
        %v5587 = vmax.f32 %v5551, 0.0
        %v5588 = vmax.f32 %v5552, 0.0
        %v5589 = vmax.f32 %v5553, 0.0
        %v5590 = vmax.f32 %v5554, 0.0
        %v5591 = vmax.f32 %v5555, 0.0
        %v5592 = vmax.f32 %v5556, 0.0
        %v5593 = vmax.f32 %v5557, 0.0
        %v5594 = vmax.f32 %v5558, 0.0
        %v5595 = vmax.f32 %v5559, 0.0
        %v5596 = vmax.f32 %v5560, 0.0
        %v5597 = vmax.f32 %v5561, 0.0
        %v5598 = vmax.f32 %v5562, 0.0
        %v5599 = vmax.f32 %v5563, 0.0
        %v5600 = vmax.f32 %v5564, 0.0
        %v5601 = vmax.f32 %v5565, 0.0
        %v5602 = vmax.f32 %v5566, 0.0
        %v5603 = vmax.f32 %v5567, 0.0
        %v5604 = vmax.f32 %v5568, 0.0
        %v5605 = vmax.f32 %v5569, 0.0
        %v5606 = vmax.f32 %v5570, 0.0
        %v5607 = vmax.f32 %v5571, 0.0
        %5608 = vst.msk [vmem:[#allocation4] sm:$0xff] %vm326, %v5572
        %5609 = vst.msk [vmem:[#allocation4 + $0x8] sm:$0xff] %vm326, %v5573
        %5610 = vst.msk [vmem:[#allocation4 + $0x10] sm:$0xff] %vm326, %v5574
        %5611 = vst.msk [vmem:[#allocation4 + $0x18] sm:$0xff] %vm326, %v5575
        %5612 = vst.msk [vmem:[#allocation4 + $0x20] sm:$0xff] %vm326, %v5576
        %5613 = vst.msk [vmem:[#allocation4 + $0x28] sm:$0xff] %vm326, %v5577
        %5614 = vst.msk [vmem:[#allocation4 + $0x30] sm:$0xff] %vm326, %v5578
        %5615 = vst.msk [vmem:[#allocation4 + $0x38] sm:$0xff] %vm326, %v5579
        %5616 = vst.msk [vmem:[#allocation4 + $0x40] sm:$0xff] %vm326, %v5580
        %5617 = vst.msk [vmem:[#allocation4 + $0x48] sm:$0xff] %vm326, %v5581
        %5618 = vst.msk [vmem:[#allocation4 + $0x50] sm:$0xff] %vm326, %v5582
        %5619 = vst.msk [vmem:[#allocation4 + $0x58] sm:$0xff] %vm326, %v5583
        %5620 = vst.msk [vmem:[#allocation4 + $0x60] sm:$0xff] %vm326, %v5584
        %5621 = vst.msk [vmem:[#allocation4 + $0x68] sm:$0xff] %vm326, %v5585
        %5622 = vst.msk [vmem:[#allocation4 + $0x70] sm:$0xff] %vm326, %v5586
        %5623 = vst.msk [vmem:[#allocation4 + $0x78] sm:$0xff] %vm326, %v5587
        %5624 = vst.msk [vmem:[#allocation4 + $0x80] sm:$0xff] %vm326, %v5588
        %5625 = vst.msk [vmem:[#allocation4 + $0x88] sm:$0xff] %vm326, %v5589
        %5626 = vst.msk [vmem:[#allocation4 + $0x90] sm:$0xff] %vm326, %v5590
        %5627 = vst.msk [vmem:[#allocation4 + $0x98] sm:$0xff] %vm326, %v5591
        %5628 = vst.msk [vmem:[#allocation4 + $0xa0] sm:$0xff] %vm326, %v5592
        %5629 = vst.msk [vmem:[#allocation4 + $0xa8] sm:$0xff] %vm326, %v5593
        %5630 = vst.msk [vmem:[#allocation4 + $0xb0] sm:$0xff] %vm326, %v5594
        %5631 = vst.msk [vmem:[#allocation4 + $0xb8] sm:$0xff] %vm326, %v5595
        %5632 = vst.msk [vmem:[#allocation4 + $0xc0] sm:$0xff] %vm326, %v5596
        %5633 = vst.msk [vmem:[#allocation4 + $0xc8] sm:$0xff] %vm326, %v5597
        %5634 = vst.msk [vmem:[#allocation4 + $0xd0] sm:$0xff] %vm326, %v5598
        %5635 = vst.msk [vmem:[#allocation4 + $0xd8] sm:$0xff] %vm326, %v5599
        %5636 = vst.msk [vmem:[#allocation4 + $0xe0] sm:$0xff] %vm326, %v5600
        %5637 = vst.msk [vmem:[#allocation4 + $0xe8] sm:$0xff] %vm326, %v5601
        %5638 = vst.msk [vmem:[#allocation4 + $0xf0] sm:$0xff] %vm326, %v5602
        %5639 = vst.msk [vmem:[#allocation4 + $0xf8] sm:$0xff] %vm326, %v5603
        %5640 = vst.msk [vmem:[#allocation4 + $0x100] sm:$0xff] %vm326, %v5604
        %5641 = vst.msk [vmem:[#allocation4 + $0x108] sm:$0xff] %vm326, %v5605
        %5642 = vst.msk [vmem:[#allocation4 + $0x110] sm:$0xff] %vm326, %v5606
        %vm5643 = vcmask 128000
        %5644 = vst.msk [vmem:[#allocation4 + $0x118] sm:$0x3f] %vm5643, %v5607
        %v5645 = vld [vmem:[#allocation4] sm:$0xff]
        %v5646 = vld [vmem:[#allocation4 + $0x8] sm:$0xff]
        %5647 = vst.msk [vmem:[%s323] sm:$0xff] %vm326, %v5645
        %5648 = vst.msk [vmem:[%s323 + $0x8] sm:$0xff] %vm326, %v5646
        %v5649 = vld [vmem:[#allocation4 + $0x12] sm:$0xff]
        %v5650 = vld [vmem:[#allocation4 + $0x1a] sm:$0xff]
        %s5651 = scalar_lea.vmem %s323, 16 [#allocation8]
        %5652 = vst.msk [vmem:[%s5651] sm:$0xff] %vm326, %v5649
        %5653 = vst.msk [vmem:[%s5651 + $0x8] sm:$0xff] %vm326, %v5650
        %v5654 = vld [vmem:[#allocation4 + $0x24] sm:$0xff]
        %v5655 = vld [vmem:[#allocation4 + $0x2c] sm:$0xff]
        %s5656 = scalar_lea.vmem %s323, 32 [#allocation8]
        %5657 = vst.msk [vmem:[%s5656] sm:$0xff] %vm326, %v5654
        %5658 = vst.msk [vmem:[%s5656 + $0x8] sm:$0xff] %vm326, %v5655
        %v5659 = vld [vmem:[#allocation4 + $0x36] sm:$0xff]
        %v5660 = vld [vmem:[#allocation4 + $0x3e] sm:$0xff]
        %s5661 = scalar_lea.vmem %s323, 48 [#allocation8]
        %5662 = vst.msk [vmem:[%s5661] sm:$0xff] %vm326, %v5659
        %5663 = vst.msk [vmem:[%s5661 + $0x8] sm:$0xff] %vm326, %v5660
        %v5664 = vld [vmem:[#allocation4 + $0x48] sm:$0xff]
        %v5665 = vld [vmem:[#allocation4 + $0x50] sm:$0xff]
        %s5666 = scalar_lea.vmem %s323, 64 [#allocation8]
        %5667 = vst.msk [vmem:[%s5666] sm:$0xff] %vm326, %v5664
        %5668 = vst.msk [vmem:[%s5666 + $0x8] sm:$0xff] %vm326, %v5665
        %v5669 = vld [vmem:[#allocation4 + $0x5a] sm:$0xff]
        %v5670 = vld [vmem:[#allocation4 + $0x62] sm:$0xff]
        %s5671 = scalar_lea.vmem %s323, 80 [#allocation8]
        %5672 = vst.msk [vmem:[%s5671] sm:$0xff] %vm326, %v5669
        %5673 = vst.msk [vmem:[%s5671 + $0x8] sm:$0xff] %vm326, %v5670
        %v5674 = vld [vmem:[#allocation4 + $0x6c] sm:$0xff]
        %v5675 = vld [vmem:[#allocation4 + $0x74] sm:$0xff]
        %s5676 = scalar_lea.vmem %s323, 96 [#allocation8]
        %5677 = vst.msk [vmem:[%s5676] sm:$0xff] %vm326, %v5674
        %5678 = vst.msk [vmem:[%s5676 + $0x8] sm:$0xff] %vm326, %v5675
        %v5679 = vld [vmem:[#allocation4 + $0x7e] sm:$0xff]
        %v5680 = vld [vmem:[#allocation4 + $0x86] sm:$0xff]
        %s5681 = scalar_lea.vmem %s323, 112 [#allocation8]
        %5682 = vst.msk [vmem:[%s5681] sm:$0xff] %vm326, %v5679
        %5683 = vst.msk [vmem:[%s5681 + $0x8] sm:$0xff] %vm326, %v5680
        %v5684 = vld [vmem:[#allocation4 + $0x90] sm:$0xff]
        %v5685 = vld [vmem:[#allocation4 + $0x98] sm:$0xff]
        %s5686 = scalar_lea.vmem %s323, 128 [#allocation8]
        %5687 = vst.msk [vmem:[%s5686] sm:$0xff] %vm326, %v5684
        %5688 = vst.msk [vmem:[%s5686 + $0x8] sm:$0xff] %vm326, %v5685
        %v5689 = vld [vmem:[#allocation4 + $0xa2] sm:$0xff]
        %v5690 = vld [vmem:[#allocation4 + $0xaa] sm:$0xff]
        %s5691 = scalar_lea.vmem %s323, 144 [#allocation8]
        %5692 = vst.msk [vmem:[%s5691] sm:$0xff] %vm326, %v5689
        %5693 = vst.msk [vmem:[%s5691 + $0x8] sm:$0xff] %vm326, %v5690
        %v5694 = vld [vmem:[#allocation4 + $0xb4] sm:$0xff]
        %v5695 = vld [vmem:[#allocation4 + $0xbc] sm:$0xff]
        %s5696 = scalar_lea.vmem %s323, 160 [#allocation8]
        %5697 = vst.msk [vmem:[%s5696] sm:$0xff] %vm326, %v5694
        %5698 = vst.msk [vmem:[%s5696 + $0x8] sm:$0xff] %vm326, %v5695
        %v5699 = vld [vmem:[#allocation4 + $0xc6] sm:$0xff]
        %v5700 = vld [vmem:[#allocation4 + $0xce] sm:$0xff]
        %s5701 = scalar_lea.vmem %s323, 176 [#allocation8]
        %5702 = vst.msk [vmem:[%s5701] sm:$0xff] %vm326, %v5699
        %5703 = vst.msk [vmem:[%s5701 + $0x8] sm:$0xff] %vm326, %v5700
        %v5704 = vld [vmem:[#allocation4 + $0xd8] sm:$0xff]
        %v5705 = vld [vmem:[#allocation4 + $0xe0] sm:$0xff]
        %s5706 = scalar_lea.vmem %s323, 192 [#allocation8]
        %5707 = vst.msk [vmem:[%s5706] sm:$0xff] %vm326, %v5704
        %5708 = vst.msk [vmem:[%s5706 + $0x8] sm:$0xff] %vm326, %v5705
        %v5709 = vld [vmem:[#allocation4 + $0xea] sm:$0xff]
        %v5710 = vld [vmem:[#allocation4 + $0xf2] sm:$0xff]
        %s5711 = scalar_lea.vmem %s323, 208 [#allocation8]
        %5712 = vst.msk [vmem:[%s5711] sm:$0xff] %vm326, %v5709
        %5713 = vst.msk [vmem:[%s5711 + $0x8] sm:$0xff] %vm326, %v5710
        %v5714 = vld [vmem:[#allocation4 + $0xfc] sm:$0xff]
        %v5715 = vld [vmem:[#allocation4 + $0x104] sm:$0xff]
        %s5716 = scalar_lea.vmem %s323, 224 [#allocation8]
        %5717 = vst.msk [vmem:[%s5716] sm:$0xff] %vm326, %v5714
        %5718 = vst.msk [vmem:[%s5716 + $0x8] sm:$0xff] %vm326, %v5715
        %v5719 = vld [vmem:[#allocation4 + $0x10e] sm:$0xff]
        %v5720 = vld [vmem:[#allocation4 + $0x116] sm:$0xff]
        %s5721 = scalar_lea.vmem %s323, 240 [#allocation8]
        %5722 = vst.msk [vmem:[%s5721] sm:$0xff] %vm326, %v5719
        %5723 = vst.msk [vmem:[%s5721 + $0x8] sm:$0xff] %vm326, %v5720
        %s5724 = sand.u32 %s206, 1
        %s5725 = scalar_lea.sflag [#allocation7], %s5724
        %s5726 = sand.u32 %s206, 1
        %s5727 = smul.addr %s5726, 256
        %s5728 = scalar_lea.vmem [#allocation8], %s5727
        // Predicated region
        $region57: #{tpu_custom_call.1} parent=51 // pred_check
          %p5729 = pneg %p216
        $region58: #{tpu_custom_call.1} parent=51 // pred_check_branch
          %5731 = sbr.rel (%p5729) target = $region60
        $region59: #{tpu_custom_call.1} parent=51 // pred_region
          %s5733 = ssub.s32 4096, 4096
          %5734 = vsyncadd %s5725, %s5733
          %s5735 = smul.addr %s25, 32
          %s5736 = smul.addr %s5735, 128
          %s5737 = scalar_lea.hbm %s8, %s5736
          %s5738 = sshll.u32 %s5728, 4
          %s5739 = int_to_ptr.vmem [resolvable:$true] %s5738
          %5744 = dma.vmem_to_hbm [thread:$0]  %s5739, 4096, %s5737, %s5725, 128, 128, 8
        $region60: #{tpu_custom_call.1} parent=51 // pred_fallthru
          _
      $region52: #{tpu_custom_call.1} parent=5 // pred_fallthru
        _
      %p5745 = scmp.le.s32.totalorder 2, %s20
      // Predicated region
      $region61: #{tpu_custom_call.1} parent=5 // pred_check
        %p5746 = pneg %p5745
      $region62: #{tpu_custom_call.1} parent=5 // pred_check_branch
        %5748 = sbr.rel (%p5746) target = $region64
      $region63: #{tpu_custom_call.1} parent=5 // pred_region
        %s5749 = ssub.s32 %s20, 2
        // Predicated region
        $region65: #{tpu_custom_call.1} parent=63 // pred_check
          %p5750 = pneg %p222
        $region66: #{tpu_custom_call.1} parent=63 // pred_check_branch
          %5752 = sbr.rel (%p5750) target = $region68
        $region67: #{tpu_custom_call.1} parent=63 // pred_region
          %s5753 = sand.u32 %s207, 1
          %s5754 = scalar_lea.sflag [#allocation7], %s5753
          %s5755 = sand.u32 %s207, 1
          %s5756 = smul.addr %s5755, 256
          %s5757 = scalar_lea.vmem [#allocation8], %s5756
          %5758 = dma.done %s5754, 4096
        $region68: #{tpu_custom_call.1} parent=63 // pred_fallthru
          _
      $region64: #{tpu_custom_call.1} parent=5 // pred_fallthru
        _
    $region6: #{tpu_custom_call.1} parent=1 // loop_footer
      %s24 = sadd.s32 1, %s20
    $region7: #{tpu_custom_call.1} parent=1 // loop_footer_branch
      %19 = sbr.rel target = $region3
    $region8: #{tpu_custom_call.1} parent=1 // loop_exit
      _
    %5759 = vsyncpa [#allocation6], 1
    %s5760 = scalar_lea.sflag [#allocation6], 1
    %5761 = vsyncpa %s5760, 1
    %5762 = vsyncpa [#allocation7], 1
    %s5763 = scalar_lea.sflag [#allocation7], 1
    %5764 = vsyncpa %s5763, 1

</llo_original>
